<compile_context>
chip_gen: v7x
topology: tpu7x:2x2x1
jax: 0.10.0
libtpu: 0.0.40
codegen_flags: <defaults>
</compile_context>

<pallas_src>
import functools

import jax
import jax.numpy as jnp
from jax.experimental import pallas as pl
from jax.experimental.pallas import tpu as pltpu

EPS = 1e-8


def _round_up(x, m):
    return (x + m - 1) // m * m


def _vmem_capacity_bytes():
    try:
        return int(pltpu.get_tpu_info().vmem_capacity_bytes)
    except Exception:
        return 64 * 1024 * 1024      # v7x per-TensorCore VMEM (most conservative)


def _pick_batch_tile(batch, num_regions, image_dim, ep, e_chunk, vmem_cap,
                     max_batch_tile=None):
    """Largest batch tile (multiple of 8) whose working set fits a VMEM budget,
    capped so the grid has >= 2 steps; falls back to the full batch (a single
    full-extent block, exact and unmasked) for small B."""
    itemsize = 4
    # Batch-invariant VMEM residents (single-buffered): fc1/fc2 weights + vectors.
    const_bytes = (2 * image_dim * ep + 4 * ep) * itemsize
    budget = int(vmem_cap * 0.6) - const_bytes
    # Per batch-row bytes: v_t block (double-buffered) + `scaled` temp
    # + m_v / v_att blocks (double-buffered) + per-chunk W_v / g_rep temps
    # + small column temps.
    per_row = (num_regions * image_dim * 3
               + image_dim * 4
               + 2 * num_regions * e_chunk
               + num_regions * 160) * itemsize
    tb = max((budget // max(per_row, 1)) // 8 * 8, 8)
    # erep / erept constants cost ~ 2 * tb * R * tb * 4 bytes; shrink until they fit.
    while tb > 8 and tb * per_row + 8 * num_regions * tb * tb > budget:
        tb -= 8
    if max_batch_tile is not None:
        tb = max((min(tb, int(max_batch_tile)) // 8) * 8, 8)
    # Keep >= 2 grid steps so both v7x TensorCores get work and the big v_t DMA
    # overlaps compute.
    tb = min(tb, _round_up(pl.cdiv(batch, 2), 8))
    if tb >= batch:
        return batch        # single full-extent block; no row masking needed
    return tb


def _atten_kernel(vt_ref, mv_ref, w1_ref, b1_ref, w2_ref, b2_ref, w3_ref,
                  erep_ref, erept_ref, b3_ref, vatt_ref, wout_ref, *,
                  batch, num_regions, tb, ep, e_chunk, use_bf16_matmul):
    f32 = jnp.float32
    mm = jnp.bfloat16 if use_bf16_matmul else f32
    tbr = tb * num_regions
    i = pl.program_id(0)

    # Validity masks for the (possibly partial) last batch tile.  Every cross-row
    # mixing below goes through an erep/erept matmul, and 0 * NaN = NaN would let
    # garbage (out-of-bounds) rows poison valid outputs through the MXU sum, so
    # anything feeding those matmuls is zeroed on invalid rows first.  A region
    # group is either fully valid or fully out of bounds.
    row_ids = i * tbr + jax.lax.broadcasted_iota(jnp.int32, (tbr, 1), 0)
    row_valid = row_ids < batch * num_regions                      # (tbr, 1)
    b_ids = i * tb + jax.lax.broadcasted_iota(jnp.int32, (tb, 1), 0)
    b_valid = b_ids < batch                                        # (tb, 1)

    # embedding_2: W_v_m = tanh(m_v @ W2^T + b2); fold fc3's weight in -> g.
    wvm = jnp.tanh(
        jnp.dot(mv_ref[...].astype(mm), w2_ref[...].astype(mm),
                preferred_element_type=f32) + b2_ref[...])         # (tb, ep)
    g = jnp.where(b_valid, wvm * w3_ref[...], 0.0)                 # (tb, ep)

    # embedding_1 + h_v + embedding_3, chunked over the embed axis so the
    # (tbr, ep) W_v / h_v f32 temps are never materialized in full:
    #   a_v[row] = tanh( sum_e tanh(v_t @ W1^T + b1)[row, e] * g[row // R, e] + b3 )
    # g is broadcast over the region axis with the 0/1 expansion matmul erep @ g.
    lhs_bf16 = vt_ref[...].astype(mm) if use_bf16_matmul else None
    a_pre = jnp.zeros((tbr, 1), f32)
    for c in range(ep // e_chunk):
        sl = slice(c * e_chunk, (c + 1) * e_chunk)
        lhs = lhs_bf16 if use_bf16_matmul else vt_ref[...]
        wv_c = jnp.tanh(
            jnp.dot(lhs, w1_ref[:, sl].astype(mm),
                    preferred_element_type=f32) + b1_ref[:, sl])   # (tbr, ec)
        g_rep_c = jnp.dot(erep_ref[...], g[:, sl],
                          preferred_element_type=f32)              # (tbr, ec)
        a_pre = a_pre + jnp.sum(wv_c * g_rep_c, axis=1, keepdims=True)
    a_v = jnp.tanh(a_pre + b3_ref[0])                              # (tbr, 1)

    # softmax over the region axis.  a_v is tanh-bounded in [-1, 1], so exp() is
    # safe without a max subtraction; the per-batch-row sum / broadcast run as
    # lane-dense erept / erep matmuls (no sublane reshape of the flat layout).
    e = jnp.where(row_valid, jnp.exp(a_v), 0.0)                    # (tbr, 1)
    e_b = jnp.broadcast_to(e, (tbr, 128))
    denom = jnp.dot(erept_ref[...], e_b, preferred_element_type=f32)       # (tb, 128)
    denom_rep = jnp.dot(erep_ref[...], denom, preferred_element_type=f32)  # (tbr, 128)
    w = e * pl.reciprocal(denom_rep[:, :1], approx=False)          # (tbr, 1)
    wout_ref[...] = w.astype(wout_ref.dtype)

    # attention-weighted region sum (per batch row), then l2norm: X / (||X|| + eps).
    scaled = jnp.where(row_valid, w * vt_ref[...], 0.0)            # (tbr, D)
    v_att = jnp.dot(erept_ref[...], scaled, preferred_element_type=f32)    # (tb, D)
    inv = pl.reciprocal(
        jnp.sqrt(jnp.sum(v_att * v_att, axis=1, keepdims=True)) + EPS,
        approx=False)
    vatt_ref[...] = (v_att * inv).astype(vatt_ref.dtype)


def prepare_params(params):
    """One-time weight prep (hoisted out of the forward, per the review):
    transpose PyTorch (out, in) Linear weights to (in, out) and zero-pad the
    embed axis to a lane-dense multiple of 128.  Padded columns give tanh(0)=0
    activations multiplied by the zero-padded fc3 weight, so results are exact."""
    f32 = jnp.float32
    embed_dim, image_dim = params["fc1_w"].shape
    ep = _round_up(embed_dim, 128)
    pad_e = ((0, 0), (0, ep - embed_dim))
    return {
        "image_dim": image_dim,
        "embed_dim": embed_dim,
        "embed_dim_padded": ep,
        "w1t": jnp.pad(params["fc1_w"].astype(f32).T, pad_e),
        "b1": jnp.pad(params["fc1_b"].astype(f32).reshape(1, embed_dim), pad_e),
        "w2t": jnp.pad(params["fc2_w"].astype(f32).T, pad_e),
        "b2": jnp.pad(params["fc2_b"].astype(f32).reshape(1, embed_dim), pad_e),
        "w3": jnp.pad(params["fc3_w"].astype(f32).reshape(1, embed_dim), pad_e),
        "b3": params["fc3_b"].astype(f32).reshape(1),     # scalar -> SMEM
    }


def v_single_modal_atten(v_t, m_v, prep, *, max_batch_tile=None, e_chunk=512,
                         use_bf16_matmul=False):
    """v_t: (B, R, image_dim); m_v: (B, image_dim); prep: prepare_params(...).

    Returns (v_att: (B, image_dim), weights: (B, R)).
    """
    f32 = jnp.float32
    B, R, D = v_t.shape
    assert m_v.shape == (B, D), "only the matching-dim (fc2) branch is implemented"
    assert D == prep["image_dim"]
    ep = prep["embed_dim_padded"]

    v_t = v_t.astype(f32)
    m_v = m_v.astype(f32)

    # Embed-axis chunk: largest multiple of 128 <= e_chunk that divides ep.
    ec = max(128, min(e_chunk, ep) // 128 * 128)
    while ep % ec:
        ec -= 128

    vmem_cap = _vmem_capacity_bytes()
    tb = _pick_batch_tile(B, R, D, ep, ec, vmem_cap, max_batch_tile)
    tbr = tb * R
    grid = (pl.cdiv(B, tb),)

    # Free (metadata-only) flatten of v_t; no pad, no extra HBM pass over it.
    vt2d = v_t.reshape(B * R, D)

    # 0/1 region-expansion matrices: erep[row, b] = 1 iff row // R == b.  They turn
    # the per-batch broadcast of g over regions and the per-batch reductions
    # (softmax denominator, weighted region sum) into plain 2D MXU matmuls, so the
    # kernel never reshapes / transposes the big v_t tile.
    rows = jnp.arange(tbr, dtype=jnp.int32)
    cols = jnp.arange(tb, dtype=jnp.int32)
    erep = (rows[:, None] // R == cols[None, :]).astype(f32)        # (tbr, tb)
    erept = (cols[:, None] == rows[None, :] // R).astype(f32)       # (tb, tbr)

    kernel = functools.partial(
        _atten_kernel, batch=B, num_regions=R, tb=tb, ep=ep, e_chunk=ec,
        use_bf16_matmul=use_bf16_matmul)

    def run(single_buffer_consts):
        # Batch-invariant operands are DMA'd once (constant index_map); single-
        # buffering them frees the second, pure-waste pipeline buffer's VMEM.
        cmode = ({"pipeline_mode": pl.Buffered(1)} if single_buffer_consts else {})
        c2 = lambda i: (0, 0)
        in_specs = [
            pl.BlockSpec((tbr, D), lambda i: (i, 0)),               # v_t (flat) tile
            pl.BlockSpec((tb, D), lambda i: (i, 0)),                # m_v tile
            pl.BlockSpec((D, ep), c2, **cmode),                     # fc1 W^T
            pl.BlockSpec((1, ep), c2, **cmode),                     # fc1 b
            pl.BlockSpec((D, ep), c2, **cmode),                     # fc2 W^T
            pl.BlockSpec((1, ep), c2, **cmode),                     # fc2 b
            pl.BlockSpec((1, ep), c2, **cmode),                     # fc3 w
            pl.BlockSpec((tbr, tb), c2, **cmode),                   # erep
            pl.BlockSpec((tb, tbr), c2, **cmode),                   # erep^T
            pl.BlockSpec(memory_space=pltpu.MemorySpace.SMEM),      # fc3 b (scalar)
        ]
        out_specs = [
            pl.BlockSpec((tb, D), lambda i: (i, 0)),                # v_att
            pl.BlockSpec((tbr, 1), lambda i: (i, 0)),               # weights (flat)
        ]
        return pl.pallas_call(
            kernel,
            out_shape=(
                jax.ShapeDtypeStruct((B, D), f32),
                jax.ShapeDtypeStruct((B * R, 1), f32),
            ),
            grid_spec=pltpu.PrefetchScalarGridSpec(
                num_scalar_prefetch=0,
                grid=grid,
                in_specs=in_specs,
                out_specs=out_specs,
            ),
            compiler_params=pltpu.CompilerParams(
                dimension_semantics=("parallel",),
                vmem_limit_bytes=int(vmem_cap * 0.85),
            ),
        )(vt2d, m_v, prep["w1t"], prep["b1"], prep["w2t"], prep["b2"],
          prep["w3"], erep, erept, prep["b3"])

    try:
        v_att, w_flat = run(True)
    except Exception:
        # pl.Buffered(1) (single-buffered constant operands) unavailable on this
        # jax version: fall back to the default double-buffered pipeline.
        v_att, w_flat = run(False)

    return v_att, w_flat.reshape(B, R)


def _reference(v_t, m_v, params):
    """Pure-JAX reference mirroring the PyTorch forward (eval mode)."""
    W_v = jnp.tanh(v_t @ params["fc1_w"].T + params["fc1_b"])
    W_v_m = jnp.tanh(m_v @ params["fc2_w"].T + params["fc2_b"])
    h_v = W_v * W_v_m[:, None, :]
    a_v = jnp.tanh(jnp.einsum("bre,e->br", h_v, params["fc3_w"].reshape(-1))
                   + params["fc3_b"])
    weights = jax.nn.softmax(a_v, axis=1)
    v_att = jnp.sum(weights[:, :, None] * v_t, axis=1)
    v_att = v_att / (jnp.linalg.norm(v_att, axis=-1, keepdims=True) + EPS)
    return v_att, weights


if __name__ == "__main__":
    # Small shapes consistent with the module: batch=20, regions=12,
    # image_dim=32, embed_dim=48 (exercises the partial-last-tile and the
    # embed-padding paths; VMEM-budgeted tiling yields tb=16 -> a 2-step grid).
    B, R, image_dim, embed_dim = 20, 12, 32, 48

    key = jax.random.PRNGKey(0)
    ks = jax.random.split(key, 8)
    v_t = jax.random.normal(ks[0], (B, R, image_dim), jnp.float32)
    m_v = jax.random.normal(ks[1], (B, image_dim), jnp.float32)

    scale = 0.1
    params = {
        "fc1_w": scale * jax.random.normal(ks[2], (embed_dim, image_dim), jnp.float32),
        "fc1_b": scale * jax.random.normal(ks[3], (embed_dim,), jnp.float32),
        "fc2_w": scale * jax.random.normal(ks[4], (embed_dim, image_dim), jnp.float32),
        "fc2_b": scale * jax.random.normal(ks[5], (embed_dim,), jnp.float32),
        "fc3_w": scale * jax.random.normal(ks[6], (1, embed_dim), jnp.float32),
        "fc3_b": scale * jax.random.normal(ks[7], (1,), jnp.float32),
    }

    prep = prepare_params(params)   # one-time weight transpose/pad (hoisted to init)
    v_att, weights = v_single_modal_atten(v_t, m_v, prep)
    jax.block_until_ready((v_att, weights))

    ref_v, ref_w = _reference(v_t, m_v, params)
    assert jnp.allclose(v_att, ref_v, atol=1e-5, rtol=1e-5), \
        float(jnp.max(jnp.abs(v_att - ref_v)))
    assert jnp.allclose(weights, ref_w, atol=1e-5, rtol=1e-5), \
        float(jnp.max(jnp.abs(weights - ref_w)))

    print("KERNEL_OK")
</pallas_src>

<mosaic_0001>
module attributes {stable_mosaic.version = 11 : i64} {
  func.func @_atten_kernel(%arg0: i32, %arg1: memref<192x32xf32, #tpu.memory_space<vmem>>, %arg2: memref<16x32xf32, #tpu.memory_space<vmem>>, %arg3: memref<32x128xf32, #tpu.memory_space<vmem>>, %arg4: memref<1x128xf32, #tpu.memory_space<vmem>>, %arg5: memref<32x128xf32, #tpu.memory_space<vmem>>, %arg6: memref<1x128xf32, #tpu.memory_space<vmem>>, %arg7: memref<1x128xf32, #tpu.memory_space<vmem>>, %arg8: memref<192x16xf32, #tpu.memory_space<vmem>>, %arg9: memref<16x192xf32, #tpu.memory_space<vmem>>, %arg10: memref<1xf32, #tpu.memory_space<smem>>, %arg11: memref<16x32xf32, #tpu.memory_space<vmem>>, %arg12: memref<192x1xf32, #tpu.memory_space<vmem>>) attributes {dimension_semantics = [#tpu.dimension_semantics<parallel>], iteration_bounds = array<i64: 2>, scalar_prefetch = 0 : i64, scratch_operands = 0 : i64, tpu.core_type = #tpu.core_type<tc>, window_params = [{transform_indices = @transform_0, window_bounds = array<i64: 192, 32>}, {transform_indices = @transform_1, window_bounds = array<i64: 16, 32>}, {pipeline_mode = #tpu.pipeline_mode<synchronous>, transform_indices = @transform_2, window_bounds = array<i64: 32, 128>}, {pipeline_mode = #tpu.pipeline_mode<synchronous>, transform_indices = @transform_3, window_bounds = array<i64: 1, 128>}, {pipeline_mode = #tpu.pipeline_mode<synchronous>, transform_indices = @transform_4, window_bounds = array<i64: 32, 128>}, {pipeline_mode = #tpu.pipeline_mode<synchronous>, transform_indices = @transform_5, window_bounds = array<i64: 1, 128>}, {pipeline_mode = #tpu.pipeline_mode<synchronous>, transform_indices = @transform_6, window_bounds = array<i64: 1, 128>}, {pipeline_mode = #tpu.pipeline_mode<synchronous>, transform_indices = @transform_7, window_bounds = array<i64: 192, 16>}, {pipeline_mode = #tpu.pipeline_mode<synchronous>, transform_indices = @transform_8, window_bounds = array<i64: 16, 192>}, {transform_indices = @transform_9, window_bounds = array<i64: 1>}, {transform_indices = @transform_10, window_bounds = array<i64: 16, 32>}, {transform_indices = @transform_11, window_bounds = array<i64: 192, 1>}]} {
    %c192_i32 = arith.constant 192 : i32
    %0 = arith.muli %arg0, %c192_i32 : i32
    %1 = tpu.iota {dimensions = array<i32: 0>} : vector<192x1xi32>
    %2 = vector.broadcast %0 : i32 to vector<192x1xi32>
    %3 = arith.addi %2, %1 : vector<192x1xi32>
    %c240_i32 = arith.constant 240 : i32
    %4 = vector.broadcast %c240_i32 : i32 to vector<192x1xi32>
    %5 = arith.cmpi slt, %3, %4 : vector<192x1xi32>
    %c16_i32 = arith.constant 16 : i32
    %6 = arith.muli %arg0, %c16_i32 : i32
    %7 = tpu.iota {dimensions = array<i32: 0>} : vector<16x1xi32>
    %8 = vector.broadcast %6 : i32 to vector<16x1xi32>
    %9 = arith.addi %8, %7 : vector<16x1xi32>
    %c20_i32 = arith.constant 20 : i32
    %10 = vector.broadcast %c20_i32 : i32 to vector<16x1xi32>
    %11 = arith.cmpi slt, %9, %10 : vector<16x1xi32>
    %c0 = arith.constant 0 : index
    %c0_0 = arith.constant 0 : index
    %12 = vector.load %arg2[%c0, %c0_0] : memref<16x32xf32, #tpu.memory_space<vmem>>, vector<16x32xf32>
    %c0_1 = arith.constant 0 : index
    %c0_2 = arith.constant 0 : index
    %13 = vector.load %arg5[%c0_1, %c0_2] : memref<32x128xf32, #tpu.memory_space<vmem>>, vector<32x128xf32>
    %cst = arith.constant dense<0.000000e+00> : vector<16x128xf32>
    %14 = tpu.matmul %12, %13, %cst {dimension_numbers = #tpu.dot_dimension_numbers<[1], [0], [0], [1], [0, 0, 1, 1], [], []>} : vector<16x32xf32>, vector<32x128xf32>, vector<16x128xf32> -> vector<16x128xf32>
    %c0_3 = arith.constant 0 : index
    %c0_4 = arith.constant 0 : index
    %15 = vector.load %arg6[%c0_3, %c0_4] : memref<1x128xf32, #tpu.memory_space<vmem>>, vector<1x128xf32>
    %16 = vector.broadcast %15 : vector<1x128xf32> to vector<16x128xf32>
    %17 = arith.addf %14, %16 : vector<16x128xf32>
    %18 = math.tanh %17 : vector<16x128xf32>
    %c0_5 = arith.constant 0 : index
    %c0_6 = arith.constant 0 : index
    %19 = vector.load %arg7[%c0_5, %c0_6] : memref<1x128xf32, #tpu.memory_space<vmem>>, vector<1x128xf32>
    %20 = vector.broadcast %19 : vector<1x128xf32> to vector<16x128xf32>
    %21 = arith.mulf %18, %20 : vector<16x128xf32>
    %cst_7 = arith.constant 0.000000e+00 : f32
    %22 = vector.shape_cast %11 : vector<16x1xi1> to vector<16x1xi1>
    %23 = vector.broadcast %22 : vector<16x1xi1> to vector<16x128xi1>
    %24 = vector.broadcast %cst_7 : f32 to vector<16x128xf32>
    %25 = arith.select %23, %21, %24 : vector<16x128xi1>, vector<16x128xf32>
    %cst_8 = arith.constant 0.000000e+00 : f32
    %26 = vector.broadcast %cst_8 : f32 to vector<192x1xf32>
    %c0_9 = arith.constant 0 : index
    %c0_10 = arith.constant 0 : index
    %27 = vector.load %arg1[%c0_9, %c0_10] : memref<192x32xf32, #tpu.memory_space<vmem>>, vector<192x32xf32>
    %c0_11 = arith.constant 0 : index
    %c0_12 = arith.constant 0 : index
    %28 = vector.load %arg3[%c0_11, %c0_12] : memref<32x128xf32, #tpu.memory_space<vmem>>, vector<32x128xf32>
    %cst_13 = arith.constant dense<0.000000e+00> : vector<192x128xf32>
    %29 = tpu.matmul %27, %28, %cst_13 {dimension_numbers = #tpu.dot_dimension_numbers<[1], [0], [0], [1], [0, 0, 1, 1], [], []>} : vector<192x32xf32>, vector<32x128xf32>, vector<192x128xf32> -> vector<192x128xf32>
    %c0_14 = arith.constant 0 : index
    %c0_15 = arith.constant 0 : index
    %30 = vector.load %arg4[%c0_14, %c0_15] : memref<1x128xf32, #tpu.memory_space<vmem>>, vector<1x128xf32>
    %31 = vector.broadcast %30 : vector<1x128xf32> to vector<192x128xf32>
    %32 = arith.addf %29, %31 : vector<192x128xf32>
    %33 = math.tanh %32 : vector<192x128xf32>
    %c0_16 = arith.constant 0 : index
    %c0_17 = arith.constant 0 : index
    %34 = vector.load %arg8[%c0_16, %c0_17] : memref<192x16xf32, #tpu.memory_space<vmem>>, vector<192x16xf32>
    %cst_18 = arith.constant dense<0.000000e+00> : vector<192x128xf32>
    %35 = tpu.matmul %34, %25, %cst_18 {dimension_numbers = #tpu.dot_dimension_numbers<[1], [0], [0], [1], [0, 0, 1, 1], [], []>} : vector<192x16xf32>, vector<16x128xf32>, vector<192x128xf32> -> vector<192x128xf32>
    %36 = arith.mulf %33, %35 : vector<192x128xf32>
    %cst_19 = arith.constant dense<0.000000e+00> : vector<192xf32>
    %37 = vector.multi_reduction <add>, %36, %cst_19 [1] : vector<192x128xf32> to vector<192xf32>
    %38 = vector.shape_cast %37 : vector<192xf32> to vector<192x1xf32>
    %39 = arith.addf %26, %38 : vector<192x1xf32>
    %c0_20 = arith.constant 0 : index
    %40 = memref.load %arg10[%c0_20] : memref<1xf32, #tpu.memory_space<smem>>
    %41 = vector.broadcast %40 : f32 to vector<192x1xf32>
    %42 = arith.addf %39, %41 : vector<192x1xf32>
    %43 = math.tanh %42 : vector<192x1xf32>
    %44 = math.exp %43 : vector<192x1xf32>
    %cst_21 = arith.constant 0.000000e+00 : f32
    %45 = vector.broadcast %cst_21 : f32 to vector<192x1xf32>
    %46 = arith.select %5, %44, %45 : vector<192x1xi1>, vector<192x1xf32>
    %47 = vector.shape_cast %46 : vector<192x1xf32> to vector<192x1xf32>
    %48 = vector.broadcast %47 : vector<192x1xf32> to vector<192x128xf32>
    %c0_22 = arith.constant 0 : index
    %c0_23 = arith.constant 0 : index
    %49 = vector.load %arg9[%c0_22, %c0_23] : memref<16x192xf32, #tpu.memory_space<vmem>>, vector<16x192xf32>
    %cst_24 = arith.constant dense<0.000000e+00> : vector<16x128xf32>
    %50 = tpu.matmul %49, %48, %cst_24 {dimension_numbers = #tpu.dot_dimension_numbers<[1], [0], [0], [1], [0, 0, 1, 1], [], []>} : vector<16x192xf32>, vector<192x128xf32>, vector<16x128xf32> -> vector<16x128xf32>
    %c0_25 = arith.constant 0 : index
    %c0_26 = arith.constant 0 : index
    %51 = vector.load %arg8[%c0_25, %c0_26] : memref<192x16xf32, #tpu.memory_space<vmem>>, vector<192x16xf32>
    %cst_27 = arith.constant dense<0.000000e+00> : vector<192x128xf32>
    %52 = tpu.matmul %51, %50, %cst_27 {dimension_numbers = #tpu.dot_dimension_numbers<[1], [0], [0], [1], [0, 0, 1, 1], [], []>} : vector<192x16xf32>, vector<16x128xf32>, vector<192x128xf32> -> vector<192x128xf32>
    %53 = vector.extract_strided_slice %52 {offsets = [0, 0], sizes = [192, 1], strides = [1, 1]} : vector<192x128xf32> to vector<192x1xf32>
    %54 = tpu.reciprocal %53 : vector<192x1xf32> -> vector<192x1xf32>
    %55 = arith.mulf %46, %54 : vector<192x1xf32>
    %c0_28 = arith.constant 0 : index
    %c0_29 = arith.constant 0 : index
    %56 = vector.load %arg12[%c0_28, %c0_29] : memref<192x1xf32, #tpu.memory_space<vmem>>, vector<192x1xf32>
    tpu.vector_store %arg12[%c0_28, %c0_29], %55 {strides = array<i32>} : memref<192x1xf32, #tpu.memory_space<vmem>>, vector<192x1xf32>,
    %c0_30 = arith.constant 0 : index
    %c0_31 = arith.constant 0 : index
    %57 = vector.load %arg1[%c0_30, %c0_31] : memref<192x32xf32, #tpu.memory_space<vmem>>, vector<192x32xf32>
    %58 = vector.broadcast %55 : vector<192x1xf32> to vector<192x32xf32>
    %59 = arith.mulf %58, %57 : vector<192x32xf32>
    %cst_32 = arith.constant 0.000000e+00 : f32
    %60 = vector.shape_cast %5 : vector<192x1xi1> to vector<192x1xi1>
    %61 = vector.broadcast %60 : vector<192x1xi1> to vector<192x32xi1>
    %62 = vector.broadcast %cst_32 : f32 to vector<192x32xf32>
    %63 = arith.select %61, %59, %62 : vector<192x32xi1>, vector<192x32xf32>
    %c0_33 = arith.constant 0 : index
    %c0_34 = arith.constant 0 : index
    %64 = vector.load %arg9[%c0_33, %c0_34] : memref<16x192xf32, #tpu.memory_space<vmem>>, vector<16x192xf32>
    %cst_35 = arith.constant dense<0.000000e+00> : vector<16x32xf32>
    %65 = tpu.matmul %64, %63, %cst_35 {dimension_numbers = #tpu.dot_dimension_numbers<[1], [0], [0], [1], [0, 0, 1, 1], [], []>} : vector<16x192xf32>, vector<192x32xf32>, vector<16x32xf32> -> vector<16x32xf32>
    %66 = arith.mulf %65, %65 : vector<16x32xf32>
    %cst_36 = arith.constant dense<0.000000e+00> : vector<16xf32>
    %67 = vector.multi_reduction <add>, %66, %cst_36 [1] : vector<16x32xf32> to vector<16xf32>
    %68 = vector.shape_cast %67 : vector<16xf32> to vector<16x1xf32>
    %69 = math.sqrt %68 : vector<16x1xf32>
    %cst_37 = arith.constant 9.99999993E-9 : f32
    %70 = vector.broadcast %cst_37 : f32 to vector<16x1xf32>
    %71 = arith.addf %69, %70 : vector<16x1xf32>
    %72 = tpu.reciprocal %71 : vector<16x1xf32> -> vector<16x1xf32>
    %73 = vector.broadcast %72 : vector<16x1xf32> to vector<16x32xf32>
    %74 = arith.mulf %65, %73 : vector<16x32xf32>
    %c0_38 = arith.constant 0 : index
    %c0_39 = arith.constant 0 : index
    %75 = vector.load %arg11[%c0_38, %c0_39] : memref<16x32xf32, #tpu.memory_space<vmem>>, vector<16x32xf32>
    tpu.vector_store %arg11[%c0_38, %c0_39], %74 {strides = array<i32>} : memref<16x32xf32, #tpu.memory_space<vmem>>, vector<16x32xf32>,
    return
  }
  func.func @transform_0(%arg0: i32) -> (i32, i32) {
    %c0_i32 = arith.constant 0 : i32
    %c0_i32_0 = arith.constant 0 : i32
    return %arg0, %c0_i32 : i32, i32
  }
  func.func @transform_1(%arg0: i32) -> (i32, i32) {
    %c0_i32 = arith.constant 0 : i32
    %c0_i32_0 = arith.constant 0 : i32
    return %arg0, %c0_i32 : i32, i32
  }
  func.func @transform_2(%arg0: i32) -> (i32, i32) {
    %c0_i32 = arith.constant 0 : i32
    %c0_i32_0 = arith.constant 0 : i32
    %c0_i32_1 = arith.constant 0 : i32
    return %c0_i32, %c0_i32_0 : i32, i32
  }
  func.func @transform_3(%arg0: i32) -> (i32, i32) {
    %c0_i32 = arith.constant 0 : i32
    %c0_i32_0 = arith.constant 0 : i32
    %c0_i32_1 = arith.constant 0 : i32
    return %c0_i32, %c0_i32_0 : i32, i32
  }
  func.func @transform_4(%arg0: i32) -> (i32, i32) {
    %c0_i32 = arith.constant 0 : i32
    %c0_i32_0 = arith.constant 0 : i32
    %c0_i32_1 = arith.constant 0 : i32
    return %c0_i32, %c0_i32_0 : i32, i32
  }
  func.func @transform_5(%arg0: i32) -> (i32, i32) {
    %c0_i32 = arith.constant 0 : i32
    %c0_i32_0 = arith.constant 0 : i32
    %c0_i32_1 = arith.constant 0 : i32
    return %c0_i32, %c0_i32_0 : i32, i32
  }
  func.func @transform_6(%arg0: i32) -> (i32, i32) {
    %c0_i32 = arith.constant 0 : i32
    %c0_i32_0 = arith.constant 0 : i32
    %c0_i32_1 = arith.constant 0 : i32
    return %c0_i32, %c0_i32_0 : i32, i32
  }
  func.func @transform_7(%arg0: i32) -> (i32, i32) {
    %c0_i32 = arith.constant 0 : i32
    %c0_i32_0 = arith.constant 0 : i32
    %c0_i32_1 = arith.constant 0 : i32
    return %c0_i32, %c0_i32_0 : i32, i32
  }
  func.func @transform_8(%arg0: i32) -> (i32, i32) {
    %c0_i32 = arith.constant 0 : i32
    %c0_i32_0 = arith.constant 0 : i32
    %c0_i32_1 = arith.constant 0 : i32
    return %c0_i32, %c0_i32_0 : i32, i32
  }
  func.func @transform_9(%arg0: i32) -> i32 {
    %c0_i32 = arith.constant 0 : i32
    %c0_i32_0 = arith.constant 0 : i32
    return %c0_i32 : i32
  }
  func.func @transform_10(%arg0: i32) -> (i32, i32) {
    %c0_i32 = arith.constant 0 : i32
    %c0_i32_0 = arith.constant 0 : i32
    return %arg0, %c0_i32 : i32, i32
  }
  func.func @transform_11(%arg0: i32) -> (i32, i32) {
    %c0_i32 = arith.constant 0 : i32
    %c0_i32_0 = arith.constant 0 : i32
    return %arg0, %c0_i32 : i32, i32
  }
}

module attributes {stable_mosaic.version = 11 : i64} {
  func.func @_atten_kernel(%arg0: i32, %arg1: memref<192x32xf32, #tpu.memory_space<vmem>>, %arg2: memref<16x32xf32, #tpu.memory_space<vmem>>, %arg3: memref<32x128xf32, #tpu.memory_space<vmem>>, %arg4: memref<1x128xf32, #tpu.memory_space<vmem>>, %arg5: memref<32x128xf32, #tpu.memory_space<vmem>>, %arg6: memref<1x128xf32, #tpu.memory_space<vmem>>, %arg7: memref<1x128xf32, #tpu.memory_space<vmem>>, %arg8: memref<192x16xf32, #tpu.memory_space<vmem>>, %arg9: memref<16x192xf32, #tpu.memory_space<vmem>>, %arg10: memref<1xf32, #tpu.memory_space<smem>>, %arg11: memref<16x32xf32, #tpu.memory_space<vmem>>, %arg12: memref<192x1xf32, #tpu.memory_space<vmem>>) attributes {dimension_semantics = [#tpu.dimension_semantics<parallel>], iteration_bounds = array<i64: 2>, scalar_prefetch = 0 : i64, scratch_operands = 0 : i64, tpu.core_type = #tpu.core_type<tc>, window_params = [{transform_indices = @transform_0, window_bounds = array<i64: 192, 32>}, {transform_indices = @transform_1, window_bounds = array<i64: 16, 32>}, {pipeline_mode = #tpu.pipeline_mode<synchronous>, transform_indices = @transform_2, window_bounds = array<i64: 32, 128>}, {pipeline_mode = #tpu.pipeline_mode<synchronous>, transform_indices = @transform_3, window_bounds = array<i64: 1, 128>}, {pipeline_mode = #tpu.pipeline_mode<synchronous>, transform_indices = @transform_4, window_bounds = array<i64: 32, 128>}, {pipeline_mode = #tpu.pipeline_mode<synchronous>, transform_indices = @transform_5, window_bounds = array<i64: 1, 128>}, {pipeline_mode = #tpu.pipeline_mode<synchronous>, transform_indices = @transform_6, window_bounds = array<i64: 1, 128>}, {pipeline_mode = #tpu.pipeline_mode<synchronous>, transform_indices = @transform_7, window_bounds = array<i64: 192, 16>}, {pipeline_mode = #tpu.pipeline_mode<synchronous>, transform_indices = @transform_8, window_bounds = array<i64: 16, 192>}, {transform_indices = @transform_9, window_bounds = array<i64: 1>}, {transform_indices = @transform_10, window_bounds = array<i64: 16, 32>}, {transform_indices = @transform_11, window_bounds = array<i64: 192, 1>}]} {
    %c192_i32 = arith.constant 192 : i32
    %0 = arith.muli %arg0, %c192_i32 : i32
    %1 = tpu.iota {dimensions = array<i32: 0>} : vector<192x1xi32>
    %2 = vector.broadcast %0 : i32 to vector<192x1xi32>
    %3 = arith.addi %2, %1 : vector<192x1xi32>
    %c240_i32 = arith.constant 240 : i32
    %4 = vector.broadcast %c240_i32 : i32 to vector<192x1xi32>
    %5 = arith.cmpi slt, %3, %4 : vector<192x1xi32>
    %c16_i32 = arith.constant 16 : i32
    %6 = arith.muli %arg0, %c16_i32 : i32
    %7 = tpu.iota {dimensions = array<i32: 0>} : vector<16x1xi32>
    %8 = vector.broadcast %6 : i32 to vector<16x1xi32>
    %9 = arith.addi %8, %7 : vector<16x1xi32>
    %c20_i32 = arith.constant 20 : i32
    %10 = vector.broadcast %c20_i32 : i32 to vector<16x1xi32>
    %11 = arith.cmpi slt, %9, %10 : vector<16x1xi32>
    %c0 = arith.constant 0 : index
    %c0_0 = arith.constant 0 : index
    %12 = vector.load %arg2[%c0, %c0_0] : memref<16x32xf32, #tpu.memory_space<vmem>>, vector<16x32xf32>
    %c0_1 = arith.constant 0 : index
    %c0_2 = arith.constant 0 : index
    %13 = vector.load %arg5[%c0_1, %c0_2] : memref<32x128xf32, #tpu.memory_space<vmem>>, vector<32x128xf32>
    %cst = arith.constant dense<0.000000e+00> : vector<16x128xf32>
    %14 = tpu.matmul %12, %13, %cst {dimension_numbers = #tpu.dot_dimension_numbers<[1], [0], [0], [1], [0, 0, 1, 1], [], []>} : vector<16x32xf32>, vector<32x128xf32>, vector<16x128xf32> -> vector<16x128xf32>
    %c0_3 = arith.constant 0 : index
    %c0_4 = arith.constant 0 : index
    %15 = vector.load %arg6[%c0_3, %c0_4] : memref<1x128xf32, #tpu.memory_space<vmem>>, vector<1x128xf32>
    %16 = vector.broadcast %15 : vector<1x128xf32> to vector<16x128xf32>
    %17 = arith.addf %14, %16 : vector<16x128xf32>
    %18 = math.tanh %17 : vector<16x128xf32>
    %c0_5 = arith.constant 0 : index
    %c0_6 = arith.constant 0 : index
    %19 = vector.load %arg7[%c0_5, %c0_6] : memref<1x128xf32, #tpu.memory_space<vmem>>, vector<1x128xf32>
    %20 = vector.broadcast %19 : vector<1x128xf32> to vector<16x128xf32>
    %21 = arith.mulf %18, %20 : vector<16x128xf32>
    %cst_7 = arith.constant 0.000000e+00 : f32
    %22 = vector.shape_cast %11 : vector<16x1xi1> to vector<16x1xi1>
    %23 = vector.broadcast %22 : vector<16x1xi1> to vector<16x128xi1>
    %24 = vector.broadcast %cst_7 : f32 to vector<16x128xf32>
    %25 = arith.select %23, %21, %24 : vector<16x128xi1>, vector<16x128xf32>
    %cst_8 = arith.constant 0.000000e+00 : f32
    %26 = vector.broadcast %cst_8 : f32 to vector<192x1xf32>
    %c0_9 = arith.constant 0 : index
    %c0_10 = arith.constant 0 : index
    %27 = vector.load %arg1[%c0_9, %c0_10] : memref<192x32xf32, #tpu.memory_space<vmem>>, vector<192x32xf32>
    %c0_11 = arith.constant 0 : index
    %c0_12 = arith.constant 0 : index
    %28 = vector.load %arg3[%c0_11, %c0_12] : memref<32x128xf32, #tpu.memory_space<vmem>>, vector<32x128xf32>
    %cst_13 = arith.constant dense<0.000000e+00> : vector<192x128xf32>
    %29 = tpu.matmul %27, %28, %cst_13 {dimension_numbers = #tpu.dot_dimension_numbers<[1], [0], [0], [1], [0, 0, 1, 1], [], []>} : vector<192x32xf32>, vector<32x128xf32>, vector<192x128xf32> -> vector<192x128xf32>
    %c0_14 = arith.constant 0 : index
    %c0_15 = arith.constant 0 : index
    %30 = vector.load %arg4[%c0_14, %c0_15] : memref<1x128xf32, #tpu.memory_space<vmem>>, vector<1x128xf32>
    %31 = vector.broadcast %30 : vector<1x128xf32> to vector<192x128xf32>
    %32 = arith.addf %29, %31 : vector<192x128xf32>
    %33 = math.tanh %32 : vector<192x128xf32>
    %c0_16 = arith.constant 0 : index
    %c0_17 = arith.constant 0 : index
    %34 = vector.load %arg8[%c0_16, %c0_17] : memref<192x16xf32, #tpu.memory_space<vmem>>, vector<192x16xf32>
    %cst_18 = arith.constant dense<0.000000e+00> : vector<192x128xf32>
    %35 = tpu.matmul %34, %25, %cst_18 {dimension_numbers = #tpu.dot_dimension_numbers<[1], [0], [0], [1], [0, 0, 1, 1], [], []>} : vector<192x16xf32>, vector<16x128xf32>, vector<192x128xf32> -> vector<192x128xf32>
    %36 = arith.mulf %33, %35 : vector<192x128xf32>
    %cst_19 = arith.constant dense<0.000000e+00> : vector<192xf32>
    %37 = vector.multi_reduction <add>, %36, %cst_19 [1] : vector<192x128xf32> to vector<192xf32>
    %38 = vector.shape_cast %37 : vector<192xf32> to vector<192x1xf32>
    %39 = arith.addf %26, %38 : vector<192x1xf32>
    %c0_20 = arith.constant 0 : index
    %40 = memref.load %arg10[%c0_20] : memref<1xf32, #tpu.memory_space<smem>>
    %41 = vector.broadcast %40 : f32 to vector<192x1xf32>
    %42 = arith.addf %39, %41 : vector<192x1xf32>
    %43 = math.tanh %42 : vector<192x1xf32>
    %44 = math.exp %43 : vector<192x1xf32>
    %cst_21 = arith.constant 0.000000e+00 : f32
    %45 = vector.broadcast %cst_21 : f32 to vector<192x1xf32>
    %46 = arith.select %5, %44, %45 : vector<192x1xi1>, vector<192x1xf32>
    %47 = vector.shape_cast %46 : vector<192x1xf32> to vector<192x1xf32>
    %48 = vector.broadcast %47 : vector<192x1xf32> to vector<192x128xf32>
    %c0_22 = arith.constant 0 : index
    %c0_23 = arith.constant 0 : index
    %49 = vector.load %arg9[%c0_22, %c0_23] : memref<16x192xf32, #tpu.memory_space<vmem>>, vector<16x192xf32>
    %cst_24 = arith.constant dense<0.000000e+00> : vector<16x128xf32>
    %50 = tpu.matmul %49, %48, %cst_24 {dimension_numbers = #tpu.dot_dimension_numbers<[1], [0], [0], [1], [0, 0, 1, 1], [], []>} : vector<16x192xf32>, vector<192x128xf32>, vector<16x128xf32> -> vector<16x128xf32>
    %c0_25 = arith.constant 0 : index
    %c0_26 = arith.constant 0 : index
    %51 = vector.load %arg8[%c0_25, %c0_26] : memref<192x16xf32, #tpu.memory_space<vmem>>, vector<192x16xf32>
    %cst_27 = arith.constant dense<0.000000e+00> : vector<192x128xf32>
    %52 = tpu.matmul %51, %50, %cst_27 {dimension_numbers = #tpu.dot_dimension_numbers<[1], [0], [0], [1], [0, 0, 1, 1], [], []>} : vector<192x16xf32>, vector<16x128xf32>, vector<192x128xf32> -> vector<192x128xf32>
    %53 = vector.extract_strided_slice %52 {offsets = [0, 0], sizes = [192, 1], strides = [1, 1]} : vector<192x128xf32> to vector<192x1xf32>
    %54 = tpu.reciprocal %53 : vector<192x1xf32> -> vector<192x1xf32>
    %55 = arith.mulf %46, %54 : vector<192x1xf32>
    %c0_28 = arith.constant 0 : index
    %c0_29 = arith.constant 0 : index
    %56 = vector.load %arg12[%c0_28, %c0_29] : memref<192x1xf32, #tpu.memory_space<vmem>>, vector<192x1xf32>
    tpu.vector_store %arg12[%c0_28, %c0_29], %55 {strides = array<i32>} : memref<192x1xf32, #tpu.memory_space<vmem>>, vector<192x1xf32>,
    %c0_30 = arith.constant 0 : index
    %c0_31 = arith.constant 0 : index
    %57 = vector.load %arg1[%c0_30, %c0_31] : memref<192x32xf32, #tpu.memory_space<vmem>>, vector<192x32xf32>
    %58 = vector.broadcast %55 : vector<192x1xf32> to vector<192x32xf32>
    %59 = arith.mulf %58, %57 : vector<192x32xf32>
    %cst_32 = arith.constant 0.000000e+00 : f32
    %60 = vector.shape_cast %5 : vector<192x1xi1> to vector<192x1xi1>
    %61 = vector.broadcast %60 : vector<192x1xi1> to vector<192x32xi1>
    %62 = vector.broadcast %cst_32 : f32 to vector<192x32xf32>
    %63 = arith.select %61, %59, %62 : vector<192x32xi1>, vector<192x32xf32>
    %c0_33 = arith.constant 0 : index
    %c0_34 = arith.constant 0 : index
    %64 = vector.load %arg9[%c0_33, %c0_34] : memref<16x192xf32, #tpu.memory_space<vmem>>, vector<16x192xf32>
    %cst_35 = arith.constant dense<0.000000e+00> : vector<16x32xf32>
    %65 = tpu.matmul %64, %63, %cst_35 {dimension_numbers = #tpu.dot_dimension_numbers<[1], [0], [0], [1], [0, 0, 1, 1], [], []>} : vector<16x192xf32>, vector<192x32xf32>, vector<16x32xf32> -> vector<16x32xf32>
    %66 = arith.mulf %65, %65 : vector<16x32xf32>
    %cst_36 = arith.constant dense<0.000000e+00> : vector<16xf32>
    %67 = vector.multi_reduction <add>, %66, %cst_36 [1] : vector<16x32xf32> to vector<16xf32>
    %68 = vector.shape_cast %67 : vector<16xf32> to vector<16x1xf32>
    %69 = math.sqrt %68 : vector<16x1xf32>
    %cst_37 = arith.constant 9.99999993E-9 : f32
    %70 = vector.broadcast %cst_37 : f32 to vector<16x1xf32>
    %71 = arith.addf %69, %70 : vector<16x1xf32>
    %72 = tpu.reciprocal %71 : vector<16x1xf32> -> vector<16x1xf32>
    %73 = vector.broadcast %72 : vector<16x1xf32> to vector<16x32xf32>
    %74 = arith.mulf %65, %73 : vector<16x32xf32>
    %c0_38 = arith.constant 0 : index
    %c0_39 = arith.constant 0 : index
    %75 = vector.load %arg11[%c0_38, %c0_39] : memref<16x32xf32, #tpu.memory_space<vmem>>, vector<16x32xf32>
    tpu.vector_store %arg11[%c0_38, %c0_39], %74 {strides = array<i32>} : memref<16x32xf32, #tpu.memory_space<vmem>>, vector<16x32xf32>,
    return
  }
  func.func @transform_0(%arg0: i32) -> (i32, i32) {
    %c0_i32 = arith.constant 0 : i32
    %c0_i32_0 = arith.constant 0 : i32
    return %arg0, %c0_i32 : i32, i32
  }
  func.func @transform_1(%arg0: i32) -> (i32, i32) {
    %c0_i32 = arith.constant 0 : i32
    %c0_i32_0 = arith.constant 0 : i32
    return %arg0, %c0_i32 : i32, i32
  }
  func.func @transform_2(%arg0: i32) -> (i32, i32) {
    %c0_i32 = arith.constant 0 : i32
    %c0_i32_0 = arith.constant 0 : i32
    %c0_i32_1 = arith.constant 0 : i32
    return %c0_i32, %c0_i32_0 : i32, i32
  }
  func.func @transform_3(%arg0: i32) -> (i32, i32) {
    %c0_i32 = arith.constant 0 : i32
    %c0_i32_0 = arith.constant 0 : i32
    %c0_i32_1 = arith.constant 0 : i32
    return %c0_i32, %c0_i32_0 : i32, i32
  }
  func.func @transform_4(%arg0: i32) -> (i32, i32) {
    %c0_i32 = arith.constant 0 : i32
    %c0_i32_0 = arith.constant 0 : i32
    %c0_i32_1 = arith.constant 0 : i32
    return %c0_i32, %c0_i32_0 : i32, i32
  }
  func.func @transform_5(%arg0: i32) -> (i32, i32) {
    %c0_i32 = arith.constant 0 : i32
    %c0_i32_0 = arith.constant 0 : i32
    %c0_i32_1 = arith.constant 0 : i32
    return %c0_i32, %c0_i32_0 : i32, i32
  }
  func.func @transform_6(%arg0: i32) -> (i32, i32) {
    %c0_i32 = arith.constant 0 : i32
    %c0_i32_0 = arith.constant 0 : i32
    %c0_i32_1 = arith.constant 0 : i32
    return %c0_i32, %c0_i32_0 : i32, i32
  }
  func.func @transform_7(%arg0: i32) -> (i32, i32) {
    %c0_i32 = arith.constant 0 : i32
    %c0_i32_0 = arith.constant 0 : i32
    %c0_i32_1 = arith.constant 0 : i32
    return %c0_i32, %c0_i32_0 : i32, i32
  }
  func.func @transform_8(%arg0: i32) -> (i32, i32) {
    %c0_i32 = arith.constant 0 : i32
    %c0_i32_0 = arith.constant 0 : i32
    %c0_i32_1 = arith.constant 0 : i32
    return %c0_i32, %c0_i32_0 : i32, i32
  }
  func.func @transform_9(%arg0: i32) -> i32 {
    %c0_i32 = arith.constant 0 : i32
    %c0_i32_0 = arith.constant 0 : i32
    return %c0_i32 : i32
  }
  func.func @transform_10(%arg0: i32) -> (i32, i32) {
    %c0_i32 = arith.constant 0 : i32
    %c0_i32_0 = arith.constant 0 : i32
    return %arg0, %c0_i32 : i32, i32
  }
  func.func @transform_11(%arg0: i32) -> (i32, i32) {
    %c0_i32 = arith.constant 0 : i32
    %c0_i32_0 = arith.constant 0 : i32
    return %arg0, %c0_i32 : i32, i32
  }
}

</mosaic_0001>

<llo_original>
// kernel: tpu_custom_call.1
$region0: #{tpu_custom_call.1}
  #allocation0 [shape = 'u32[]', space=smem, size = 0x4, offset = 0x4, fixed_abs, tag = 'smem constant byte address 0x4 - core index']
  #allocation1 [shape = 'u32[144,128]{1,0:T(1,128)}', space=vmem, size = 0x12000, scoped, tag = 'internal scratch']
  #allocation2 [shape = 'f32[1]{0:T(128)S(6)}', space=smem, size = 0x200, scoped, tag = 'scoped memory for tpu_custom_call.1']
  %s0 = inlined_call_operand.vmem [shape: f32[240,32], index: 0, kind: input, shape index: {}]
  %s1 = inlined_call_operand.vmem [shape: f32[20,32], index: 1, kind: input, shape index: {}]
  %s2 = inlined_call_operand.vmem [shape: f32[32,128], index: 2, kind: input, shape index: {}]
  %s3 = inlined_call_operand.vmem [shape: f32[1,128], index: 3, kind: input, shape index: {}]
  %s4 = inlined_call_operand.vmem [shape: f32[32,128], index: 4, kind: input, shape index: {}]
  %s5 = inlined_call_operand.vmem [shape: f32[1,128], index: 5, kind: input, shape index: {}]
  %s6 = inlined_call_operand.vmem [shape: f32[1,128], index: 6, kind: input, shape index: {}]
  %s7 = inlined_call_operand.vmem [shape: f32[192,16], index: 7, kind: input, shape index: {}]
  %s8 = inlined_call_operand.vmem [shape: f32[16,192], index: 8, kind: input, shape index: {}]
  %s9 = inlined_call_operand.<no memory space> [shape: f32[1], index: 9, kind: input, shape index: {}]
  %s10 = inlined_call_operand.hbm [shape: f32[20,32], index: 10, kind: output, shape index: {0}]
  %s11 = inlined_call_operand.vmem [shape: f32[240,1], index: 11, kind: output, shape index: {1}]
  %12 = xla_tuple %s10, %s11
  %s13 = sld [smem:[#allocation0]]
  $region129: #{tpu_custom_call.1} parent=0
    _
  %s15 = ssub.s32 1, %s13
  %s16 = scalar_select 0, %s15, %s13
  %17 = sst [smem:[#allocation2]] %s9
  $region1: #{tpu_custom_call.1} parent=0
    #allocation3 [shape = 'u8[16384]{0}', space=vmem, size = 0x4000, scoped, tag = 'output window, operand 0']
    #allocation4 [shape = 's32[2]{0}', space=sflag, size = 0x8, scoped, tag = 'scoped memory for tpu_custom_call.1']
    #allocation5 [shape = 'u8[196608]{0}', space=vmem, size = 0x30000, scoped, tag = 'output window, operand 1']
    %18 = vsyncpa [#allocation4], 0
    %s19 = scalar_lea.sflag [#allocation4], 1
    %20 = vsyncpa %s19, 0
    loop: start=0, step=1, limit=4
    $region2: #{tpu_custom_call.1} parent=1 // loop_pre_header
      _
    $region3: #{tpu_custom_call.1} parent=1 // loop_header
      %s22 = sphi 0, %s26
      %p23 = scmp.ge.s32.totalorder %s22, 4
      %s32 = sphi 0, %s34
      %s35 = sphi 0, %s32
      %s36 = sphi 0, %s35
      %s52 = sphi 0, %s36
      %s58 = sphi 0, %s60
      %s61 = sphi 0, %s58
      %s62 = sphi 0, %s61
      %s78 = sphi 0, %s62
      %s82 = sphi 0, %s82
      %s84 = sphi 0, %s82
      %s85 = sphi 0, %s84
      %s99 = sphi 0, %s85
      %s103 = sphi 0, %s103
      %s105 = sphi 0, %s103
      %s106 = sphi 0, %s105
      %s120 = sphi 0, %s106
      %s124 = sphi 0, %s124
      %s126 = sphi 0, %s124
      %s127 = sphi 0, %s126
      %s141 = sphi 0, %s127
      %s145 = sphi 0, %s145
      %s147 = sphi 0, %s145
      %s148 = sphi 0, %s147
      %s162 = sphi 0, %s148
      %s166 = sphi 0, %s166
      %s168 = sphi 0, %s166
      %s169 = sphi 0, %s168
      %s183 = sphi 0, %s169
      %s187 = sphi 0, %s187
      %s189 = sphi 0, %s187
      %s190 = sphi 0, %s189
      %s204 = sphi 0, %s190
      %s208 = sphi 0, %s208
      %s210 = sphi 0, %s208
      %s211 = sphi 0, %s210
      %s225 = sphi 0, %s211
      %s229 = sphi 0, %s229
      %s231 = sphi 0, %s229
      %s232 = sphi 0, %s231
      %s246 = sphi 0, %s232
      %s252 = sphi 0, %s254
      %s255 = sphi 0, %s252
      %s256 = sphi 0, %s255
      %s272 = sphi 0, %s256
      %s278 = sphi 0, %s280
      %s281 = sphi 0, %s278
      %s282 = sphi 0, %s281
      %s298 = sphi 0, %s282
    $region4: #{tpu_custom_call.1} parent=1 // loop_header_branch
      %25 = sbr.rel (%p23) target = $region8
    $region5: #{tpu_custom_call.1} parent=1 // loop_body
      %s27 = ssub.s32 %s22, 1
      %s28 = ssub.s32 %s22, 2
      %s29 = sadd.s32 %s22, 1
      %s30 = ssub.s32 %s22, %s29
      %p31 = scmp.eq.s32.totalorder %s30, 0
      %s33 = sadd.s32 %s32, 1
      %s34 = scalar_select %p31, %s32, %s33
      %p37 = pneg %p31
      %p38 = scmp.eq.s32.totalorder %s22, 1
      %p39 = por %p37, %p38
      %p40 = scmp.ne.s32.totalorder %s32, %s35
      %p41 = scmp.eq.s32.totalorder %s22, 0
      %p42 = por %p40, %p41
      %p43 = scmp.ne.s32.totalorder %s32, %s35
      %p44 = scmp.eq.s32.totalorder %s27, 1
      %p45 = por %p43, %p44
      %p46 = scmp.ne.s32.totalorder %s35, %s36
      %p47 = scmp.eq.s32.totalorder %s27, 0
      %p48 = por %p46, %p47
      %p49 = scmp.ne.s32.totalorder %s35, %s36
      %p50 = scmp.eq.s32.totalorder %s28, 1
      %p51 = por %p49, %p50
      %p53 = scmp.ne.s32.totalorder %s36, %s52
      %p54 = scmp.eq.s32.totalorder %s28, 0
      %p55 = por %p53, %p54
      %s56 = ssub.s32 %s22, %s29
      %p57 = scmp.eq.s32.totalorder %s56, 0
      %s59 = sadd.s32 %s58, 1
      %s60 = scalar_select %p57, %s58, %s59
      %p63 = pneg %p57
      %p64 = scmp.eq.s32.totalorder %s22, 1
      %p65 = por %p63, %p64
      %p66 = scmp.ne.s32.totalorder %s58, %s61
      %p67 = scmp.eq.s32.totalorder %s22, 0
      %p68 = por %p66, %p67
      %p69 = scmp.ne.s32.totalorder %s58, %s61
      %p70 = scmp.eq.s32.totalorder %s27, 1
      %p71 = por %p69, %p70
      %p72 = scmp.ne.s32.totalorder %s61, %s62
      %p73 = scmp.eq.s32.totalorder %s27, 0
      %p74 = por %p72, %p73
      %p75 = scmp.ne.s32.totalorder %s61, %s62
      %p76 = scmp.eq.s32.totalorder %s28, 1
      %p77 = por %p75, %p76
      %p79 = scmp.ne.s32.totalorder %s62, %s78
      %p80 = scmp.eq.s32.totalorder %s28, 0
      %p81 = por %p79, %p80
      %s83 = sadd.s32 %s82, 1
      %p86 = scmp.eq.s32.totalorder %s22, 1
      %p87 = scmp.ne.s32.totalorder %s82, %s84
      %p88 = scmp.eq.s32.totalorder %s22, 0
      %p89 = por %p87, %p88
      %p90 = scmp.ne.s32.totalorder %s82, %s84
      %p91 = scmp.eq.s32.totalorder %s27, 1
      %p92 = por %p90, %p91
      %p93 = scmp.ne.s32.totalorder %s84, %s85
      %p94 = scmp.eq.s32.totalorder %s27, 0
      %p95 = por %p93, %p94
      %p96 = scmp.ne.s32.totalorder %s84, %s85
      %p97 = scmp.eq.s32.totalorder %s28, 1
      %p98 = por %p96, %p97
      %p100 = scmp.ne.s32.totalorder %s85, %s99
      %p101 = scmp.eq.s32.totalorder %s28, 0
      %p102 = por %p100, %p101
      %s104 = sadd.s32 %s103, 1
      %p107 = scmp.eq.s32.totalorder %s22, 1
      %p108 = scmp.ne.s32.totalorder %s103, %s105
      %p109 = scmp.eq.s32.totalorder %s22, 0
      %p110 = por %p108, %p109
      %p111 = scmp.ne.s32.totalorder %s103, %s105
      %p112 = scmp.eq.s32.totalorder %s27, 1
      %p113 = por %p111, %p112
      %p114 = scmp.ne.s32.totalorder %s105, %s106
      %p115 = scmp.eq.s32.totalorder %s27, 0
      %p116 = por %p114, %p115
      %p117 = scmp.ne.s32.totalorder %s105, %s106
      %p118 = scmp.eq.s32.totalorder %s28, 1
      %p119 = por %p117, %p118
      %p121 = scmp.ne.s32.totalorder %s106, %s120
      %p122 = scmp.eq.s32.totalorder %s28, 0
      %p123 = por %p121, %p122
      %s125 = sadd.s32 %s124, 1
      %p128 = scmp.eq.s32.totalorder %s22, 1
      %p129 = scmp.ne.s32.totalorder %s124, %s126
      %p130 = scmp.eq.s32.totalorder %s22, 0
      %p131 = por %p129, %p130
      %p132 = scmp.ne.s32.totalorder %s124, %s126
      %p133 = scmp.eq.s32.totalorder %s27, 1
      %p134 = por %p132, %p133
      %p135 = scmp.ne.s32.totalorder %s126, %s127
      %p136 = scmp.eq.s32.totalorder %s27, 0
      %p137 = por %p135, %p136
      %p138 = scmp.ne.s32.totalorder %s126, %s127
      %p139 = scmp.eq.s32.totalorder %s28, 1
      %p140 = por %p138, %p139
      %p142 = scmp.ne.s32.totalorder %s127, %s141
      %p143 = scmp.eq.s32.totalorder %s28, 0
      %p144 = por %p142, %p143
      %s146 = sadd.s32 %s145, 1
      %p149 = scmp.eq.s32.totalorder %s22, 1
      %p150 = scmp.ne.s32.totalorder %s145, %s147
      %p151 = scmp.eq.s32.totalorder %s22, 0
      %p152 = por %p150, %p151
      %p153 = scmp.ne.s32.totalorder %s145, %s147
      %p154 = scmp.eq.s32.totalorder %s27, 1
      %p155 = por %p153, %p154
      %p156 = scmp.ne.s32.totalorder %s147, %s148
      %p157 = scmp.eq.s32.totalorder %s27, 0
      %p158 = por %p156, %p157
      %p159 = scmp.ne.s32.totalorder %s147, %s148
      %p160 = scmp.eq.s32.totalorder %s28, 1
      %p161 = por %p159, %p160
      %p163 = scmp.ne.s32.totalorder %s148, %s162
      %p164 = scmp.eq.s32.totalorder %s28, 0
      %p165 = por %p163, %p164
      %s167 = sadd.s32 %s166, 1
      %p170 = scmp.eq.s32.totalorder %s22, 1
      %p171 = scmp.ne.s32.totalorder %s166, %s168
      %p172 = scmp.eq.s32.totalorder %s22, 0
      %p173 = por %p171, %p172
      %p174 = scmp.ne.s32.totalorder %s166, %s168
      %p175 = scmp.eq.s32.totalorder %s27, 1
      %p176 = por %p174, %p175
      %p177 = scmp.ne.s32.totalorder %s168, %s169
      %p178 = scmp.eq.s32.totalorder %s27, 0
      %p179 = por %p177, %p178
      %p180 = scmp.ne.s32.totalorder %s168, %s169
      %p181 = scmp.eq.s32.totalorder %s28, 1
      %p182 = por %p180, %p181
      %p184 = scmp.ne.s32.totalorder %s169, %s183
      %p185 = scmp.eq.s32.totalorder %s28, 0
      %p186 = por %p184, %p185
      %s188 = sadd.s32 %s187, 1
      %p191 = scmp.eq.s32.totalorder %s22, 1
      %p192 = scmp.ne.s32.totalorder %s187, %s189
      %p193 = scmp.eq.s32.totalorder %s22, 0
      %p194 = por %p192, %p193
      %p195 = scmp.ne.s32.totalorder %s187, %s189
      %p196 = scmp.eq.s32.totalorder %s27, 1
      %p197 = por %p195, %p196
      %p198 = scmp.ne.s32.totalorder %s189, %s190
      %p199 = scmp.eq.s32.totalorder %s27, 0
      %p200 = por %p198, %p199
      %p201 = scmp.ne.s32.totalorder %s189, %s190
      %p202 = scmp.eq.s32.totalorder %s28, 1
      %p203 = por %p201, %p202
      %p205 = scmp.ne.s32.totalorder %s190, %s204
      %p206 = scmp.eq.s32.totalorder %s28, 0
      %p207 = por %p205, %p206
      %s209 = sadd.s32 %s208, 1
      %p212 = scmp.eq.s32.totalorder %s22, 1
      %p213 = scmp.ne.s32.totalorder %s208, %s210
      %p214 = scmp.eq.s32.totalorder %s22, 0
      %p215 = por %p213, %p214
      %p216 = scmp.ne.s32.totalorder %s208, %s210
      %p217 = scmp.eq.s32.totalorder %s27, 1
      %p218 = por %p216, %p217
      %p219 = scmp.ne.s32.totalorder %s210, %s211
      %p220 = scmp.eq.s32.totalorder %s27, 0
      %p221 = por %p219, %p220
      %p222 = scmp.ne.s32.totalorder %s210, %s211
      %p223 = scmp.eq.s32.totalorder %s28, 1
      %p224 = por %p222, %p223
      %p226 = scmp.ne.s32.totalorder %s211, %s225
      %p227 = scmp.eq.s32.totalorder %s28, 0
      %p228 = por %p226, %p227
      %s230 = sadd.s32 %s229, 1
      %p233 = scmp.eq.s32.totalorder %s22, 1
      %p234 = scmp.ne.s32.totalorder %s229, %s231
      %p235 = scmp.eq.s32.totalorder %s22, 0
      %p236 = por %p234, %p235
      %p237 = scmp.ne.s32.totalorder %s229, %s231
      %p238 = scmp.eq.s32.totalorder %s27, 1
      %p239 = por %p237, %p238
      %p240 = scmp.ne.s32.totalorder %s231, %s232
      %p241 = scmp.eq.s32.totalorder %s27, 0
      %p242 = por %p240, %p241
      %p243 = scmp.ne.s32.totalorder %s231, %s232
      %p244 = scmp.eq.s32.totalorder %s28, 1
      %p245 = por %p243, %p244
      %p247 = scmp.ne.s32.totalorder %s232, %s246
      %p248 = scmp.eq.s32.totalorder %s28, 0
      %p249 = por %p247, %p248
      %s250 = ssub.s32 %s22, %s29
      %p251 = scmp.eq.s32.totalorder %s250, 0
      %s253 = sadd.s32 %s252, 1
      %s254 = scalar_select %p251, %s252, %s253
      %p257 = pneg %p251
      %p258 = scmp.eq.s32.totalorder %s22, 1
      %p259 = por %p257, %p258
      %p260 = scmp.ne.s32.totalorder %s252, %s255
      %p261 = scmp.eq.s32.totalorder %s22, 0
      %p262 = por %p260, %p261
      %p263 = scmp.ne.s32.totalorder %s252, %s255
      %p264 = scmp.eq.s32.totalorder %s27, 1
      %p265 = por %p263, %p264
      %p266 = scmp.ne.s32.totalorder %s255, %s256
      %p267 = scmp.eq.s32.totalorder %s27, 0
      %p268 = por %p266, %p267
      %p269 = scmp.ne.s32.totalorder %s255, %s256
      %p270 = scmp.eq.s32.totalorder %s28, 1
      %p271 = por %p269, %p270
      %p273 = scmp.ne.s32.totalorder %s256, %s272
      %p274 = scmp.eq.s32.totalorder %s28, 0
      %p275 = por %p273, %p274
      %s276 = ssub.s32 %s22, %s29
      %p277 = scmp.eq.s32.totalorder %s276, 0
      %s279 = sadd.s32 %s278, 1
      %s280 = scalar_select %p277, %s278, %s279
      %p283 = pneg %p277
      %p284 = scmp.eq.s32.totalorder %s22, 1
      %p285 = por %p283, %p284
      %p286 = scmp.ne.s32.totalorder %s278, %s281
      %p287 = scmp.eq.s32.totalorder %s22, 0
      %p288 = por %p286, %p287
      %p289 = scmp.ne.s32.totalorder %s278, %s281
      %p290 = scmp.eq.s32.totalorder %s27, 1
      %p291 = por %p289, %p290
      %p292 = scmp.ne.s32.totalorder %s281, %s282
      %p293 = scmp.eq.s32.totalorder %s27, 0
      %p294 = por %p292, %p293
      %p295 = scmp.ne.s32.totalorder %s281, %s282
      %p296 = scmp.eq.s32.totalorder %s28, 1
      %p297 = por %p295, %p296
      %p299 = scmp.ne.s32.totalorder %s282, %s298
      %p300 = scmp.eq.s32.totalorder %s28, 0
      %p301 = por %p299, %p300
      %p302 = scmp.le.s32.totalorder 1, %s22
      %p303 = scmp.lt.s32.totalorder %s22, 3
      %p304 = pnand %p302, %p303
      %p305 = pneg %p304
      // Predicated region
      $region9: #{tpu_custom_call.1} parent=5 // pred_check
        _
      $region10: #{tpu_custom_call.1} parent=5 // pred_check_branch
        %307 = sbr.rel (%p304) target = $region12
      $region11: #{tpu_custom_call.1} parent=5 // pred_region
        %s308 = ssub.s32 %s22, 1
        // Predicated region
        $region13: #{tpu_custom_call.1} parent=11 // pred_check
          %p309 = pneg %p95
        $region14: #{tpu_custom_call.1} parent=11 // pred_check_branch
          %311 = sbr.rel (%p309) target = $region16
        $region15: #{tpu_custom_call.1} parent=11 // pred_region
          _
        $region16: #{tpu_custom_call.1} parent=11 // pred_fallthru
          _
        // Predicated region
        $region17: #{tpu_custom_call.1} parent=11 // pred_check
          %p312 = pneg %p116
        $region18: #{tpu_custom_call.1} parent=11 // pred_check_branch
          %314 = sbr.rel (%p312) target = $region20
        $region19: #{tpu_custom_call.1} parent=11 // pred_region
          _
        $region20: #{tpu_custom_call.1} parent=11 // pred_fallthru
          _
        // Predicated region
        $region21: #{tpu_custom_call.1} parent=11 // pred_check
          %p315 = pneg %p137
        $region22: #{tpu_custom_call.1} parent=11 // pred_check_branch
          %317 = sbr.rel (%p315) target = $region24
        $region23: #{tpu_custom_call.1} parent=11 // pred_region
          _
        $region24: #{tpu_custom_call.1} parent=11 // pred_fallthru
          _
        // Predicated region
        $region25: #{tpu_custom_call.1} parent=11 // pred_check
          %p318 = pneg %p158
        $region26: #{tpu_custom_call.1} parent=11 // pred_check_branch
          %320 = sbr.rel (%p318) target = $region28
        $region27: #{tpu_custom_call.1} parent=11 // pred_region
          _
        $region28: #{tpu_custom_call.1} parent=11 // pred_fallthru
          _
        // Predicated region
        $region29: #{tpu_custom_call.1} parent=11 // pred_check
          %p321 = pneg %p179
        $region30: #{tpu_custom_call.1} parent=11 // pred_check_branch
          %323 = sbr.rel (%p321) target = $region32
        $region31: #{tpu_custom_call.1} parent=11 // pred_region
          _
        $region32: #{tpu_custom_call.1} parent=11 // pred_fallthru
          _
        // Predicated region
        $region33: #{tpu_custom_call.1} parent=11 // pred_check
          %p324 = pneg %p200
        $region34: #{tpu_custom_call.1} parent=11 // pred_check_branch
          %326 = sbr.rel (%p324) target = $region36
        $region35: #{tpu_custom_call.1} parent=11 // pred_region
          _
        $region36: #{tpu_custom_call.1} parent=11 // pred_fallthru
          _
        // Predicated region
        $region37: #{tpu_custom_call.1} parent=11 // pred_check
          %p327 = pneg %p221
        $region38: #{tpu_custom_call.1} parent=11 // pred_check_branch
          %329 = sbr.rel (%p327) target = $region40
        $region39: #{tpu_custom_call.1} parent=11 // pred_region
          _
        $region40: #{tpu_custom_call.1} parent=11 // pred_fallthru
          _
        // Predicated region
        $region41: #{tpu_custom_call.1} parent=11 // pred_check
          %p330 = pneg %p242
        $region42: #{tpu_custom_call.1} parent=11 // pred_check_branch
          %332 = sbr.rel (%p330) target = $region44
        $region43: #{tpu_custom_call.1} parent=11 // pred_region
          _
        $region44: #{tpu_custom_call.1} parent=11 // pred_fallthru
          _
      $region12: #{tpu_custom_call.1} parent=5 // pred_fallthru
        _
      %p333 = scmp.lt.s32.totalorder %s22, 2
      // Predicated region
      $region45: #{tpu_custom_call.1} parent=5 // pred_check
        %p334 = pneg %p333
      $region46: #{tpu_custom_call.1} parent=5 // pred_check_branch
        %336 = sbr.rel (%p334) target = $region48
      $region47: #{tpu_custom_call.1} parent=5 // pred_region
        // Predicated region
        $region49: #{tpu_custom_call.1} parent=47 // pred_check
          %p337 = pneg %p42
        $region50: #{tpu_custom_call.1} parent=47 // pred_check_branch
          %339 = sbr.rel (%p337) target = $region52
        $region51: #{tpu_custom_call.1} parent=47 // pred_region
          %s340 = smul.u32 24, %s22
          %s341 = ssub.s32 30, %s340
          %p342 = scmp.lt.s32.totalorder %s341, 24
          %s343 = scalar_select %p342, %s341, 24
          %s344 = smul.u32 128, %s343
          %p345 = scmp.lt.s32.totalorder %s340, 29
          %s346 = scalar_select %p345, %s340, 29
          %s347 = smul.addr %s346, 8
          %s348 = scalar_lea.vmem %s0, %s347
          %s349 = smul.u32 24, %s22
          %s350 = ssub.s32 30, %s349
          %p351 = scmp.lt.s32.totalorder %s350, 24
          %s352 = scalar_select %p351, %s350, 24
          %s353 = smul.u32 128, %s352
        $region52: #{tpu_custom_call.1} parent=47 // pred_fallthru
          _
        // Predicated region
        $region53: #{tpu_custom_call.1} parent=47 // pred_check
          %p354 = pneg %p68
        $region54: #{tpu_custom_call.1} parent=47 // pred_check_branch
          %356 = sbr.rel (%p354) target = $region56
        $region55: #{tpu_custom_call.1} parent=47 // pred_region
          %s357 = smul.u32 2, %s22
          %s358 = ssub.s32 3, %s357
          %p359 = scmp.lt.s32.totalorder %s358, 2
          %s360 = scalar_select %p359, %s358, 2
          %s361 = smul.u32 128, %s360
          %p362 = scmp.lt.s32.totalorder %s357, 2
          %s363 = scalar_select %p362, %s357, 2
          %s364 = smul.addr %s363, 8
          %s365 = scalar_lea.vmem %s1, %s364
          %s366 = smul.u32 2, %s22
          %s367 = ssub.s32 3, %s366
          %p368 = scmp.lt.s32.totalorder %s367, 2
          %s369 = scalar_select %p368, %s367, 2
          %s370 = smul.u32 128, %s369
        $region56: #{tpu_custom_call.1} parent=47 // pred_fallthru
          _
      $region48: #{tpu_custom_call.1} parent=5 // pred_fallthru
        _
      %p371 = scmp.le.s32.totalorder 1, %s22
      %p372 = scmp.lt.s32.totalorder %s22, 3
      %p373 = pnand %p371, %p372
      %p374 = pneg %p373
      // Predicated region
      $region57: #{tpu_custom_call.1} parent=5 // pred_check
        _
      $region58: #{tpu_custom_call.1} parent=5 // pred_check_branch
        %376 = sbr.rel (%p373) target = $region60
      $region59: #{tpu_custom_call.1} parent=5 // pred_region
        %s377 = ssub.s32 %s22, 1
        %s378 = smul.u32 24, %s27
        %s379 = ssub.s32 30, %s378
        %p380 = scmp.lt.s32.totalorder %s379, 24
        %s381 = scalar_select %p380, %s379, 24
        %s382 = smul.u32 128, %s381
        %p383 = scmp.lt.s32.totalorder %s378, 29
        %s384 = scalar_select %p383, %s378, 29
        %s385 = smul.addr %s384, 8
        %s386 = scalar_lea.vmem %s0, %s385
        %p387 = pneg %p48
        %p388 = pneg %p45
        %s389 = smul.u32 2, %s27
        %s390 = ssub.s32 3, %s389
        %p391 = scmp.lt.s32.totalorder %s390, 2
        %s392 = scalar_select %p391, %s390, 2
        %s393 = smul.u32 128, %s392
        %p394 = scmp.lt.s32.totalorder %s389, 2
        %s395 = scalar_select %p394, %s389, 2
        %s396 = smul.addr %s395, 8
        %s397 = scalar_lea.vmem %s1, %s396
        %p398 = pneg %p74
        %p399 = pneg %p71
        %p400 = pneg %p95
        %p401 = pneg %p92
        %p402 = pneg %p116
        %p403 = pneg %p113
        %p404 = pneg %p137
        %p405 = pneg %p134
        %p406 = pneg %p158
        %p407 = pneg %p155
        %p408 = pneg %p179
        %p409 = pneg %p176
        %p410 = pneg %p200
        %p411 = pneg %p197
        %p412 = pneg %p221
        %p413 = pneg %p218
        %p414 = pneg %p242
        %p415 = pneg %p239
        %p416 = pneg %p268
        %p417 = pneg %p265
        %s418 = sand.u32 %s255, 1
        %s419 = scalar_lea.sflag [#allocation4], %s418
        %s420 = sand.u32 %s255, 1
        %s421 = smul.addr %s420, 16
        %s422 = scalar_lea.vmem [#allocation3], %s421
        %p423 = pneg %p294
        %p424 = pneg %p291
        %s425 = sand.u32 %s281, 1
        %s426 = sand.u32 %s281, 1
        %s427 = smul.addr %s426, 192
        %s428 = scalar_lea.vmem [#allocation5], %s427
        %s429 = smul.u32 24, %s27
        %s430 = ssub.s32 30, %s429
        %p431 = scmp.lt.s32.totalorder %s430, 24
        %s432 = scalar_select %p431, %s430, 24
        %s433 = smul.u32 128, %s432
        %p434 = scmp.lt.s32.totalorder %s429, 29
        %s435 = scalar_select %p434, %s429, 29
        %s436 = smul.addr %s435, 8
        %s437 = scalar_lea.vmem %s0, %s436
        %s438 = smul.u32 24, %s27
        %s439 = ssub.s32 30, %s438
        %p440 = scmp.lt.s32.totalorder %s439, 24
        %s441 = scalar_select %p440, %s439, 24
        %s442 = smul.u32 128, %s441
        %s443 = smul.u32 2, %s27
        %s444 = ssub.s32 3, %s443
        %p445 = scmp.lt.s32.totalorder %s444, 2
        %s446 = scalar_select %p445, %s444, 2
        %s447 = smul.u32 128, %s446
        %p448 = scmp.lt.s32.totalorder %s443, 2
        %s449 = scalar_select %p448, %s443, 2
        %s450 = smul.addr %s449, 8
        %s451 = scalar_lea.vmem %s1, %s450
        %s452 = smul.u32 2, %s27
        %s453 = ssub.s32 3, %s452
        %p454 = scmp.lt.s32.totalorder %s453, 2
        %s455 = scalar_select %p454, %s453, 2
        %s456 = smul.u32 128, %s455
        %s457 = smul.u32 2, %s27
        %s458 = ssub.s32 3, %s457
        %p459 = scmp.lt.s32.totalorder %s458, 2
        %s460 = scalar_select %p459, %s458, 2
        %s461 = smul.u32 128, %s460
        %s462 = smul.u32 24, %s27
        %s463 = ssub.s32 30, %s462
        %p464 = scmp.lt.s32.totalorder %s463, 24
        %s465 = scalar_select %p464, %s463, 24
        %s466 = smul.u32 128, %s465
        %s467 = smul.u32 %s27, 192
        %v468 = vlaneseq
        %v469 = vshrl.u32 %v468, 7
        %v470 = vadd.s32 %v469, 8
        %v471 = vadd.s32 %v469, 16
        %v472 = vadd.s32 %v469, 24
        %v473 = vadd.s32 %v469, 32
        %v474 = vadd.s32 %v469, 40
        %v475 = vadd.s32 %v469, 48
        %v476 = vadd.s32 %v469, 56
        %v477 = vadd.s32 %v469, 64
        %v478 = vadd.s32 %v469, 72
        %v479 = vadd.s32 %v469, 80
        %v480 = vadd.s32 %v469, 88
        %v481 = vadd.s32 %v469, 96
        %v482 = vadd.s32 %v469, 104
        %v483 = vadd.s32 %v469, 112
        %v484 = vadd.s32 %v469, 120
        %v485 = vadd.s32 %v469, 128
        %v486 = vadd.s32 %v469, 136
        %v487 = vadd.s32 %v469, 144
        %v488 = vadd.s32 %v469, 152
        %v489 = vadd.s32 %v469, 160
        %v490 = vadd.s32 %v469, 168
        %v491 = vadd.s32 %v469, 176
        %v492 = vadd.s32 %v469, 184
        %v493 = vstv %s467
        %v494 = vadd.s32 %v493, %v469
        %v495 = vadd.s32 %v493, %v470
        %v496 = vadd.s32 %v493, %v471
        %v497 = vadd.s32 %v493, %v472
        %v498 = vadd.s32 %v493, %v473
        %v499 = vadd.s32 %v493, %v474
        %v500 = vadd.s32 %v493, %v475
        %v501 = vadd.s32 %v493, %v476
        %v502 = vadd.s32 %v493, %v477
        %v503 = vadd.s32 %v493, %v478
        %v504 = vadd.s32 %v493, %v479
        %v505 = vadd.s32 %v493, %v480
        %v506 = vadd.s32 %v493, %v481
        %v507 = vadd.s32 %v493, %v482
        %v508 = vadd.s32 %v493, %v483
        %v509 = vadd.s32 %v493, %v484
        %v510 = vadd.s32 %v493, %v485
        %v511 = vadd.s32 %v493, %v486
        %v512 = vadd.s32 %v493, %v487
        %v513 = vadd.s32 %v493, %v488
        %v514 = vadd.s32 %v493, %v489
        %v515 = vadd.s32 %v493, %v490
        %v516 = vadd.s32 %v493, %v491
        %v517 = vadd.s32 %v493, %v492
        %vm518 = vcmp.lt.s32.totalorder %v494, 240
        %vm519 = vcmp.lt.s32.totalorder %v495, 240
        %vm520 = vcmp.lt.s32.totalorder %v496, 240
        %vm521 = vcmp.lt.s32.totalorder %v497, 240
        %vm522 = vcmp.lt.s32.totalorder %v498, 240
        %vm523 = vcmp.lt.s32.totalorder %v499, 240
        %vm524 = vcmp.lt.s32.totalorder %v500, 240
        %vm525 = vcmp.lt.s32.totalorder %v501, 240
        %vm526 = vcmp.lt.s32.totalorder %v502, 240
        %vm527 = vcmp.lt.s32.totalorder %v503, 240
        %vm528 = vcmp.lt.s32.totalorder %v504, 240
        %vm529 = vcmp.lt.s32.totalorder %v505, 240
        %vm530 = vcmp.lt.s32.totalorder %v506, 240
        %vm531 = vcmp.lt.s32.totalorder %v507, 240
        %vm532 = vcmp.lt.s32.totalorder %v508, 240
        %vm533 = vcmp.lt.s32.totalorder %v509, 240
        %vm534 = vcmp.lt.s32.totalorder %v510, 240
        %vm535 = vcmp.lt.s32.totalorder %v511, 240
        %vm536 = vcmp.lt.s32.totalorder %v512, 240
        %vm537 = vcmp.lt.s32.totalorder %v513, 240
        %vm538 = vcmp.lt.s32.totalorder %v514, 240
        %vm539 = vcmp.lt.s32.totalorder %v515, 240
        %vm540 = vcmp.lt.s32.totalorder %v516, 240
        %vm541 = vcmp.lt.s32.totalorder %v517, 240
        %s542 = smul.u32 %s27, 16
        %v543 = vstv %s542
        %v544 = vadd.s32 %v543, %v469
        %v545 = vadd.s32 %v543, %v470
        %vm546 = vcmp.lt.s32.totalorder %v544, 20
        %vm547 = vcmp.lt.s32.totalorder %v545, 20
        %v548 = vld [vmem:[%s451] sm:$0xff]
        %v549 = vld [vmem:[%s451 + $0x8] sm:$0xff]
        %v550 = vld [vmem:[%s4] sm:$0xff]
        %v551 = vld [vmem:[%s4 + $0x8] sm:$0xff]
        %v552 = vld [vmem:[%s4 + $0x10] sm:$0xff]
        %v553 = vld [vmem:[%s4 + $0x18] sm:$0xff]
        %v554 = vld [vmem:[%s5] sm:$0x1]
        %v556 = vlaneseq
        %v557 = vshrl.u32 %v556, 7
        %v558 = vsub.s32 0, %v557
        %v559 = vrot.slane %v554, %v558
        %vm561 = vcmask 261120
        %v563 = vsel %vm561, %v548, 0
        %v566 = vsel %vm561, %v549, 0
        %568 = vmatprep.subr.mxu0 0.0
        %569 = vmatpush1.msra.mxu0 %v550
        %570 = vmatprep.subr.mxu0 0.0
        %571 = vmatpush1.msra.mxu0 %v551
        %572 = vmatprep.subr.mxu0 0.0
        %573 = vmatpush1.msra.mxu0 %v552
        %574 = vmatprep.subr.mxu0 0.0
        %575 = vmatpush1.msra.mxu0 %v553
        %576 = vmatprep.subr.mxu0 0.0
        %577 = vmatpush1.msra.mxu0 0.0
        %578 = vmatprep.subr.mxu0 0.0
        %579 = vmatpush1.msra.mxu0 0.0
        %580 = vmatprep.subr.mxu0 0.0
        %581 = vmatpush1.msra.mxu0 0.0
        %582 = vmatprep.subr.mxu0 0.0
        %583 = vmatpush1.msra.mxu0 0.0
        %584 = vmatprep.subr.mxu0 0.0
        %585 = vmatpush1.msra.mxu0 0.0
        %586 = vmatprep.subr.mxu0 0.0
        %587 = vmatpush1.msra.mxu0 0.0
        %588 = vmatprep.subr.mxu0 0.0
        %589 = vmatpush1.msra.mxu0 0.0
        %590 = vmatprep.subr.mxu0 0.0
        %591 = vmatpush1.msra.mxu0 0.0
        %592 = vmatprep.subr.mxu0 0.0
        %593 = vmatpush1.msra.mxu0 0.0
        %594 = vmatprep.subr.mxu0 0.0
        %595 = vmatpush1.msra.mxu0 0.0
        %596 = vmatprep.subr.mxu0 0.0
        %597 = vmatpush1.msra.mxu0 0.0
        %598 = vmatprep.subr.mxu0 0.0
        %599 = vmatpush1.msra.mxu0 0.0
        %600 = vmatprep.subr.mxu0 0.0
        %601 = vmatpush1.msra.mxu0 0.0
        %602 = vmatprep.subr.mxu0 0.0
        %603 = vmatpush1.msra.mxu0 0.0
        %604 = vmatprep.subr.mxu0 0.0
        %605 = vmatpush1.msra.mxu0 0.0
        %606 = vmatprep.subr.mxu0 0.0
        %607 = vmatpush1.msra.mxu0 0.0
        %608 = vmatprep.subr.mxu0 0.0
        %609 = vmatpush1.msra.mxu0 0.0
        %610 = vmatprep.subr.mxu0 0.0
        %611 = vmatpush1.msra.mxu0 0.0
        %612 = vmatprep.subr.mxu0 0.0
        %613 = vmatpush1.msra.mxu0 0.0
        %614 = vmatprep.subr.mxu0 0.0
        %615 = vmatpush1.msra.mxu0 0.0
        %616 = vmatprep.subr.mxu0 0.0
        %617 = vmatpush1.msra.mxu0 0.0
        %618 = vmatprep.subr.mxu0 0.0
        %619 = vmatpush1.msra.mxu0 0.0
        %620 = vmatprep.subr.mxu0 0.0
        %621 = vmatpush1.msra.mxu0 0.0
        %622 = vmatprep.subr.mxu0 0.0
        %623 = vmatpush1.msra.mxu0 0.0
        %624 = vmatprep.subr.mxu0 0.0
        %625 = vmatpush1.msra.mxu0 0.0
        %626 = vmatprep.subr.mxu0 0.0
        %627 = vmatpush1.msra.mxu0 0.0
        %628 = vmatprep.subr.mxu0 0.0
        %629 = vmatpush1.msra.mxu0 0.0
        %630 = vmatprep.subr.mxu0 0.0
        %631 = vmatpush1.msra.mxu0 0.0
        %632 = vmatprep.mubr.f32.mxu0 0.0
        %633 = vmatmul.mubr.f32.gmra.mrb[0].mxu0 %v563
        %v634 = vpop.f32.mrb[0].mxu0
        %v635 = vadd.f32 %v559, %v634
        %v636 = vpop.f32.mrb[0].mxu0
        %637 = vmatprep.mubr.f32.mxu0 0.0
        %638 = vmatmul.mubr.f32.gmra.mrb[0].mxu0 %v566
        %v639 = vpop.f32.mrb[0].mxu0
        %v640 = vadd.f32 %v559, %v639
        %v641 = vpop.f32.mrb[0].mxu0
        %642 = vdwg.mxu0
        %v643 = vtanh.pop %v635
        %v644 = vtanh.pop %v640
        %v645 = vld [vmem:[%s6] sm:$0x1]
        %v647 = vlaneseq
        %v648 = vshrl.u32 %v647, 7
        %v649 = vsub.s32 0, %v648
        %v650 = vrot.slane %v645, %v649
        %v652 = vmul.f32 %v643, %v650
        %v653 = vmul.f32 %v644, %v650
        %v654 = vsel %vm546, 1, 0
        %v655 = vsel %vm547, 1, 0
        %vm656 = vcmp.eq.s32.totalorder %v654, 1
        %vm657 = vcmp.eq.s32.totalorder %v655, 1
        %v658 = vsel %vm656, %v652, 0.0
        %v659 = vsel %vm657, %v653, 0.0
        %v660 = vld [vmem:[%s437] sm:$0xff]
        %v661 = vld [vmem:[%s437 + $0x8] sm:$0xff]
        %v662 = vld [vmem:[%s437 + $0x10] sm:$0xff]
        %v663 = vld [vmem:[%s437 + $0x18] sm:$0xff]
        %v664 = vld [vmem:[%s437 + $0x20] sm:$0xff]
        %v665 = vld [vmem:[%s437 + $0x28] sm:$0xff]
        %v666 = vld [vmem:[%s437 + $0x30] sm:$0xff]
        %v667 = vld [vmem:[%s437 + $0x38] sm:$0xff]
        %v668 = vld [vmem:[%s437 + $0x40] sm:$0xff]
        %v669 = vld [vmem:[%s437 + $0x48] sm:$0xff]
        %v670 = vld [vmem:[%s437 + $0x50] sm:$0xff]
        %v671 = vld [vmem:[%s437 + $0x58] sm:$0xff]
        %v672 = vld [vmem:[%s437 + $0x60] sm:$0xff]
        %v673 = vld [vmem:[%s437 + $0x68] sm:$0xff]
        %v674 = vld [vmem:[%s437 + $0x70] sm:$0xff]
        %v675 = vld [vmem:[%s437 + $0x78] sm:$0xff]
        %v676 = vld [vmem:[%s437 + $0x80] sm:$0xff]
        %v677 = vld [vmem:[%s437 + $0x88] sm:$0xff]
        %v678 = vld [vmem:[%s437 + $0x90] sm:$0xff]
        %v679 = vld [vmem:[%s437 + $0x98] sm:$0xff]
        %v680 = vld [vmem:[%s437 + $0xa0] sm:$0xff]
        %v681 = vld [vmem:[%s437 + $0xa8] sm:$0xff]
        %v682 = vld [vmem:[%s437 + $0xb0] sm:$0xff]
        %v683 = vld [vmem:[%s437 + $0xb8] sm:$0xff]
        %v684 = vld [vmem:[%s2] sm:$0xff]
        %v685 = vld [vmem:[%s2 + $0x8] sm:$0xff]
        %v686 = vld [vmem:[%s2 + $0x10] sm:$0xff]
        %v687 = vld [vmem:[%s2 + $0x18] sm:$0xff]
        %v688 = vld [vmem:[%s3] sm:$0x1]
        %v690 = vlaneseq
        %v691 = vshrl.u32 %v690, 7
        %v692 = vsub.s32 0, %v691
        %v693 = vrot.slane %v688, %v692
        %v696 = vsel %vm561, %v660, 0
        %v699 = vsel %vm561, %v661, 0
        %v702 = vsel %vm561, %v662, 0
        %v705 = vsel %vm561, %v663, 0
        %v708 = vsel %vm561, %v664, 0
        %v711 = vsel %vm561, %v665, 0
        %v714 = vsel %vm561, %v666, 0
        %v717 = vsel %vm561, %v667, 0
        %v720 = vsel %vm561, %v668, 0
        %v723 = vsel %vm561, %v669, 0
        %v726 = vsel %vm561, %v670, 0
        %v729 = vsel %vm561, %v671, 0
        %v732 = vsel %vm561, %v672, 0
        %v735 = vsel %vm561, %v673, 0
        %v738 = vsel %vm561, %v674, 0
        %v741 = vsel %vm561, %v675, 0
        %v744 = vsel %vm561, %v676, 0
        %v747 = vsel %vm561, %v677, 0
        %v750 = vsel %vm561, %v678, 0
        %v753 = vsel %vm561, %v679, 0
        %v756 = vsel %vm561, %v680, 0
        %v759 = vsel %vm561, %v681, 0
        %v762 = vsel %vm561, %v682, 0
        %v765 = vsel %vm561, %v683, 0
        %767 = vmatprep.subr.mxu0 0.0
        %768 = vmatpush1.msra.mxu0 %v684
        %769 = vmatprep.subr.mxu0 0.0
        %770 = vmatpush1.msra.mxu0 %v685
        %771 = vmatprep.subr.mxu0 0.0
        %772 = vmatpush1.msra.mxu0 %v686
        %773 = vmatprep.subr.mxu0 0.0
        %774 = vmatpush1.msra.mxu0 %v687
        %775 = vmatprep.subr.mxu0 0.0
        %776 = vmatpush1.msra.mxu0 0.0
        %777 = vmatprep.subr.mxu0 0.0
        %778 = vmatpush1.msra.mxu0 0.0
        %779 = vmatprep.subr.mxu0 0.0
        %780 = vmatpush1.msra.mxu0 0.0
        %781 = vmatprep.subr.mxu0 0.0
        %782 = vmatpush1.msra.mxu0 0.0
        %783 = vmatprep.subr.mxu0 0.0
        %784 = vmatpush1.msra.mxu0 0.0
        %785 = vmatprep.subr.mxu0 0.0
        %786 = vmatpush1.msra.mxu0 0.0
        %787 = vmatprep.subr.mxu0 0.0
        %788 = vmatpush1.msra.mxu0 0.0
        %789 = vmatprep.subr.mxu0 0.0
        %790 = vmatpush1.msra.mxu0 0.0
        %791 = vmatprep.subr.mxu0 0.0
        %792 = vmatpush1.msra.mxu0 0.0
        %793 = vmatprep.subr.mxu0 0.0
        %794 = vmatpush1.msra.mxu0 0.0
        %795 = vmatprep.subr.mxu0 0.0
        %796 = vmatpush1.msra.mxu0 0.0
        %797 = vmatprep.subr.mxu0 0.0
        %798 = vmatpush1.msra.mxu0 0.0
        %799 = vmatprep.subr.mxu0 0.0
        %800 = vmatpush1.msra.mxu0 0.0
        %801 = vmatprep.subr.mxu0 0.0
        %802 = vmatpush1.msra.mxu0 0.0
        %803 = vmatprep.subr.mxu0 0.0
        %804 = vmatpush1.msra.mxu0 0.0
        %805 = vmatprep.subr.mxu0 0.0
        %806 = vmatpush1.msra.mxu0 0.0
        %807 = vmatprep.subr.mxu0 0.0
        %808 = vmatpush1.msra.mxu0 0.0
        %809 = vmatprep.subr.mxu0 0.0
        %810 = vmatpush1.msra.mxu0 0.0
        %811 = vmatprep.subr.mxu0 0.0
        %812 = vmatpush1.msra.mxu0 0.0
        %813 = vmatprep.subr.mxu0 0.0
        %814 = vmatpush1.msra.mxu0 0.0
        %815 = vmatprep.subr.mxu0 0.0
        %816 = vmatpush1.msra.mxu0 0.0
        %817 = vmatprep.subr.mxu0 0.0
        %818 = vmatpush1.msra.mxu0 0.0
        %819 = vmatprep.subr.mxu0 0.0
        %820 = vmatpush1.msra.mxu0 0.0
        %821 = vmatprep.subr.mxu0 0.0
        %822 = vmatpush1.msra.mxu0 0.0
        %823 = vmatprep.subr.mxu0 0.0
        %824 = vmatpush1.msra.mxu0 0.0
        %825 = vmatprep.subr.mxu0 0.0
        %826 = vmatpush1.msra.mxu0 0.0
        %827 = vmatprep.subr.mxu0 0.0
        %828 = vmatpush1.msra.mxu0 0.0
        %829 = vmatprep.subr.mxu0 0.0
        %830 = vmatpush1.msra.mxu0 0.0
        %831 = vmatprep.mubr.f32.mxu0 0.0
        %832 = vmatmul.mubr.f32.gmra.mrb[0].mxu0 %v696
        %v833 = vpop.f32.mrb[0].mxu0
        %v834 = vadd.f32 %v693, %v833
        %v835 = vpop.f32.mrb[0].mxu0
        %836 = vmatprep.mubr.f32.mxu0 0.0
        %837 = vmatmul.mubr.f32.gmra.mrb[0].mxu0 %v699
        %v838 = vpop.f32.mrb[0].mxu0
        %v839 = vadd.f32 %v693, %v838
        %v840 = vpop.f32.mrb[0].mxu0
        %841 = vmatprep.mubr.f32.mxu0 0.0
        %842 = vmatmul.mubr.f32.gmra.mrb[0].mxu0 %v702
        %v843 = vpop.f32.mrb[0].mxu0
        %v844 = vadd.f32 %v693, %v843
        %v845 = vpop.f32.mrb[0].mxu0
        %846 = vmatprep.mubr.f32.mxu0 0.0
        %847 = vmatmul.mubr.f32.gmra.mrb[0].mxu0 %v705
        %v848 = vpop.f32.mrb[0].mxu0
        %v849 = vadd.f32 %v693, %v848
        %v850 = vpop.f32.mrb[0].mxu0
        %851 = vmatprep.mubr.f32.mxu0 0.0
        %852 = vmatmul.mubr.f32.gmra.mrb[0].mxu0 %v708
        %v853 = vpop.f32.mrb[0].mxu0
        %v854 = vadd.f32 %v693, %v853
        %v855 = vpop.f32.mrb[0].mxu0
        %856 = vmatprep.mubr.f32.mxu0 0.0
        %857 = vmatmul.mubr.f32.gmra.mrb[0].mxu0 %v711
        %v858 = vpop.f32.mrb[0].mxu0
        %v859 = vadd.f32 %v693, %v858
        %v860 = vpop.f32.mrb[0].mxu0
        %861 = vmatprep.mubr.f32.mxu0 0.0
        %862 = vmatmul.mubr.f32.gmra.mrb[0].mxu0 %v714
        %v863 = vpop.f32.mrb[0].mxu0
        %v864 = vadd.f32 %v693, %v863
        %v865 = vpop.f32.mrb[0].mxu0
        %866 = vmatprep.mubr.f32.mxu0 0.0
        %867 = vmatmul.mubr.f32.gmra.mrb[0].mxu0 %v717
        %v868 = vpop.f32.mrb[0].mxu0
        %v869 = vadd.f32 %v693, %v868
        %v870 = vpop.f32.mrb[0].mxu0
        %871 = vmatprep.mubr.f32.mxu0 0.0
        %872 = vmatmul.mubr.f32.gmra.mrb[0].mxu0 %v720
        %v873 = vpop.f32.mrb[0].mxu0
        %v874 = vadd.f32 %v693, %v873
        %v875 = vpop.f32.mrb[0].mxu0
        %876 = vmatprep.mubr.f32.mxu0 0.0
        %877 = vmatmul.mubr.f32.gmra.mrb[0].mxu0 %v723
        %v878 = vpop.f32.mrb[0].mxu0
        %v879 = vadd.f32 %v693, %v878
        %v880 = vpop.f32.mrb[0].mxu0
        %881 = vmatprep.mubr.f32.mxu0 0.0
        %882 = vmatmul.mubr.f32.gmra.mrb[0].mxu0 %v726
        %v883 = vpop.f32.mrb[0].mxu0
        %v884 = vadd.f32 %v693, %v883
        %v885 = vpop.f32.mrb[0].mxu0
        %886 = vmatprep.mubr.f32.mxu0 0.0
        %887 = vmatmul.mubr.f32.gmra.mrb[0].mxu0 %v729
        %v888 = vpop.f32.mrb[0].mxu0
        %v889 = vadd.f32 %v693, %v888
        %v890 = vpop.f32.mrb[0].mxu0
        %891 = vmatprep.mubr.f32.mxu0 0.0
        %892 = vmatmul.mubr.f32.gmra.mrb[0].mxu0 %v732
        %v893 = vpop.f32.mrb[0].mxu0
        %v894 = vadd.f32 %v693, %v893
        %v895 = vpop.f32.mrb[0].mxu0
        %896 = vmatprep.mubr.f32.mxu0 0.0
        %897 = vmatmul.mubr.f32.gmra.mrb[0].mxu0 %v735
        %v898 = vpop.f32.mrb[0].mxu0
        %v899 = vadd.f32 %v693, %v898
        %v900 = vpop.f32.mrb[0].mxu0
        %901 = vmatprep.mubr.f32.mxu0 0.0
        %902 = vmatmul.mubr.f32.gmra.mrb[0].mxu0 %v738
        %v903 = vpop.f32.mrb[0].mxu0
        %v904 = vadd.f32 %v693, %v903
        %v905 = vpop.f32.mrb[0].mxu0
        %906 = vmatprep.mubr.f32.mxu0 0.0
        %907 = vmatmul.mubr.f32.gmra.mrb[0].mxu0 %v741
        %v908 = vpop.f32.mrb[0].mxu0
        %v909 = vadd.f32 %v693, %v908
        %v910 = vpop.f32.mrb[0].mxu0
        %911 = vmatprep.mubr.f32.mxu0 0.0
        %912 = vmatmul.mubr.f32.gmra.mrb[0].mxu0 %v744
        %v913 = vpop.f32.mrb[0].mxu0
        %v914 = vadd.f32 %v693, %v913
        %v915 = vpop.f32.mrb[0].mxu0
        %916 = vmatprep.mubr.f32.mxu0 0.0
        %917 = vmatmul.mubr.f32.gmra.mrb[0].mxu0 %v747
        %v918 = vpop.f32.mrb[0].mxu0
        %v919 = vadd.f32 %v693, %v918
        %v920 = vpop.f32.mrb[0].mxu0
        %921 = vmatprep.mubr.f32.mxu0 0.0
        %922 = vmatmul.mubr.f32.gmra.mrb[0].mxu0 %v750
        %v923 = vpop.f32.mrb[0].mxu0
        %v924 = vadd.f32 %v693, %v923
        %v925 = vpop.f32.mrb[0].mxu0
        %926 = vmatprep.mubr.f32.mxu0 0.0
        %927 = vmatmul.mubr.f32.gmra.mrb[0].mxu0 %v753
        %v928 = vpop.f32.mrb[0].mxu0
        %v929 = vadd.f32 %v693, %v928
        %v930 = vpop.f32.mrb[0].mxu0
        %931 = vmatprep.mubr.f32.mxu0 0.0
        %932 = vmatmul.mubr.f32.gmra.mrb[0].mxu0 %v756
        %v933 = vpop.f32.mrb[0].mxu0
        %v934 = vadd.f32 %v693, %v933
        %v935 = vpop.f32.mrb[0].mxu0
        %936 = vmatprep.mubr.f32.mxu0 0.0
        %937 = vmatmul.mubr.f32.gmra.mrb[0].mxu0 %v759
        %v938 = vpop.f32.mrb[0].mxu0
        %v939 = vadd.f32 %v693, %v938
        %v940 = vpop.f32.mrb[0].mxu0
        %941 = vmatprep.mubr.f32.mxu0 0.0
        %942 = vmatmul.mubr.f32.gmra.mrb[0].mxu0 %v762
        %v943 = vpop.f32.mrb[0].mxu0
        %v944 = vadd.f32 %v693, %v943
        %v945 = vpop.f32.mrb[0].mxu0
        %946 = vmatprep.mubr.f32.mxu0 0.0
        %947 = vmatmul.mubr.f32.gmra.mrb[0].mxu0 %v765
        %v948 = vpop.f32.mrb[0].mxu0
        %v949 = vadd.f32 %v693, %v948
        %v950 = vpop.f32.mrb[0].mxu0
        %951 = vdwg.mxu0
        %v952 = vtanh.pop %v834
        %v953 = vtanh.pop %v839
        %v954 = vtanh.pop %v844
        %v955 = vtanh.pop %v849
        %v956 = vtanh.pop %v854
        %v957 = vtanh.pop %v859
        %v958 = vtanh.pop %v864
        %v959 = vtanh.pop %v869
        %v960 = vtanh.pop %v874
        %v961 = vtanh.pop %v879
        %v962 = vtanh.pop %v884
        %v963 = vtanh.pop %v889
        %v964 = vtanh.pop %v894
        %v965 = vtanh.pop %v899
        %v966 = vtanh.pop %v904
        %v967 = vtanh.pop %v909
        %v968 = vtanh.pop %v914
        %v969 = vtanh.pop %v919
        %v970 = vtanh.pop %v924
        %v971 = vtanh.pop %v929
        %v972 = vtanh.pop %v934
        %v973 = vtanh.pop %v939
        %v974 = vtanh.pop %v944
        %v975 = vtanh.pop %v949
        %v976 = vld [vmem:[%s7] sm:$0xff]
        %v977 = vld [vmem:[%s7 + $0x8] sm:$0xff]
        %v978 = vld [vmem:[%s7 + $0x10] sm:$0xff]
        %v979 = vld [vmem:[%s7 + $0x18] sm:$0xff]
        %v980 = vld [vmem:[%s7 + $0x20] sm:$0xff]
        %v981 = vld [vmem:[%s7 + $0x28] sm:$0xff]
        %v982 = vld [vmem:[%s7 + $0x30] sm:$0xff]
        %v983 = vld [vmem:[%s7 + $0x38] sm:$0xff]
        %v984 = vld [vmem:[%s7 + $0x40] sm:$0xff]
        %v985 = vld [vmem:[%s7 + $0x48] sm:$0xff]
        %v986 = vld [vmem:[%s7 + $0x50] sm:$0xff]
        %v987 = vld [vmem:[%s7 + $0x58] sm:$0xff]
        %v988 = vld [vmem:[%s7 + $0x60] sm:$0xff]
        %v989 = vld [vmem:[%s7 + $0x68] sm:$0xff]
        %v990 = vld [vmem:[%s7 + $0x70] sm:$0xff]
        %v991 = vld [vmem:[%s7 + $0x78] sm:$0xff]
        %v992 = vld [vmem:[%s7 + $0x80] sm:$0xff]
        %v993 = vld [vmem:[%s7 + $0x88] sm:$0xff]
        %v994 = vld [vmem:[%s7 + $0x90] sm:$0xff]
        %v995 = vld [vmem:[%s7 + $0x98] sm:$0xff]
        %v996 = vld [vmem:[%s7 + $0xa0] sm:$0xff]
        %v997 = vld [vmem:[%s7 + $0xa8] sm:$0xff]
        %v998 = vld [vmem:[%s7 + $0xb0] sm:$0xff]
        %v999 = vld [vmem:[%s7 + $0xb8] sm:$0xff]
        %vm1000 = vcmask 130048
        %v1002 = vsel %vm1000, %v976, 0
        %v1005 = vsel %vm1000, %v977, 0
        %v1008 = vsel %vm1000, %v978, 0
        %v1011 = vsel %vm1000, %v979, 0
        %v1014 = vsel %vm1000, %v980, 0
        %v1017 = vsel %vm1000, %v981, 0
        %v1020 = vsel %vm1000, %v982, 0
        %v1023 = vsel %vm1000, %v983, 0
        %v1026 = vsel %vm1000, %v984, 0
        %v1029 = vsel %vm1000, %v985, 0
        %v1032 = vsel %vm1000, %v986, 0
        %v1035 = vsel %vm1000, %v987, 0
        %v1038 = vsel %vm1000, %v988, 0
        %v1041 = vsel %vm1000, %v989, 0
        %v1044 = vsel %vm1000, %v990, 0
        %v1047 = vsel %vm1000, %v991, 0
        %v1050 = vsel %vm1000, %v992, 0
        %v1053 = vsel %vm1000, %v993, 0
        %v1056 = vsel %vm1000, %v994, 0
        %v1059 = vsel %vm1000, %v995, 0
        %v1062 = vsel %vm1000, %v996, 0
        %v1065 = vsel %vm1000, %v997, 0
        %v1068 = vsel %vm1000, %v998, 0
        %v1071 = vsel %vm1000, %v999, 0
        %1073 = vmatprep.subr.mxu0 0.0
        %1074 = vmatpush1.msra.mxu0 %v658
        %1075 = vmatprep.subr.mxu0 0.0
        %1076 = vmatpush1.msra.mxu0 %v659
        %1077 = vmatprep.subr.mxu0 0.0
        %1078 = vmatpush1.msra.mxu0 0.0
        %1079 = vmatprep.subr.mxu0 0.0
        %1080 = vmatpush1.msra.mxu0 0.0
        %1081 = vmatprep.subr.mxu0 0.0
        %1082 = vmatpush1.msra.mxu0 0.0
        %1083 = vmatprep.subr.mxu0 0.0
        %1084 = vmatpush1.msra.mxu0 0.0
        %1085 = vmatprep.subr.mxu0 0.0
        %1086 = vmatpush1.msra.mxu0 0.0
        %1087 = vmatprep.subr.mxu0 0.0
        %1088 = vmatpush1.msra.mxu0 0.0
        %1089 = vmatprep.subr.mxu0 0.0
        %1090 = vmatpush1.msra.mxu0 0.0
        %1091 = vmatprep.subr.mxu0 0.0
        %1092 = vmatpush1.msra.mxu0 0.0
        %1093 = vmatprep.subr.mxu0 0.0
        %1094 = vmatpush1.msra.mxu0 0.0
        %1095 = vmatprep.subr.mxu0 0.0
        %1096 = vmatpush1.msra.mxu0 0.0
        %1097 = vmatprep.subr.mxu0 0.0
        %1098 = vmatpush1.msra.mxu0 0.0
        %1099 = vmatprep.subr.mxu0 0.0
        %1100 = vmatpush1.msra.mxu0 0.0
        %1101 = vmatprep.subr.mxu0 0.0
        %1102 = vmatpush1.msra.mxu0 0.0
        %1103 = vmatprep.subr.mxu0 0.0
        %1104 = vmatpush1.msra.mxu0 0.0
        %1105 = vmatprep.subr.mxu0 0.0
        %1106 = vmatpush1.msra.mxu0 0.0
        %1107 = vmatprep.subr.mxu0 0.0
        %1108 = vmatpush1.msra.mxu0 0.0
        %1109 = vmatprep.subr.mxu0 0.0
        %1110 = vmatpush1.msra.mxu0 0.0
        %1111 = vmatprep.subr.mxu0 0.0
        %1112 = vmatpush1.msra.mxu0 0.0
        %1113 = vmatprep.subr.mxu0 0.0
        %1114 = vmatpush1.msra.mxu0 0.0
        %1115 = vmatprep.subr.mxu0 0.0
        %1116 = vmatpush1.msra.mxu0 0.0
        %1117 = vmatprep.subr.mxu0 0.0
        %1118 = vmatpush1.msra.mxu0 0.0
        %1119 = vmatprep.subr.mxu0 0.0
        %1120 = vmatpush1.msra.mxu0 0.0
        %1121 = vmatprep.subr.mxu0 0.0
        %1122 = vmatpush1.msra.mxu0 0.0
        %1123 = vmatprep.subr.mxu0 0.0
        %1124 = vmatpush1.msra.mxu0 0.0
        %1125 = vmatprep.subr.mxu0 0.0
        %1126 = vmatpush1.msra.mxu0 0.0
        %1127 = vmatprep.subr.mxu0 0.0
        %1128 = vmatpush1.msra.mxu0 0.0
        %1129 = vmatprep.subr.mxu0 0.0
        %1130 = vmatpush1.msra.mxu0 0.0
        %1131 = vmatprep.subr.mxu0 0.0
        %1132 = vmatpush1.msra.mxu0 0.0
        %1133 = vmatprep.subr.mxu0 0.0
        %1134 = vmatpush1.msra.mxu0 0.0
        %1135 = vmatprep.subr.mxu0 0.0
        %1136 = vmatpush1.msra.mxu0 0.0
        %1137 = vmatprep.mubr.f32.mxu0 0.0
        %1138 = vmatmul.mubr.f32.gmra.mrb[0].mxu0 %v1002
        %v1139 = vpop.f32.mrb[0].mxu0
        %v1140 = vadd.f32 0.0, %v1139
        %v1141 = vpop.f32.mrb[0].mxu0
        %1142 = vmatprep.mubr.f32.mxu0 0.0
        %1143 = vmatmul.mubr.f32.gmra.mrb[0].mxu0 %v1005
        %v1144 = vpop.f32.mrb[0].mxu0
        %v1145 = vadd.f32 0.0, %v1144
        %v1146 = vpop.f32.mrb[0].mxu0
        %1147 = vmatprep.mubr.f32.mxu0 0.0
        %1148 = vmatmul.mubr.f32.gmra.mrb[0].mxu0 %v1008
        %v1149 = vpop.f32.mrb[0].mxu0
        %v1150 = vadd.f32 0.0, %v1149
        %v1151 = vpop.f32.mrb[0].mxu0
        %1152 = vmatprep.mubr.f32.mxu0 0.0
        %1153 = vmatmul.mubr.f32.gmra.mrb[0].mxu0 %v1011
        %v1154 = vpop.f32.mrb[0].mxu0
        %v1155 = vadd.f32 0.0, %v1154
        %v1156 = vpop.f32.mrb[0].mxu0
        %1157 = vmatprep.mubr.f32.mxu0 0.0
        %1158 = vmatmul.mubr.f32.gmra.mrb[0].mxu0 %v1014
        %v1159 = vpop.f32.mrb[0].mxu0
        %v1160 = vadd.f32 0.0, %v1159
        %v1161 = vpop.f32.mrb[0].mxu0
        %1162 = vmatprep.mubr.f32.mxu0 0.0
        %1163 = vmatmul.mubr.f32.gmra.mrb[0].mxu0 %v1017
        %v1164 = vpop.f32.mrb[0].mxu0
        %v1165 = vadd.f32 0.0, %v1164
        %v1166 = vpop.f32.mrb[0].mxu0
        %1167 = vmatprep.mubr.f32.mxu0 0.0
        %1168 = vmatmul.mubr.f32.gmra.mrb[0].mxu0 %v1020
        %v1169 = vpop.f32.mrb[0].mxu0
        %v1170 = vadd.f32 0.0, %v1169
        %v1171 = vpop.f32.mrb[0].mxu0
        %1172 = vmatprep.mubr.f32.mxu0 0.0
        %1173 = vmatmul.mubr.f32.gmra.mrb[0].mxu0 %v1023
        %v1174 = vpop.f32.mrb[0].mxu0
        %v1175 = vadd.f32 0.0, %v1174
        %v1176 = vpop.f32.mrb[0].mxu0
        %1177 = vmatprep.mubr.f32.mxu0 0.0
        %1178 = vmatmul.mubr.f32.gmra.mrb[0].mxu0 %v1026
        %v1179 = vpop.f32.mrb[0].mxu0
        %v1180 = vadd.f32 0.0, %v1179
        %v1181 = vpop.f32.mrb[0].mxu0
        %1182 = vmatprep.mubr.f32.mxu0 0.0
        %1183 = vmatmul.mubr.f32.gmra.mrb[0].mxu0 %v1029
        %v1184 = vpop.f32.mrb[0].mxu0
        %v1185 = vadd.f32 0.0, %v1184
        %v1186 = vpop.f32.mrb[0].mxu0
        %1187 = vmatprep.mubr.f32.mxu0 0.0
        %1188 = vmatmul.mubr.f32.gmra.mrb[0].mxu0 %v1032
        %v1189 = vpop.f32.mrb[0].mxu0
        %v1190 = vadd.f32 0.0, %v1189
        %v1191 = vpop.f32.mrb[0].mxu0
        %1192 = vmatprep.mubr.f32.mxu0 0.0
        %1193 = vmatmul.mubr.f32.gmra.mrb[0].mxu0 %v1035
        %v1194 = vpop.f32.mrb[0].mxu0
        %v1195 = vadd.f32 0.0, %v1194
        %v1196 = vpop.f32.mrb[0].mxu0
        %1197 = vmatprep.mubr.f32.mxu0 0.0
        %1198 = vmatmul.mubr.f32.gmra.mrb[0].mxu0 %v1038
        %v1199 = vpop.f32.mrb[0].mxu0
        %v1200 = vadd.f32 0.0, %v1199
        %v1201 = vpop.f32.mrb[0].mxu0
        %1202 = vmatprep.mubr.f32.mxu0 0.0
        %1203 = vmatmul.mubr.f32.gmra.mrb[0].mxu0 %v1041
        %v1204 = vpop.f32.mrb[0].mxu0
        %v1205 = vadd.f32 0.0, %v1204
        %v1206 = vpop.f32.mrb[0].mxu0
        %1207 = vmatprep.mubr.f32.mxu0 0.0
        %1208 = vmatmul.mubr.f32.gmra.mrb[0].mxu0 %v1044
        %v1209 = vpop.f32.mrb[0].mxu0
        %v1210 = vadd.f32 0.0, %v1209
        %v1211 = vpop.f32.mrb[0].mxu0
        %1212 = vmatprep.mubr.f32.mxu0 0.0
        %1213 = vmatmul.mubr.f32.gmra.mrb[0].mxu0 %v1047
        %v1214 = vpop.f32.mrb[0].mxu0
        %v1215 = vadd.f32 0.0, %v1214
        %v1216 = vpop.f32.mrb[0].mxu0
        %1217 = vmatprep.mubr.f32.mxu0 0.0
        %1218 = vmatmul.mubr.f32.gmra.mrb[0].mxu0 %v1050
        %v1219 = vpop.f32.mrb[0].mxu0
        %v1220 = vadd.f32 0.0, %v1219
        %v1221 = vpop.f32.mrb[0].mxu0
        %1222 = vmatprep.mubr.f32.mxu0 0.0
        %1223 = vmatmul.mubr.f32.gmra.mrb[0].mxu0 %v1053
        %v1224 = vpop.f32.mrb[0].mxu0
        %v1225 = vadd.f32 0.0, %v1224
        %v1226 = vpop.f32.mrb[0].mxu0
        %1227 = vmatprep.mubr.f32.mxu0 0.0
        %1228 = vmatmul.mubr.f32.gmra.mrb[0].mxu0 %v1056
        %v1229 = vpop.f32.mrb[0].mxu0
        %v1230 = vadd.f32 0.0, %v1229
        %v1231 = vpop.f32.mrb[0].mxu0
        %1232 = vmatprep.mubr.f32.mxu0 0.0
        %1233 = vmatmul.mubr.f32.gmra.mrb[0].mxu0 %v1059
        %v1234 = vpop.f32.mrb[0].mxu0
        %v1235 = vadd.f32 0.0, %v1234
        %v1236 = vpop.f32.mrb[0].mxu0
        %1237 = vmatprep.mubr.f32.mxu0 0.0
        %1238 = vmatmul.mubr.f32.gmra.mrb[0].mxu0 %v1062
        %v1239 = vpop.f32.mrb[0].mxu0
        %v1240 = vadd.f32 0.0, %v1239
        %v1241 = vpop.f32.mrb[0].mxu0
        %1242 = vmatprep.mubr.f32.mxu0 0.0
        %1243 = vmatmul.mubr.f32.gmra.mrb[0].mxu0 %v1065
        %v1244 = vpop.f32.mrb[0].mxu0
        %v1245 = vadd.f32 0.0, %v1244
        %v1246 = vpop.f32.mrb[0].mxu0
        %1247 = vmatprep.mubr.f32.mxu0 0.0
        %1248 = vmatmul.mubr.f32.gmra.mrb[0].mxu0 %v1068
        %v1249 = vpop.f32.mrb[0].mxu0
        %v1250 = vadd.f32 0.0, %v1249
        %v1251 = vpop.f32.mrb[0].mxu0
        %1252 = vmatprep.mubr.f32.mxu0 0.0
        %1253 = vmatmul.mubr.f32.gmra.mrb[0].mxu0 %v1071
        %v1254 = vpop.f32.mrb[0].mxu0
        %v1255 = vadd.f32 0.0, %v1254
        %v1256 = vpop.f32.mrb[0].mxu0
        %1257 = vdwg.mxu0
        %v1258 = vmul.f32 %v952, %v1140
        %v1259 = vmul.f32 %v953, %v1145
        %v1260 = vmul.f32 %v954, %v1150
        %v1261 = vmul.f32 %v955, %v1155
        %v1262 = vmul.f32 %v956, %v1160
        %v1263 = vmul.f32 %v957, %v1165
        %v1264 = vmul.f32 %v958, %v1170
        %v1265 = vmul.f32 %v959, %v1175
        %v1266 = vmul.f32 %v960, %v1180
        %v1267 = vmul.f32 %v961, %v1185
        %v1268 = vmul.f32 %v962, %v1190
        %v1269 = vmul.f32 %v963, %v1195
        %v1270 = vmul.f32 %v964, %v1200
        %v1271 = vmul.f32 %v965, %v1205
        %v1272 = vmul.f32 %v966, %v1210
        %v1273 = vmul.f32 %v967, %v1215
        %v1274 = vmul.f32 %v968, %v1220
        %v1275 = vmul.f32 %v969, %v1225
        %v1276 = vmul.f32 %v970, %v1230
        %v1277 = vmul.f32 %v971, %v1235
        %v1278 = vmul.f32 %v972, %v1240
        %v1279 = vmul.f32 %v973, %v1245
        %v1280 = vmul.f32 %v974, %v1250
        %v1281 = vmul.f32 %v975, %v1255
        %1282 = vadd.xlane.f32.xlu0 %v1258
        %v1283 = vpop.xlane.xlu0 %1282
        %1284 = vadd.xlane.f32.xlu0 %v1259
        %v1285 = vpop.xlane.xlu0 %1284
        %1286 = vadd.xlane.f32.xlu0 %v1260
        %v1287 = vpop.xlane.xlu0 %1286
        %1288 = vadd.xlane.f32.xlu0 %v1261
        %v1289 = vpop.xlane.xlu0 %1288
        %1290 = vadd.xlane.f32.xlu0 %v1262
        %v1291 = vpop.xlane.xlu0 %1290
        %1292 = vadd.xlane.f32.xlu0 %v1263
        %v1293 = vpop.xlane.xlu0 %1292
        %1294 = vadd.xlane.f32.xlu0 %v1264
        %v1295 = vpop.xlane.xlu0 %1294
        %1296 = vadd.xlane.f32.xlu0 %v1265
        %v1297 = vpop.xlane.xlu0 %1296
        %1298 = vadd.xlane.f32.xlu0 %v1266
        %v1299 = vpop.xlane.xlu0 %1298
        %1300 = vadd.xlane.f32.xlu0 %v1267
        %v1301 = vpop.xlane.xlu0 %1300
        %1302 = vadd.xlane.f32.xlu0 %v1268
        %v1303 = vpop.xlane.xlu0 %1302
        %1304 = vadd.xlane.f32.xlu0 %v1269
        %v1305 = vpop.xlane.xlu0 %1304
        %1306 = vadd.xlane.f32.xlu0 %v1270
        %v1307 = vpop.xlane.xlu0 %1306
        %1308 = vadd.xlane.f32.xlu0 %v1271
        %v1309 = vpop.xlane.xlu0 %1308
        %1310 = vadd.xlane.f32.xlu0 %v1272
        %v1311 = vpop.xlane.xlu0 %1310
        %1312 = vadd.xlane.f32.xlu0 %v1273
        %v1313 = vpop.xlane.xlu0 %1312
        %1314 = vadd.xlane.f32.xlu0 %v1274
        %v1315 = vpop.xlane.xlu0 %1314
        %1316 = vadd.xlane.f32.xlu0 %v1275
        %v1317 = vpop.xlane.xlu0 %1316
        %1318 = vadd.xlane.f32.xlu0 %v1276
        %v1319 = vpop.xlane.xlu0 %1318
        %1320 = vadd.xlane.f32.xlu0 %v1277
        %v1321 = vpop.xlane.xlu0 %1320
        %1322 = vadd.xlane.f32.xlu0 %v1278
        %v1323 = vpop.xlane.xlu0 %1322
        %1324 = vadd.xlane.f32.xlu0 %v1279
        %v1325 = vpop.xlane.xlu0 %1324
        %1326 = vadd.xlane.f32.xlu0 %v1280
        %v1327 = vpop.xlane.xlu0 %1326
        %1328 = vadd.xlane.f32.xlu0 %v1281
        %v1329 = vpop.xlane.xlu0 %1328
        %v1330 = vadd.f32 %v1283, 0.0
        %v1331 = vadd.f32 %v1285, 0.0
        %v1332 = vadd.f32 %v1287, 0.0
        %v1333 = vadd.f32 %v1289, 0.0
        %v1334 = vadd.f32 %v1291, 0.0
        %v1335 = vadd.f32 %v1293, 0.0
        %v1336 = vadd.f32 %v1295, 0.0
        %v1337 = vadd.f32 %v1297, 0.0
        %v1338 = vadd.f32 %v1299, 0.0
        %v1339 = vadd.f32 %v1301, 0.0
        %v1340 = vadd.f32 %v1303, 0.0
        %v1341 = vadd.f32 %v1305, 0.0
        %v1342 = vadd.f32 %v1307, 0.0
        %v1343 = vadd.f32 %v1309, 0.0
        %v1344 = vadd.f32 %v1311, 0.0
        %v1345 = vadd.f32 %v1313, 0.0
        %v1346 = vadd.f32 %v1315, 0.0
        %v1347 = vadd.f32 %v1317, 0.0
        %v1348 = vadd.f32 %v1319, 0.0
        %v1349 = vadd.f32 %v1321, 0.0
        %v1350 = vadd.f32 %v1323, 0.0
        %v1351 = vadd.f32 %v1325, 0.0
        %v1352 = vadd.f32 %v1327, 0.0
        %v1353 = vadd.f32 %v1329, 0.0
        %s1354 = sld [smem:[#allocation2]]
        %v1355 = vstv %s1354
        %v1356 = vadd.f32 %v1330, %v1355
        %v1357 = vadd.f32 %v1331, %v1355
        %v1358 = vadd.f32 %v1332, %v1355
        %v1359 = vadd.f32 %v1333, %v1355
        %v1360 = vadd.f32 %v1334, %v1355
        %v1361 = vadd.f32 %v1335, %v1355
        %v1362 = vadd.f32 %v1336, %v1355
        %v1363 = vadd.f32 %v1337, %v1355
        %v1364 = vadd.f32 %v1338, %v1355
        %v1365 = vadd.f32 %v1339, %v1355
        %v1366 = vadd.f32 %v1340, %v1355
        %v1367 = vadd.f32 %v1341, %v1355
        %v1368 = vadd.f32 %v1342, %v1355
        %v1369 = vadd.f32 %v1343, %v1355
        %v1370 = vadd.f32 %v1344, %v1355
        %v1371 = vadd.f32 %v1345, %v1355
        %v1372 = vadd.f32 %v1346, %v1355
        %v1373 = vadd.f32 %v1347, %v1355
        %v1374 = vadd.f32 %v1348, %v1355
        %v1375 = vadd.f32 %v1349, %v1355
        %v1376 = vadd.f32 %v1350, %v1355
        %v1377 = vadd.f32 %v1351, %v1355
        %v1378 = vadd.f32 %v1352, %v1355
        %v1379 = vadd.f32 %v1353, %v1355
        %v1380 = vtanh.pop %v1356
        %v1381 = vtanh.pop %v1357
        %v1382 = vtanh.pop %v1358
        %v1383 = vtanh.pop %v1359
        %v1384 = vtanh.pop %v1360
        %v1385 = vtanh.pop %v1361
        %v1386 = vtanh.pop %v1362
        %v1387 = vtanh.pop %v1363
        %v1388 = vtanh.pop %v1364
        %v1389 = vtanh.pop %v1365
        %v1390 = vtanh.pop %v1366
        %v1391 = vtanh.pop %v1367
        %v1392 = vtanh.pop %v1368
        %v1393 = vtanh.pop %v1369
        %v1394 = vtanh.pop %v1370
        %v1395 = vtanh.pop %v1371
        %v1396 = vtanh.pop %v1372
        %v1397 = vtanh.pop %v1373
        %v1398 = vtanh.pop %v1374
        %v1399 = vtanh.pop %v1375
        %v1400 = vtanh.pop %v1376
        %v1401 = vtanh.pop %v1377
        %v1402 = vtanh.pop %v1378
        %v1403 = vtanh.pop %v1379
        %v1404 = vmul.f32 %v1380, 1.442695
        %v1405 = vpow.pop %v1404
        %v1406 = vmul.f32 %v1381, 1.442695
        %v1407 = vpow.pop %v1406
        %v1408 = vmul.f32 %v1382, 1.442695
        %v1409 = vpow.pop %v1408
        %v1410 = vmul.f32 %v1383, 1.442695
        %v1411 = vpow.pop %v1410
        %v1412 = vmul.f32 %v1384, 1.442695
        %v1413 = vpow.pop %v1412
        %v1414 = vmul.f32 %v1385, 1.442695
        %v1415 = vpow.pop %v1414
        %v1416 = vmul.f32 %v1386, 1.442695
        %v1417 = vpow.pop %v1416
        %v1418 = vmul.f32 %v1387, 1.442695
        %v1419 = vpow.pop %v1418
        %v1420 = vmul.f32 %v1388, 1.442695
        %v1421 = vpow.pop %v1420
        %v1422 = vmul.f32 %v1389, 1.442695
        %v1423 = vpow.pop %v1422
        %v1424 = vmul.f32 %v1390, 1.442695
        %v1425 = vpow.pop %v1424
        %v1426 = vmul.f32 %v1391, 1.442695
        %v1427 = vpow.pop %v1426
        %v1428 = vmul.f32 %v1392, 1.442695
        %v1429 = vpow.pop %v1428
        %v1430 = vmul.f32 %v1393, 1.442695
        %v1431 = vpow.pop %v1430
        %v1432 = vmul.f32 %v1394, 1.442695
        %v1433 = vpow.pop %v1432
        %v1434 = vmul.f32 %v1395, 1.442695
        %v1435 = vpow.pop %v1434
        %v1436 = vmul.f32 %v1396, 1.442695
        %v1437 = vpow.pop %v1436
        %v1438 = vmul.f32 %v1397, 1.442695
        %v1439 = vpow.pop %v1438
        %v1440 = vmul.f32 %v1398, 1.442695
        %v1441 = vpow.pop %v1440
        %v1442 = vmul.f32 %v1399, 1.442695
        %v1443 = vpow.pop %v1442
        %v1444 = vmul.f32 %v1400, 1.442695
        %v1445 = vpow.pop %v1444
        %v1446 = vmul.f32 %v1401, 1.442695
        %v1447 = vpow.pop %v1446
        %v1448 = vmul.f32 %v1402, 1.442695
        %v1449 = vpow.pop %v1448
        %v1450 = vmul.f32 %v1403, 1.442695
        %v1451 = vpow.pop %v1450
        %v1452 = vsel %vm518, %v1405, 0.0
        %v1453 = vsel %vm519, %v1407, 0.0
        %v1454 = vsel %vm520, %v1409, 0.0
        %v1455 = vsel %vm521, %v1411, 0.0
        %v1456 = vsel %vm522, %v1413, 0.0
        %v1457 = vsel %vm523, %v1415, 0.0
        %v1458 = vsel %vm524, %v1417, 0.0
        %v1459 = vsel %vm525, %v1419, 0.0
        %v1460 = vsel %vm526, %v1421, 0.0
        %v1461 = vsel %vm527, %v1423, 0.0
        %v1462 = vsel %vm528, %v1425, 0.0
        %v1463 = vsel %vm529, %v1427, 0.0
        %v1464 = vsel %vm530, %v1429, 0.0
        %v1465 = vsel %vm531, %v1431, 0.0
        %v1466 = vsel %vm532, %v1433, 0.0
        %v1467 = vsel %vm533, %v1435, 0.0
        %v1468 = vsel %vm534, %v1437, 0.0
        %v1469 = vsel %vm535, %v1439, 0.0
        %v1470 = vsel %vm536, %v1441, 0.0
        %v1471 = vsel %vm537, %v1443, 0.0
        %v1472 = vsel %vm538, %v1445, 0.0
        %v1473 = vsel %vm539, %v1447, 0.0
        %v1474 = vsel %vm540, %v1449, 0.0
        %v1475 = vsel %vm541, %v1451, 0.0
        %v1476 = vld [vmem:[%s8] sm:$0xff]
        %v1477 = vld [vmem:[%s8 + $0x8] sm:$0xff]
        %v1478 = vld [vmem:[%s8 + $0x10] sm:$0xff]
        %v1479 = vld [vmem:[%s8 + $0x18] sm:$0xff]
        %vm1480 = vcmask 523264
        %v1482 = vsel %vm1480, %v1477, 0
        %v1485 = vsel %vm1480, %v1479, 0
        %1487 = vmatprep.subr.mxu0 0.0
        %1488 = vmatpush1.msra.mxu0 %v1452
        %1489 = vmatprep.subr.mxu0 0.0
        %1490 = vmatpush1.msra.mxu0 %v1453
        %1491 = vmatprep.subr.mxu0 0.0
        %1492 = vmatpush1.msra.mxu0 %v1454
        %1493 = vmatprep.subr.mxu0 0.0
        %1494 = vmatpush1.msra.mxu0 %v1455
        %1495 = vmatprep.subr.mxu0 0.0
        %1496 = vmatpush1.msra.mxu0 %v1456
        %1497 = vmatprep.subr.mxu0 0.0
        %1498 = vmatpush1.msra.mxu0 %v1457
        %1499 = vmatprep.subr.mxu0 0.0
        %1500 = vmatpush1.msra.mxu0 %v1458
        %1501 = vmatprep.subr.mxu0 0.0
        %1502 = vmatpush1.msra.mxu0 %v1459
        %1503 = vmatprep.subr.mxu0 0.0
        %1504 = vmatpush1.msra.mxu0 %v1460
        %1505 = vmatprep.subr.mxu0 0.0
        %1506 = vmatpush1.msra.mxu0 %v1461
        %1507 = vmatprep.subr.mxu0 0.0
        %1508 = vmatpush1.msra.mxu0 %v1462
        %1509 = vmatprep.subr.mxu0 0.0
        %1510 = vmatpush1.msra.mxu0 %v1463
        %1511 = vmatprep.subr.mxu0 0.0
        %1512 = vmatpush1.msra.mxu0 %v1464
        %1513 = vmatprep.subr.mxu0 0.0
        %1514 = vmatpush1.msra.mxu0 %v1465
        %1515 = vmatprep.subr.mxu0 0.0
        %1516 = vmatpush1.msra.mxu0 %v1466
        %1517 = vmatprep.subr.mxu0 0.0
        %1518 = vmatpush1.msra.mxu0 %v1467
        %1519 = vmatprep.subr.mxu0 0.0
        %1520 = vmatpush1.msra.mxu0 %v1468
        %1521 = vmatprep.subr.mxu0 0.0
        %1522 = vmatpush1.msra.mxu0 %v1469
        %1523 = vmatprep.subr.mxu0 0.0
        %1524 = vmatpush1.msra.mxu0 %v1470
        %1525 = vmatprep.subr.mxu0 0.0
        %1526 = vmatpush1.msra.mxu0 %v1471
        %1527 = vmatprep.subr.mxu0 0.0
        %1528 = vmatpush1.msra.mxu0 %v1472
        %1529 = vmatprep.subr.mxu0 0.0
        %1530 = vmatpush1.msra.mxu0 %v1473
        %1531 = vmatprep.subr.mxu0 0.0
        %1532 = vmatpush1.msra.mxu0 %v1474
        %1533 = vmatprep.subr.mxu0 0.0
        %1534 = vmatpush1.msra.mxu0 %v1475
        %1535 = vmatprep.subr.mxu0 0.0
        %1536 = vmatpush1.msra.mxu0 0.0
        %1537 = vmatprep.subr.mxu0 0.0
        %1538 = vmatpush1.msra.mxu0 0.0
        %1539 = vmatprep.subr.mxu0 0.0
        %1540 = vmatpush1.msra.mxu0 0.0
        %1541 = vmatprep.subr.mxu0 0.0
        %1542 = vmatpush1.msra.mxu0 0.0
        %1543 = vmatprep.subr.mxu0 0.0
        %1544 = vmatpush1.msra.mxu0 0.0
        %1545 = vmatprep.subr.mxu0 0.0
        %1546 = vmatpush1.msra.mxu0 0.0
        %1547 = vmatprep.subr.mxu0 0.0
        %1548 = vmatpush1.msra.mxu0 0.0
        %1549 = vmatprep.subr.mxu0 0.0
        %1550 = vmatpush1.msra.mxu0 0.0
        %1551 = vmatprep.mubr.f32.mxu0 %v1482
        %1552 = vmatmul.mubr.f32.gmra.mrb[0].mxu0 %v1476
        %v1553 = vpop.f32.mrb[0].mxu0
        %v1554 = vadd.f32 0.0, %v1553
        %v1555 = vpop.f32.mrb[0].mxu0
        %1556 = vmatprep.mubr.f32.mxu0 %v1485
        %1557 = vmatmul.mubr.f32.gmra.mrb[0].mxu0 %v1478
        %v1558 = vpop.f32.mrb[0].mxu0
        %v1559 = vadd.f32 0.0, %v1558
        %v1560 = vpop.f32.mrb[0].mxu0
        %1561 = vdwg.mxu0
        %1562 = vmatprep.subr.mxu0 0.0
        %1563 = vmatpush1.msra.mxu0 %v1554
        %1564 = vmatprep.subr.mxu0 0.0
        %1565 = vmatpush1.msra.mxu0 %v1559
        %1566 = vmatprep.subr.mxu0 0.0
        %1567 = vmatpush1.msra.mxu0 0.0
        %1568 = vmatprep.subr.mxu0 0.0
        %1569 = vmatpush1.msra.mxu0 0.0
        %1570 = vmatprep.subr.mxu0 0.0
        %1571 = vmatpush1.msra.mxu0 0.0
        %1572 = vmatprep.subr.mxu0 0.0
        %1573 = vmatpush1.msra.mxu0 0.0
        %1574 = vmatprep.subr.mxu0 0.0
        %1575 = vmatpush1.msra.mxu0 0.0
        %1576 = vmatprep.subr.mxu0 0.0
        %1577 = vmatpush1.msra.mxu0 0.0
        %1578 = vmatprep.subr.mxu0 0.0
        %1579 = vmatpush1.msra.mxu0 0.0
        %1580 = vmatprep.subr.mxu0 0.0
        %1581 = vmatpush1.msra.mxu0 0.0
        %1582 = vmatprep.subr.mxu0 0.0
        %1583 = vmatpush1.msra.mxu0 0.0
        %1584 = vmatprep.subr.mxu0 0.0
        %1585 = vmatpush1.msra.mxu0 0.0
        %1586 = vmatprep.subr.mxu0 0.0
        %1587 = vmatpush1.msra.mxu0 0.0
        %1588 = vmatprep.subr.mxu0 0.0
        %1589 = vmatpush1.msra.mxu0 0.0
        %1590 = vmatprep.subr.mxu0 0.0
        %1591 = vmatpush1.msra.mxu0 0.0
        %1592 = vmatprep.subr.mxu0 0.0
        %1593 = vmatpush1.msra.mxu0 0.0
        %1594 = vmatprep.subr.mxu0 0.0
        %1595 = vmatpush1.msra.mxu0 0.0
        %1596 = vmatprep.subr.mxu0 0.0
        %1597 = vmatpush1.msra.mxu0 0.0
        %1598 = vmatprep.subr.mxu0 0.0
        %1599 = vmatpush1.msra.mxu0 0.0
        %1600 = vmatprep.subr.mxu0 0.0
        %1601 = vmatpush1.msra.mxu0 0.0
        %1602 = vmatprep.subr.mxu0 0.0
        %1603 = vmatpush1.msra.mxu0 0.0
        %1604 = vmatprep.subr.mxu0 0.0
        %1605 = vmatpush1.msra.mxu0 0.0
        %1606 = vmatprep.subr.mxu0 0.0
        %1607 = vmatpush1.msra.mxu0 0.0
        %1608 = vmatprep.subr.mxu0 0.0
        %1609 = vmatpush1.msra.mxu0 0.0
        %1610 = vmatprep.subr.mxu0 0.0
        %1611 = vmatpush1.msra.mxu0 0.0
        %1612 = vmatprep.subr.mxu0 0.0
        %1613 = vmatpush1.msra.mxu0 0.0
        %1614 = vmatprep.subr.mxu0 0.0
        %1615 = vmatpush1.msra.mxu0 0.0
        %1616 = vmatprep.subr.mxu0 0.0
        %1617 = vmatpush1.msra.mxu0 0.0
        %1618 = vmatprep.subr.mxu0 0.0
        %1619 = vmatpush1.msra.mxu0 0.0
        %1620 = vmatprep.subr.mxu0 0.0
        %1621 = vmatpush1.msra.mxu0 0.0
        %1622 = vmatprep.subr.mxu0 0.0
        %1623 = vmatpush1.msra.mxu0 0.0
        %1624 = vmatprep.subr.mxu0 0.0
        %1625 = vmatpush1.msra.mxu0 0.0
        %1626 = vmatprep.mubr.f32.mxu0 0.0
        %1627 = vmatmul.mubr.f32.gmra.mrb[0].mxu0 %v1002
        %v1628 = vpop.f32.mrb[0].mxu0
        %v1629 = vadd.f32 0.0, %v1628
        %v1630 = vpop.f32.mrb[0].mxu0
        %1631 = vmatprep.mubr.f32.mxu0 0.0
        %1632 = vmatmul.mubr.f32.gmra.mrb[0].mxu0 %v1005
        %v1633 = vpop.f32.mrb[0].mxu0
        %v1634 = vadd.f32 0.0, %v1633
        %v1635 = vpop.f32.mrb[0].mxu0
        %1636 = vmatprep.mubr.f32.mxu0 0.0
        %1637 = vmatmul.mubr.f32.gmra.mrb[0].mxu0 %v1008
        %v1638 = vpop.f32.mrb[0].mxu0
        %v1639 = vadd.f32 0.0, %v1638
        %v1640 = vpop.f32.mrb[0].mxu0
        %1641 = vmatprep.mubr.f32.mxu0 0.0
        %1642 = vmatmul.mubr.f32.gmra.mrb[0].mxu0 %v1011
        %v1643 = vpop.f32.mrb[0].mxu0
        %v1644 = vadd.f32 0.0, %v1643
        %v1645 = vpop.f32.mrb[0].mxu0
        %1646 = vmatprep.mubr.f32.mxu0 0.0
        %1647 = vmatmul.mubr.f32.gmra.mrb[0].mxu0 %v1014
        %v1648 = vpop.f32.mrb[0].mxu0
        %v1649 = vadd.f32 0.0, %v1648
        %v1650 = vpop.f32.mrb[0].mxu0
        %1651 = vmatprep.mubr.f32.mxu0 0.0
        %1652 = vmatmul.mubr.f32.gmra.mrb[0].mxu0 %v1017
        %v1653 = vpop.f32.mrb[0].mxu0
        %v1654 = vadd.f32 0.0, %v1653
        %v1655 = vpop.f32.mrb[0].mxu0
        %1656 = vmatprep.mubr.f32.mxu0 0.0
        %1657 = vmatmul.mubr.f32.gmra.mrb[0].mxu0 %v1020
        %v1658 = vpop.f32.mrb[0].mxu0
        %v1659 = vadd.f32 0.0, %v1658
        %v1660 = vpop.f32.mrb[0].mxu0
        %1661 = vmatprep.mubr.f32.mxu0 0.0
        %1662 = vmatmul.mubr.f32.gmra.mrb[0].mxu0 %v1023
        %v1663 = vpop.f32.mrb[0].mxu0
        %v1664 = vadd.f32 0.0, %v1663
        %v1665 = vpop.f32.mrb[0].mxu0
        %1666 = vmatprep.mubr.f32.mxu0 0.0
        %1667 = vmatmul.mubr.f32.gmra.mrb[0].mxu0 %v1026
        %v1668 = vpop.f32.mrb[0].mxu0
        %v1669 = vadd.f32 0.0, %v1668
        %v1670 = vpop.f32.mrb[0].mxu0
        %1671 = vmatprep.mubr.f32.mxu0 0.0
        %1672 = vmatmul.mubr.f32.gmra.mrb[0].mxu0 %v1029
        %v1673 = vpop.f32.mrb[0].mxu0
        %v1674 = vadd.f32 0.0, %v1673
        %v1675 = vpop.f32.mrb[0].mxu0
        %1676 = vmatprep.mubr.f32.mxu0 0.0
        %1677 = vmatmul.mubr.f32.gmra.mrb[0].mxu0 %v1032
        %v1678 = vpop.f32.mrb[0].mxu0
        %v1679 = vadd.f32 0.0, %v1678
        %v1680 = vpop.f32.mrb[0].mxu0
        %1681 = vmatprep.mubr.f32.mxu0 0.0
        %1682 = vmatmul.mubr.f32.gmra.mrb[0].mxu0 %v1035
        %v1683 = vpop.f32.mrb[0].mxu0
        %v1684 = vadd.f32 0.0, %v1683
        %v1685 = vpop.f32.mrb[0].mxu0
        %1686 = vmatprep.mubr.f32.mxu0 0.0
        %1687 = vmatmul.mubr.f32.gmra.mrb[0].mxu0 %v1038
        %v1688 = vpop.f32.mrb[0].mxu0
        %v1689 = vadd.f32 0.0, %v1688
        %v1690 = vpop.f32.mrb[0].mxu0
        %1691 = vmatprep.mubr.f32.mxu0 0.0
        %1692 = vmatmul.mubr.f32.gmra.mrb[0].mxu0 %v1041
        %v1693 = vpop.f32.mrb[0].mxu0
        %v1694 = vadd.f32 0.0, %v1693
        %v1695 = vpop.f32.mrb[0].mxu0
        %1696 = vmatprep.mubr.f32.mxu0 0.0
        %1697 = vmatmul.mubr.f32.gmra.mrb[0].mxu0 %v1044
        %v1698 = vpop.f32.mrb[0].mxu0
        %v1699 = vadd.f32 0.0, %v1698
        %v1700 = vpop.f32.mrb[0].mxu0
        %1701 = vmatprep.mubr.f32.mxu0 0.0
        %1702 = vmatmul.mubr.f32.gmra.mrb[0].mxu0 %v1047
        %v1703 = vpop.f32.mrb[0].mxu0
        %v1704 = vadd.f32 0.0, %v1703
        %v1705 = vpop.f32.mrb[0].mxu0
        %1706 = vmatprep.mubr.f32.mxu0 0.0
        %1707 = vmatmul.mubr.f32.gmra.mrb[0].mxu0 %v1050
        %v1708 = vpop.f32.mrb[0].mxu0
        %v1709 = vadd.f32 0.0, %v1708
        %v1710 = vpop.f32.mrb[0].mxu0
        %1711 = vmatprep.mubr.f32.mxu0 0.0
        %1712 = vmatmul.mubr.f32.gmra.mrb[0].mxu0 %v1053
        %v1713 = vpop.f32.mrb[0].mxu0
        %v1714 = vadd.f32 0.0, %v1713
        %v1715 = vpop.f32.mrb[0].mxu0
        %1716 = vmatprep.mubr.f32.mxu0 0.0
        %1717 = vmatmul.mubr.f32.gmra.mrb[0].mxu0 %v1056
        %v1718 = vpop.f32.mrb[0].mxu0
        %v1719 = vadd.f32 0.0, %v1718
        %v1720 = vpop.f32.mrb[0].mxu0
        %1721 = vmatprep.mubr.f32.mxu0 0.0
        %1722 = vmatmul.mubr.f32.gmra.mrb[0].mxu0 %v1059
        %v1723 = vpop.f32.mrb[0].mxu0
        %v1724 = vadd.f32 0.0, %v1723
        %v1725 = vpop.f32.mrb[0].mxu0
        %1726 = vmatprep.mubr.f32.mxu0 0.0
        %1727 = vmatmul.mubr.f32.gmra.mrb[0].mxu0 %v1062
        %v1728 = vpop.f32.mrb[0].mxu0
        %v1729 = vadd.f32 0.0, %v1728
        %v1730 = vpop.f32.mrb[0].mxu0
        %1731 = vmatprep.mubr.f32.mxu0 0.0
        %1732 = vmatmul.mubr.f32.gmra.mrb[0].mxu0 %v1065
        %v1733 = vpop.f32.mrb[0].mxu0
        %v1734 = vadd.f32 0.0, %v1733
        %v1735 = vpop.f32.mrb[0].mxu0
        %1736 = vmatprep.mubr.f32.mxu0 0.0
        %1737 = vmatmul.mubr.f32.gmra.mrb[0].mxu0 %v1068
        %v1738 = vpop.f32.mrb[0].mxu0
        %v1739 = vadd.f32 0.0, %v1738
        %v1740 = vpop.f32.mrb[0].mxu0
        %1741 = vmatprep.mubr.f32.mxu0 0.0
        %1742 = vmatmul.mubr.f32.gmra.mrb[0].mxu0 %v1071
        %v1743 = vpop.f32.mrb[0].mxu0
        %v1744 = vadd.f32 0.0, %v1743
        %v1745 = vpop.f32.mrb[0].mxu0
        %1746 = vdwg.mxu0
        %v1747 = vrcp.pop %v1629
        %v1748 = vrcp.pop %v1634
        %v1749 = vrcp.pop %v1639
        %v1750 = vrcp.pop %v1644
        %v1751 = vrcp.pop %v1649
        %v1752 = vrcp.pop %v1654
        %v1753 = vrcp.pop %v1659
        %v1754 = vrcp.pop %v1664
        %v1755 = vrcp.pop %v1669
        %v1756 = vrcp.pop %v1674
        %v1757 = vrcp.pop %v1679
        %v1758 = vrcp.pop %v1684
        %v1759 = vrcp.pop %v1689
        %v1760 = vrcp.pop %v1694
        %v1761 = vrcp.pop %v1699
        %v1762 = vrcp.pop %v1704
        %v1763 = vrcp.pop %v1709
        %v1764 = vrcp.pop %v1714
        %v1765 = vrcp.pop %v1719
        %v1766 = vrcp.pop %v1724
        %v1767 = vrcp.pop %v1729
        %v1768 = vrcp.pop %v1734
        %v1769 = vrcp.pop %v1739
        %v1770 = vrcp.pop %v1744
        %v1771 = vmul.f32 %v1452, %v1747
        %v1772 = vmul.f32 %v1453, %v1748
        %v1773 = vmul.f32 %v1454, %v1749
        %v1774 = vmul.f32 %v1455, %v1750
        %v1775 = vmul.f32 %v1456, %v1751
        %v1776 = vmul.f32 %v1457, %v1752
        %v1777 = vmul.f32 %v1458, %v1753
        %v1778 = vmul.f32 %v1459, %v1754
        %v1779 = vmul.f32 %v1460, %v1755
        %v1780 = vmul.f32 %v1461, %v1756
        %v1781 = vmul.f32 %v1462, %v1757
        %v1782 = vmul.f32 %v1463, %v1758
        %v1783 = vmul.f32 %v1464, %v1759
        %v1784 = vmul.f32 %v1465, %v1760
        %v1785 = vmul.f32 %v1466, %v1761
        %v1786 = vmul.f32 %v1467, %v1762
        %v1787 = vmul.f32 %v1468, %v1763
        %v1788 = vmul.f32 %v1469, %v1764
        %v1789 = vmul.f32 %v1470, %v1765
        %v1790 = vmul.f32 %v1471, %v1766
        %v1791 = vmul.f32 %v1472, %v1767
        %v1792 = vmul.f32 %v1473, %v1768
        %v1793 = vmul.f32 %v1474, %v1769
        %v1794 = vmul.f32 %v1475, %v1770
        %vm1795 = vcmask 7168
        %1796 = vst.msk [vmem:[%s428] sm:$0xff] %vm1795, %v1771
        %1797 = vst.msk [vmem:[%s428 + $0x8] sm:$0xff] %vm1795, %v1772
        %1798 = vst.msk [vmem:[%s428 + $0x10] sm:$0xff] %vm1795, %v1773
        %1799 = vst.msk [vmem:[%s428 + $0x18] sm:$0xff] %vm1795, %v1774
        %1800 = vst.msk [vmem:[%s428 + $0x20] sm:$0xff] %vm1795, %v1775
        %1801 = vst.msk [vmem:[%s428 + $0x28] sm:$0xff] %vm1795, %v1776
        %1802 = vst.msk [vmem:[%s428 + $0x30] sm:$0xff] %vm1795, %v1777
        %1803 = vst.msk [vmem:[%s428 + $0x38] sm:$0xff] %vm1795, %v1778
        %1804 = vst.msk [vmem:[%s428 + $0x40] sm:$0xff] %vm1795, %v1779
        %1805 = vst.msk [vmem:[%s428 + $0x48] sm:$0xff] %vm1795, %v1780
        %1806 = vst.msk [vmem:[%s428 + $0x50] sm:$0xff] %vm1795, %v1781
        %1807 = vst.msk [vmem:[%s428 + $0x58] sm:$0xff] %vm1795, %v1782
        %1808 = vst.msk [vmem:[%s428 + $0x60] sm:$0xff] %vm1795, %v1783
        %1809 = vst.msk [vmem:[%s428 + $0x68] sm:$0xff] %vm1795, %v1784
        %1810 = vst.msk [vmem:[%s428 + $0x70] sm:$0xff] %vm1795, %v1785
        %1811 = vst.msk [vmem:[%s428 + $0x78] sm:$0xff] %vm1795, %v1786
        %1812 = vst.msk [vmem:[%s428 + $0x80] sm:$0xff] %vm1795, %v1787
        %1813 = vst.msk [vmem:[%s428 + $0x88] sm:$0xff] %vm1795, %v1788
        %1814 = vst.msk [vmem:[%s428 + $0x90] sm:$0xff] %vm1795, %v1789
        %1815 = vst.msk [vmem:[%s428 + $0x98] sm:$0xff] %vm1795, %v1790
        %1816 = vst.msk [vmem:[%s428 + $0xa0] sm:$0xff] %vm1795, %v1791
        %1817 = vst.msk [vmem:[%s428 + $0xa8] sm:$0xff] %vm1795, %v1792
        %1818 = vst.msk [vmem:[%s428 + $0xb0] sm:$0xff] %vm1795, %v1793
        %1819 = vst.msk [vmem:[%s428 + $0xb8] sm:$0xff] %vm1795, %v1794
        %v1820 = vld [vmem:[%s437] sm:$0xff]
        %v1821 = vld [vmem:[%s437 + $0x8] sm:$0xff]
        %v1822 = vld [vmem:[%s437 + $0x10] sm:$0xff]
        %v1823 = vld [vmem:[%s437 + $0x18] sm:$0xff]
        %v1824 = vld [vmem:[%s437 + $0x20] sm:$0xff]
        %v1825 = vld [vmem:[%s437 + $0x28] sm:$0xff]
        %v1826 = vld [vmem:[%s437 + $0x30] sm:$0xff]
        %v1827 = vld [vmem:[%s437 + $0x38] sm:$0xff]
        %v1828 = vld [vmem:[%s437 + $0x40] sm:$0xff]
        %v1829 = vld [vmem:[%s437 + $0x48] sm:$0xff]
        %v1830 = vld [vmem:[%s437 + $0x50] sm:$0xff]
        %v1831 = vld [vmem:[%s437 + $0x58] sm:$0xff]
        %v1832 = vld [vmem:[%s437 + $0x60] sm:$0xff]
        %v1833 = vld [vmem:[%s437 + $0x68] sm:$0xff]
        %v1834 = vld [vmem:[%s437 + $0x70] sm:$0xff]
        %v1835 = vld [vmem:[%s437 + $0x78] sm:$0xff]
        %v1836 = vld [vmem:[%s437 + $0x80] sm:$0xff]
        %v1837 = vld [vmem:[%s437 + $0x88] sm:$0xff]
        %v1838 = vld [vmem:[%s437 + $0x90] sm:$0xff]
        %v1839 = vld [vmem:[%s437 + $0x98] sm:$0xff]
        %v1840 = vld [vmem:[%s437 + $0xa0] sm:$0xff]
        %v1841 = vld [vmem:[%s437 + $0xa8] sm:$0xff]
        %v1842 = vld [vmem:[%s437 + $0xb0] sm:$0xff]
        %v1843 = vld [vmem:[%s437 + $0xb8] sm:$0xff]
        %1845 = vset.pattern.permute.xlu0 0
        %1846 = vperm.xlu0 %1845, %v1771
        %v1847 = vpop.permute.xlu0 %1846
        %1850 = vset.pattern.permute.xlu0 0
        %1851 = vperm.xlu0 %1850, %v1772
        %v1852 = vpop.permute.xlu0 %1851
        %1855 = vset.pattern.permute.xlu0 0
        %1856 = vperm.xlu0 %1855, %v1773
        %v1857 = vpop.permute.xlu0 %1856
        %1860 = vset.pattern.permute.xlu0 0
        %1861 = vperm.xlu0 %1860, %v1774
        %v1862 = vpop.permute.xlu0 %1861
        %1865 = vset.pattern.permute.xlu0 0
        %1866 = vperm.xlu0 %1865, %v1775
        %v1867 = vpop.permute.xlu0 %1866
        %1870 = vset.pattern.permute.xlu0 0
        %1871 = vperm.xlu0 %1870, %v1776
        %v1872 = vpop.permute.xlu0 %1871
        %1875 = vset.pattern.permute.xlu0 0
        %1876 = vperm.xlu0 %1875, %v1777
        %v1877 = vpop.permute.xlu0 %1876
        %1880 = vset.pattern.permute.xlu0 0
        %1881 = vperm.xlu0 %1880, %v1778
        %v1882 = vpop.permute.xlu0 %1881
        %1885 = vset.pattern.permute.xlu0 0
        %1886 = vperm.xlu0 %1885, %v1779
        %v1887 = vpop.permute.xlu0 %1886
        %1890 = vset.pattern.permute.xlu0 0
        %1891 = vperm.xlu0 %1890, %v1780
        %v1892 = vpop.permute.xlu0 %1891
        %1895 = vset.pattern.permute.xlu0 0
        %1896 = vperm.xlu0 %1895, %v1781
        %v1897 = vpop.permute.xlu0 %1896
        %1900 = vset.pattern.permute.xlu0 0
        %1901 = vperm.xlu0 %1900, %v1782
        %v1902 = vpop.permute.xlu0 %1901
        %1905 = vset.pattern.permute.xlu0 0
        %1906 = vperm.xlu0 %1905, %v1783
        %v1907 = vpop.permute.xlu0 %1906
        %1910 = vset.pattern.permute.xlu0 0
        %1911 = vperm.xlu0 %1910, %v1784
        %v1912 = vpop.permute.xlu0 %1911
        %1915 = vset.pattern.permute.xlu0 0
        %1916 = vperm.xlu0 %1915, %v1785
        %v1917 = vpop.permute.xlu0 %1916
        %1920 = vset.pattern.permute.xlu0 0
        %1921 = vperm.xlu0 %1920, %v1786
        %v1922 = vpop.permute.xlu0 %1921
        %1925 = vset.pattern.permute.xlu0 0
        %1926 = vperm.xlu0 %1925, %v1787
        %v1927 = vpop.permute.xlu0 %1926
        %1930 = vset.pattern.permute.xlu0 0
        %1931 = vperm.xlu0 %1930, %v1788
        %v1932 = vpop.permute.xlu0 %1931
        %1935 = vset.pattern.permute.xlu0 0
        %1936 = vperm.xlu0 %1935, %v1789
        %v1937 = vpop.permute.xlu0 %1936
        %1940 = vset.pattern.permute.xlu0 0
        %1941 = vperm.xlu0 %1940, %v1790
        %v1942 = vpop.permute.xlu0 %1941
        %1945 = vset.pattern.permute.xlu0 0
        %1946 = vperm.xlu0 %1945, %v1791
        %v1947 = vpop.permute.xlu0 %1946
        %1950 = vset.pattern.permute.xlu0 0
        %1951 = vperm.xlu0 %1950, %v1792
        %v1952 = vpop.permute.xlu0 %1951
        %1955 = vset.pattern.permute.xlu0 0
        %1956 = vperm.xlu0 %1955, %v1793
        %v1957 = vpop.permute.xlu0 %1956
        %1960 = vset.pattern.permute.xlu0 0
        %1961 = vperm.xlu0 %1960, %v1794
        %v1962 = vpop.permute.xlu0 %1961
        %v1964 = vmul.f32 %v1847, %v1820
        %v1965 = vmul.f32 %v1852, %v1821
        %v1966 = vmul.f32 %v1857, %v1822
        %v1967 = vmul.f32 %v1862, %v1823
        %v1968 = vmul.f32 %v1867, %v1824
        %v1969 = vmul.f32 %v1872, %v1825
        %v1970 = vmul.f32 %v1877, %v1826
        %v1971 = vmul.f32 %v1882, %v1827
        %v1972 = vmul.f32 %v1887, %v1828
        %v1973 = vmul.f32 %v1892, %v1829
        %v1974 = vmul.f32 %v1897, %v1830
        %v1975 = vmul.f32 %v1902, %v1831
        %v1976 = vmul.f32 %v1907, %v1832
        %v1977 = vmul.f32 %v1912, %v1833
        %v1978 = vmul.f32 %v1917, %v1834
        %v1979 = vmul.f32 %v1922, %v1835
        %v1980 = vmul.f32 %v1927, %v1836
        %v1981 = vmul.f32 %v1932, %v1837
        %v1982 = vmul.f32 %v1937, %v1838
        %v1983 = vmul.f32 %v1942, %v1839
        %v1984 = vmul.f32 %v1947, %v1840
        %v1985 = vmul.f32 %v1952, %v1841
        %v1986 = vmul.f32 %v1957, %v1842
        %v1987 = vmul.f32 %v1962, %v1843
        %v1988 = vsel %vm518, 1, 0
        %v1989 = vsel %vm519, 1, 0
        %v1990 = vsel %vm520, 1, 0
        %v1991 = vsel %vm521, 1, 0
        %v1992 = vsel %vm522, 1, 0
        %v1993 = vsel %vm523, 1, 0
        %v1994 = vsel %vm524, 1, 0
        %v1995 = vsel %vm525, 1, 0
        %v1996 = vsel %vm526, 1, 0
        %v1997 = vsel %vm527, 1, 0
        %v1998 = vsel %vm528, 1, 0
        %v1999 = vsel %vm529, 1, 0
        %v2000 = vsel %vm530, 1, 0
        %v2001 = vsel %vm531, 1, 0
        %v2002 = vsel %vm532, 1, 0
        %v2003 = vsel %vm533, 1, 0
        %v2004 = vsel %vm534, 1, 0
        %v2005 = vsel %vm535, 1, 0
        %v2006 = vsel %vm536, 1, 0
        %v2007 = vsel %vm537, 1, 0
        %v2008 = vsel %vm538, 1, 0
        %v2009 = vsel %vm539, 1, 0
        %v2010 = vsel %vm540, 1, 0
        %v2011 = vsel %vm541, 1, 0
        %vm2012 = vcmp.eq.s32.totalorder %v1988, 1
        %vm2013 = vcmp.eq.s32.totalorder %v1989, 1
        %vm2014 = vcmp.eq.s32.totalorder %v1990, 1
        %vm2015 = vcmp.eq.s32.totalorder %v1991, 1
        %vm2016 = vcmp.eq.s32.totalorder %v1992, 1
        %vm2017 = vcmp.eq.s32.totalorder %v1993, 1
        %vm2018 = vcmp.eq.s32.totalorder %v1994, 1
        %vm2019 = vcmp.eq.s32.totalorder %v1995, 1
        %vm2020 = vcmp.eq.s32.totalorder %v1996, 1
        %vm2021 = vcmp.eq.s32.totalorder %v1997, 1
        %vm2022 = vcmp.eq.s32.totalorder %v1998, 1
        %vm2023 = vcmp.eq.s32.totalorder %v1999, 1
        %vm2024 = vcmp.eq.s32.totalorder %v2000, 1
        %vm2025 = vcmp.eq.s32.totalorder %v2001, 1
        %vm2026 = vcmp.eq.s32.totalorder %v2002, 1
        %vm2027 = vcmp.eq.s32.totalorder %v2003, 1
        %vm2028 = vcmp.eq.s32.totalorder %v2004, 1
        %vm2029 = vcmp.eq.s32.totalorder %v2005, 1
        %vm2030 = vcmp.eq.s32.totalorder %v2006, 1
        %vm2031 = vcmp.eq.s32.totalorder %v2007, 1
        %vm2032 = vcmp.eq.s32.totalorder %v2008, 1
        %vm2033 = vcmp.eq.s32.totalorder %v2009, 1
        %vm2034 = vcmp.eq.s32.totalorder %v2010, 1
        %vm2035 = vcmp.eq.s32.totalorder %v2011, 1
        %v2036 = vsel %vm2012, %v1964, 0.0
        %v2037 = vsel %vm2013, %v1965, 0.0
        %v2038 = vsel %vm2014, %v1966, 0.0
        %v2039 = vsel %vm2015, %v1967, 0.0
        %v2040 = vsel %vm2016, %v1968, 0.0
        %v2041 = vsel %vm2017, %v1969, 0.0
        %v2042 = vsel %vm2018, %v1970, 0.0
        %v2043 = vsel %vm2019, %v1971, 0.0
        %v2044 = vsel %vm2020, %v1972, 0.0
        %v2045 = vsel %vm2021, %v1973, 0.0
        %v2046 = vsel %vm2022, %v1974, 0.0
        %v2047 = vsel %vm2023, %v1975, 0.0
        %v2048 = vsel %vm2024, %v1976, 0.0
        %v2049 = vsel %vm2025, %v1977, 0.0
        %v2050 = vsel %vm2026, %v1978, 0.0
        %v2051 = vsel %vm2027, %v1979, 0.0
        %v2052 = vsel %vm2028, %v1980, 0.0
        %v2053 = vsel %vm2029, %v1981, 0.0
        %v2054 = vsel %vm2030, %v1982, 0.0
        %v2055 = vsel %vm2031, %v1983, 0.0
        %v2056 = vsel %vm2032, %v1984, 0.0
        %v2057 = vsel %vm2033, %v1985, 0.0
        %v2058 = vsel %vm2034, %v1986, 0.0
        %v2059 = vsel %vm2035, %v1987, 0.0
        %v2060 = vld [vmem:[%s8] sm:$0xff]
        %v2061 = vld [vmem:[%s8 + $0x8] sm:$0xff]
        %v2062 = vld [vmem:[%s8 + $0x10] sm:$0xff]
        %v2063 = vld [vmem:[%s8 + $0x18] sm:$0xff]
        %v2065 = vsel %vm1480, %v2061, 0
        %v2068 = vsel %vm1480, %v2063, 0
        %2070 = vmatprep.subr.mxu0 0.0
        %2071 = vmatpush1.msra.mxu0 %v2036
        %2072 = vmatprep.subr.mxu0 0.0
        %2073 = vmatpush1.msra.mxu0 %v2037
        %2074 = vmatprep.subr.mxu0 0.0
        %2075 = vmatpush1.msra.mxu0 %v2038
        %2076 = vmatprep.subr.mxu0 0.0
        %2077 = vmatpush1.msra.mxu0 %v2039
        %2078 = vmatprep.subr.mxu0 0.0
        %2079 = vmatpush1.msra.mxu0 %v2040
        %2080 = vmatprep.subr.mxu0 0.0
        %2081 = vmatpush1.msra.mxu0 %v2041
        %2082 = vmatprep.subr.mxu0 0.0
        %2083 = vmatpush1.msra.mxu0 %v2042
        %2084 = vmatprep.subr.mxu0 0.0
        %2085 = vmatpush1.msra.mxu0 %v2043
        %2086 = vmatprep.subr.mxu0 0.0
        %2087 = vmatpush1.msra.mxu0 %v2044
        %2088 = vmatprep.subr.mxu0 0.0
        %2089 = vmatpush1.msra.mxu0 %v2045
        %2090 = vmatprep.subr.mxu0 0.0
        %2091 = vmatpush1.msra.mxu0 %v2046
        %2092 = vmatprep.subr.mxu0 0.0
        %2093 = vmatpush1.msra.mxu0 %v2047
        %2094 = vmatprep.subr.mxu0 0.0
        %2095 = vmatpush1.msra.mxu0 %v2048
        %2096 = vmatprep.subr.mxu0 0.0
        %2097 = vmatpush1.msra.mxu0 %v2049
        %2098 = vmatprep.subr.mxu0 0.0
        %2099 = vmatpush1.msra.mxu0 %v2050
        %2100 = vmatprep.subr.mxu0 0.0
        %2101 = vmatpush1.msra.mxu0 %v2051
        %2102 = vmatprep.subr.mxu0 0.0
        %2103 = vmatpush1.msra.mxu0 %v2052
        %2104 = vmatprep.subr.mxu0 0.0
        %2105 = vmatpush1.msra.mxu0 %v2053
        %2106 = vmatprep.subr.mxu0 0.0
        %2107 = vmatpush1.msra.mxu0 %v2054
        %2108 = vmatprep.subr.mxu0 0.0
        %2109 = vmatpush1.msra.mxu0 %v2055
        %2110 = vmatprep.subr.mxu0 0.0
        %2111 = vmatpush1.msra.mxu0 %v2056
        %2112 = vmatprep.subr.mxu0 0.0
        %2113 = vmatpush1.msra.mxu0 %v2057
        %2114 = vmatprep.subr.mxu0 0.0
        %2115 = vmatpush1.msra.mxu0 %v2058
        %2116 = vmatprep.subr.mxu0 0.0
        %2117 = vmatpush1.msra.mxu0 %v2059
        %2118 = vmatprep.subr.mxu0 0.0
        %2119 = vmatpush1.msra.mxu0 0.0
        %2120 = vmatprep.subr.mxu0 0.0
        %2121 = vmatpush1.msra.mxu0 0.0
        %2122 = vmatprep.subr.mxu0 0.0
        %2123 = vmatpush1.msra.mxu0 0.0
        %2124 = vmatprep.subr.mxu0 0.0
        %2125 = vmatpush1.msra.mxu0 0.0
        %2126 = vmatprep.subr.mxu0 0.0
        %2127 = vmatpush1.msra.mxu0 0.0
        %2128 = vmatprep.subr.mxu0 0.0
        %2129 = vmatpush1.msra.mxu0 0.0
        %2130 = vmatprep.subr.mxu0 0.0
        %2131 = vmatpush1.msra.mxu0 0.0
        %2132 = vmatprep.subr.mxu0 0.0
        %2133 = vmatpush1.msra.mxu0 0.0
        %2134 = vmatprep.mubr.f32.mxu0 %v2065
        %2135 = vmatmul.mubr.f32.gmra.mrb[0].mxu0 %v2060
        %v2136 = vpop.f32.mrb[0].mxu0
        %v2137 = vadd.f32 0.0, %v2136
        %v2138 = vpop.f32.mrb[0].mxu0
        %2139 = vmatprep.mubr.f32.mxu0 %v2068
        %2140 = vmatmul.mubr.f32.gmra.mrb[0].mxu0 %v2062
        %v2141 = vpop.f32.mrb[0].mxu0
        %v2142 = vadd.f32 0.0, %v2141
        %v2143 = vpop.f32.mrb[0].mxu0
        %2144 = vdwg.mxu0
        %v2145 = vmul.f32 %v2137, %v2137
        %v2146 = vmul.f32 %v2142, %v2142
        %v2147 = vsel %vm561, %v2145, 0.0
        %2148 = vadd.xlane.f32.xlu0 %v2147
        %v2149 = vpop.xlane.xlu0 %2148
        %v2150 = vsel %vm561, %v2146, 0.0
        %2151 = vadd.xlane.f32.xlu0 %v2150
        %v2152 = vpop.xlane.xlu0 %2151
        %v2153 = vrsqrt.pop %v2149
        %v2154 = vmul.f32 %v2149, %v2153
        %vm2155 = vcmp.eq.f32.partialorder %v2149, inf
        %v2156 = vsel %vm2155, %v2149, %v2154
        %vm2157 = vcmp.eq.f32.partialorder %v2149, 0.0
        %v2158 = vand.u32 %v2149, 2147483648
        %v2159 = vsel %vm2157, %v2158, %v2156
        %v2160 = vrsqrt.pop %v2152
        %v2161 = vmul.f32 %v2152, %v2160
        %vm2162 = vcmp.eq.f32.partialorder %v2152, inf
        %v2163 = vsel %vm2162, %v2152, %v2161
        %vm2164 = vcmp.eq.f32.partialorder %v2152, 0.0
        %v2165 = vand.u32 %v2152, 2147483648
        %v2166 = vsel %vm2164, %v2165, %v2163
        %v2167 = vadd.f32 %v2159, 1e-08
        %v2168 = vadd.f32 %v2166, 1e-08
        %v2169 = vrcp.pop %v2167
        %v2170 = vrcp.pop %v2168
        %v2171 = vmul.f32 %v2137, %v2169
        %v2172 = vmul.f32 %v2142, %v2170
        %2173 = vst.msk [vmem:[%s422] sm:$0xff] %vm561, %v2171
        %2174 = vst.msk [vmem:[%s422 + $0x8] sm:$0xff] %vm561, %v2172
        %s2175 = sand.u32 %s255, 1
        %s2176 = scalar_lea.sflag [#allocation4], %s2175
        %s2177 = sand.u32 %s255, 1
        %s2178 = smul.addr %s2177, 16
        %s2179 = scalar_lea.vmem [#allocation3], %s2178
        %s2180 = sand.u32 %s281, 1
        %s2181 = sand.u32 %s281, 1
        %s2182 = smul.addr %s2181, 192
        %s2183 = scalar_lea.vmem [#allocation5], %s2182
        // Predicated region
        $region61: #{tpu_custom_call.1} parent=59 // pred_check
          %p2184 = pneg %p265
        $region62: #{tpu_custom_call.1} parent=59 // pred_check_branch
          %2186 = sbr.rel (%p2184) target = $region64
        $region63: #{tpu_custom_call.1} parent=59 // pred_region
          %s2187 = smul.u32 2, %s27
          %s2188 = ssub.s32 3, %s2187
          %p2189 = scmp.lt.s32.totalorder %s2188, 2
          %s2190 = scalar_select %p2189, %s2188, 2
          %s2191 = smul.u32 128, %s2190
          %s2193 = ssub.s32 256, %s2191
          %2194 = vsyncadd %s2176, %s2193
          %p2195 = scmp.ne.s32.totalorder 0, %s2191
          %s2196 = smul.addr %s2187, 128
          %s2197 = scalar_lea.hbm %s10, %s2196
          %s2198 = smul.u32 8, %s2190
          %s2199 = sshll.u32 %s2179, 4
          %s2200 = int_to_ptr.vmem [resolvable:$true] %s2199
          %s2201 = sshll.u32 %s2198, 4
          %2205 = dma.vmem_to_hbm [thread:$0]  (%p2195), %s2200, %s2201, %s2197, %s2176, 128, 128, 8
        $region64: #{tpu_custom_call.1} parent=59 // pred_fallthru
          _
        // Predicated region
        $region65: #{tpu_custom_call.1} parent=59 // pred_check
          %p2206 = pneg %p291
        $region66: #{tpu_custom_call.1} parent=59 // pred_check_branch
          %2208 = sbr.rel (%p2206) target = $region68
        $region67: #{tpu_custom_call.1} parent=59 // pred_region
          %s2209 = smul.u32 24, %s27
          %s2210 = ssub.s32 30, %s2209
          %p2211 = scmp.lt.s32.totalorder %s2210, 24
          %s2212 = scalar_select %p2211, %s2210, 24
          %s2213 = smul.u32 128, %s2212
          %p2214 = scmp.ne.s32.totalorder 0, %s2213
          %s2215 = smul.addr %s2209, 8
          %s2216 = scalar_lea.vmem %s11, %s2215
          // Predicated region
          $region69: #{tpu_custom_call.1} parent=67 // pred_check
            %p2217 = pneg %p2214
          $region70: #{tpu_custom_call.1} parent=67 // pred_check_branch
            %2219 = sbr.rel (%p2217) target = $region72
          $region71: #{tpu_custom_call.1} parent=67 // pred_region
            // Predicated region
            $region73: #{tpu_custom_call.1} parent=71 // pred_check
              _
            $region74: #{tpu_custom_call.1} parent=71 // pred_check_branch
              %2221 = sbr.rel (0) target = $region76
            $region75: #{tpu_custom_call.1} parent=71 // pred_region
              // Predicated region
              $region95: #{tpu_custom_call.1} parent=75 // pred_check
                _
              $region96: #{tpu_custom_call.1} parent=75 // pred_check_branch
                %2317 = sbr.rel (0) target = $region98
              $region97: #{tpu_custom_call.1} parent=75 // pred_region
                %s2318 = sdiv.u32.pop %s2212, 24
                %s2319 = srem.u32.pop %s2212, 24
                // While loop
                $region99: #{tpu_custom_call.1} parent=97 // loop_pre_header
                  _
                $region100: #{tpu_custom_call.1} parent=97 // loop_header
                  %s2321 = sphi 0, %s2323
                  %p2322 = scmp.ge.s32.totalorder %s2321, %s2318
                  %s2326 = sphi 0, %s2379
                  %s2327 = sphi %s2183, %s2382
                  %s2328 = sphi %s2216, %s2383
                $region101: #{tpu_custom_call.1} parent=97 // loop_header_branch
                  %2325 = sbr.rel (%p2322) target = $region105
                $region102: #{tpu_custom_call.1} parent=97 // loop_body
                  %v2329 = vld [vmem:[%s2327] sm:$0xff]
                  %2330 = vst [vmem:[%s2328] sm:$0xff] %v2329
                  %v2331 = vld [vmem:[%s2327 + $0x8] sm:$0xff]
                  %2332 = vst [vmem:[%s2328 + $0x8] sm:$0xff] %v2331
                  %v2333 = vld [vmem:[%s2327 + $0x10] sm:$0xff]
                  %2334 = vst [vmem:[%s2328 + $0x10] sm:$0xff] %v2333
                  %v2335 = vld [vmem:[%s2327 + $0x18] sm:$0xff]
                  %2336 = vst [vmem:[%s2328 + $0x18] sm:$0xff] %v2335
                  %v2337 = vld [vmem:[%s2327 + $0x20] sm:$0xff]
                  %2338 = vst [vmem:[%s2328 + $0x20] sm:$0xff] %v2337
                  %v2339 = vld [vmem:[%s2327 + $0x28] sm:$0xff]
                  %2340 = vst [vmem:[%s2328 + $0x28] sm:$0xff] %v2339
                  %v2341 = vld [vmem:[%s2327 + $0x30] sm:$0xff]
                  %2342 = vst [vmem:[%s2328 + $0x30] sm:$0xff] %v2341
                  %v2343 = vld [vmem:[%s2327 + $0x38] sm:$0xff]
                  %2344 = vst [vmem:[%s2328 + $0x38] sm:$0xff] %v2343
                  %v2345 = vld [vmem:[%s2327 + $0x40] sm:$0xff]
                  %2346 = vst [vmem:[%s2328 + $0x40] sm:$0xff] %v2345
                  %v2347 = vld [vmem:[%s2327 + $0x48] sm:$0xff]
                  %2348 = vst [vmem:[%s2328 + $0x48] sm:$0xff] %v2347
                  %v2349 = vld [vmem:[%s2327 + $0x50] sm:$0xff]
                  %2350 = vst [vmem:[%s2328 + $0x50] sm:$0xff] %v2349
                  %v2351 = vld [vmem:[%s2327 + $0x58] sm:$0xff]
                  %2352 = vst [vmem:[%s2328 + $0x58] sm:$0xff] %v2351
                  %v2353 = vld [vmem:[%s2327 + $0x60] sm:$0xff]
                  %2354 = vst [vmem:[%s2328 + $0x60] sm:$0xff] %v2353
                  %v2355 = vld [vmem:[%s2327 + $0x68] sm:$0xff]
                  %2356 = vst [vmem:[%s2328 + $0x68] sm:$0xff] %v2355
                  %v2357 = vld [vmem:[%s2327 + $0x70] sm:$0xff]
                  %2358 = vst [vmem:[%s2328 + $0x70] sm:$0xff] %v2357
                  %v2359 = vld [vmem:[%s2327 + $0x78] sm:$0xff]
                  %2360 = vst [vmem:[%s2328 + $0x78] sm:$0xff] %v2359
                  %v2361 = vld [vmem:[%s2327 + $0x80] sm:$0xff]
                  %2362 = vst [vmem:[%s2328 + $0x80] sm:$0xff] %v2361
                  %v2363 = vld [vmem:[%s2327 + $0x88] sm:$0xff]
                  %2364 = vst [vmem:[%s2328 + $0x88] sm:$0xff] %v2363
                  %v2365 = vld [vmem:[%s2327 + $0x90] sm:$0xff]
                  %2366 = vst [vmem:[%s2328 + $0x90] sm:$0xff] %v2365
                  %v2367 = vld [vmem:[%s2327 + $0x98] sm:$0xff]
                  %2368 = vst [vmem:[%s2328 + $0x98] sm:$0xff] %v2367
                  %v2369 = vld [vmem:[%s2327 + $0xa0] sm:$0xff]
                  %2370 = vst [vmem:[%s2328 + $0xa0] sm:$0xff] %v2369
                  %v2371 = vld [vmem:[%s2327 + $0xa8] sm:$0xff]
                  %2372 = vst [vmem:[%s2328 + $0xa8] sm:$0xff] %v2371
                  %v2373 = vld [vmem:[%s2327 + $0xb0] sm:$0xff]
                  %2374 = vst [vmem:[%s2328 + $0xb0] sm:$0xff] %v2373
                  %v2375 = vld [vmem:[%s2327 + $0xb8] sm:$0xff]
                  %2376 = vst [vmem:[%s2328 + $0xb8] sm:$0xff] %v2375
                  %s2377 = sadd.s32 1, %s2326
                  %p2378 = scmp.ge.s32.totalorder %s2377, %s2318
                  %s2379 = scalar_select %p2378, 0, %s2377
                  %s2380 = smul.u32 %s2379, 192
                  %s2381 = smul.u32 %s2379, 192
                  %s2382 = scalar_lea.vmem %s2183, %s2380 [#allocation5]
                  %s2383 = scalar_lea.vmem %s2216, %s2381
                $region103: #{tpu_custom_call.1} parent=97 // loop_footer
                  %s2323 = sadd.s32 %s2321, 1
                $region104: #{tpu_custom_call.1} parent=97 // loop_footer_branch
                  %2320 = sbr.rel target = $region100
                $region105: #{tpu_custom_call.1} parent=97 // loop_exit
                  _
                %s2384 = sdiv.u32.pop %s2212, 24
                %s2385 = srem.u32.pop %s2212, 24
                %s2386 = smul.u32 %s2384, 24
                %s2387 = smul.u32 8, %s2386
                %s2388 = scalar_lea.vmem %s2183, %s2387 [#allocation5]
                %s2389 = smul.u32 8, %s2386
                %s2390 = scalar_lea.vmem %s2216, %s2389
                // While loop
                $region106: #{tpu_custom_call.1} parent=97 // loop_pre_header
                  _
                $region107: #{tpu_custom_call.1} parent=97 // loop_header
                  %s2392 = sphi 0, %s2394
                  %p2393 = scmp.ge.s32.totalorder %s2392, %s2385
                  %s2397 = sphi 0, %s2404
                  %s2398 = sphi %s2388, %s2407
                  %s2399 = sphi %s2390, %s2408
                $region108: #{tpu_custom_call.1} parent=97 // loop_header_branch
                  %2396 = sbr.rel (%p2393) target = $region112
                $region109: #{tpu_custom_call.1} parent=97 // loop_body
                  %v2400 = vld [vmem:[%s2398] sm:$0xff]
                  %2401 = vst [vmem:[%s2399] sm:$0xff] %v2400
                  %s2402 = sadd.s32 1, %s2397
                  %p2403 = scmp.ge.s32.totalorder %s2402, %s2385
                  %s2404 = scalar_select %p2403, 0, %s2402
                  %s2405 = smul.u32 %s2404, 8
                  %s2406 = smul.u32 %s2404, 8
                  %s2407 = scalar_lea.vmem %s2388, %s2405 [#allocation5]
                  %s2408 = scalar_lea.vmem %s2390, %s2406
                $region110: #{tpu_custom_call.1} parent=97 // loop_footer
                  %s2394 = sadd.s32 %s2392, 1
                $region111: #{tpu_custom_call.1} parent=97 // loop_footer_branch
                  %2391 = sbr.rel target = $region107
                $region112: #{tpu_custom_call.1} parent=97 // loop_exit
                  _
              $region98: #{tpu_custom_call.1} parent=75 // pred_fallthru
                _
              // Predicated region
              $region113: #{tpu_custom_call.1} parent=75 // pred_check
                _
              $region114: #{tpu_custom_call.1} parent=75 // pred_check_branch
                %2410 = sbr.rel target = $region116
              $region115: #{tpu_custom_call.1} parent=75 // pred_region
                _
              $region116: #{tpu_custom_call.1} parent=75 // pred_fallthru
                _
            $region76: #{tpu_custom_call.1} parent=71 // pred_fallthru
              _
            // Predicated region
            $region77: #{tpu_custom_call.1} parent=71 // pred_check
              _
            $region78: #{tpu_custom_call.1} parent=71 // pred_check_branch
              %2223 = sbr.rel target = $region80
            $region79: #{tpu_custom_call.1} parent=71 // pred_region
              %s2225 = sdiv.u32.pop %s2212, 24
              %s2226 = srem.u32.pop %s2212, 24
              // While loop
              $region81: #{tpu_custom_call.1} parent=79 // loop_pre_header
                _
              $region82: #{tpu_custom_call.1} parent=79 // loop_header
                %s2228 = sphi 0, %s2230
                %p2229 = scmp.ge.s32.totalorder %s2228, %s2225
                %s2233 = sphi 0, %s2286
                %s2234 = sphi %s2183, %s2289
                %s2235 = sphi %s2216, %s2290
              $region83: #{tpu_custom_call.1} parent=79 // loop_header_branch
                %2232 = sbr.rel (%p2229) target = $region87
              $region84: #{tpu_custom_call.1} parent=79 // loop_body
                %v2236 = vld [vmem:[%s2234] sm:$0xff]
                %2237 = vst [vmem:[%s2235] sm:$0xff] %v2236
                %v2238 = vld [vmem:[%s2234 + $0x8] sm:$0xff]
                %2239 = vst [vmem:[%s2235 + $0x8] sm:$0xff] %v2238
                %v2240 = vld [vmem:[%s2234 + $0x10] sm:$0xff]
                %2241 = vst [vmem:[%s2235 + $0x10] sm:$0xff] %v2240
                %v2242 = vld [vmem:[%s2234 + $0x18] sm:$0xff]
                %2243 = vst [vmem:[%s2235 + $0x18] sm:$0xff] %v2242
                %v2244 = vld [vmem:[%s2234 + $0x20] sm:$0xff]
                %2245 = vst [vmem:[%s2235 + $0x20] sm:$0xff] %v2244
                %v2246 = vld [vmem:[%s2234 + $0x28] sm:$0xff]
                %2247 = vst [vmem:[%s2235 + $0x28] sm:$0xff] %v2246
                %v2248 = vld [vmem:[%s2234 + $0x30] sm:$0xff]
                %2249 = vst [vmem:[%s2235 + $0x30] sm:$0xff] %v2248
                %v2250 = vld [vmem:[%s2234 + $0x38] sm:$0xff]
                %2251 = vst [vmem:[%s2235 + $0x38] sm:$0xff] %v2250
                %v2252 = vld [vmem:[%s2234 + $0x40] sm:$0xff]
                %2253 = vst [vmem:[%s2235 + $0x40] sm:$0xff] %v2252
                %v2254 = vld [vmem:[%s2234 + $0x48] sm:$0xff]
                %2255 = vst [vmem:[%s2235 + $0x48] sm:$0xff] %v2254
                %v2256 = vld [vmem:[%s2234 + $0x50] sm:$0xff]
                %2257 = vst [vmem:[%s2235 + $0x50] sm:$0xff] %v2256
                %v2258 = vld [vmem:[%s2234 + $0x58] sm:$0xff]
                %2259 = vst [vmem:[%s2235 + $0x58] sm:$0xff] %v2258
                %v2260 = vld [vmem:[%s2234 + $0x60] sm:$0xff]
                %2261 = vst [vmem:[%s2235 + $0x60] sm:$0xff] %v2260
                %v2262 = vld [vmem:[%s2234 + $0x68] sm:$0xff]
                %2263 = vst [vmem:[%s2235 + $0x68] sm:$0xff] %v2262
                %v2264 = vld [vmem:[%s2234 + $0x70] sm:$0xff]
                %2265 = vst [vmem:[%s2235 + $0x70] sm:$0xff] %v2264
                %v2266 = vld [vmem:[%s2234 + $0x78] sm:$0xff]
                %2267 = vst [vmem:[%s2235 + $0x78] sm:$0xff] %v2266
                %v2268 = vld [vmem:[%s2234 + $0x80] sm:$0xff]
                %2269 = vst [vmem:[%s2235 + $0x80] sm:$0xff] %v2268
                %v2270 = vld [vmem:[%s2234 + $0x88] sm:$0xff]
                %2271 = vst [vmem:[%s2235 + $0x88] sm:$0xff] %v2270
                %v2272 = vld [vmem:[%s2234 + $0x90] sm:$0xff]
                %2273 = vst [vmem:[%s2235 + $0x90] sm:$0xff] %v2272
                %v2274 = vld [vmem:[%s2234 + $0x98] sm:$0xff]
                %2275 = vst [vmem:[%s2235 + $0x98] sm:$0xff] %v2274
                %v2276 = vld [vmem:[%s2234 + $0xa0] sm:$0xff]
                %2277 = vst [vmem:[%s2235 + $0xa0] sm:$0xff] %v2276
                %v2278 = vld [vmem:[%s2234 + $0xa8] sm:$0xff]
                %2279 = vst [vmem:[%s2235 + $0xa8] sm:$0xff] %v2278
                %v2280 = vld [vmem:[%s2234 + $0xb0] sm:$0xff]
                %2281 = vst [vmem:[%s2235 + $0xb0] sm:$0xff] %v2280
                %v2282 = vld [vmem:[%s2234 + $0xb8] sm:$0xff]
                %2283 = vst [vmem:[%s2235 + $0xb8] sm:$0xff] %v2282
                %s2284 = sadd.s32 1, %s2233
                %p2285 = scmp.ge.s32.totalorder %s2284, %s2225
                %s2286 = scalar_select %p2285, 0, %s2284
                %s2287 = smul.u32 %s2286, 192
                %s2288 = smul.u32 %s2286, 192
                %s2289 = scalar_lea.vmem %s2183, %s2287 [#allocation5]
                %s2290 = scalar_lea.vmem %s2216, %s2288
              $region85: #{tpu_custom_call.1} parent=79 // loop_footer
                %s2230 = sadd.s32 %s2228, 1
              $region86: #{tpu_custom_call.1} parent=79 // loop_footer_branch
                %2227 = sbr.rel target = $region82
              $region87: #{tpu_custom_call.1} parent=79 // loop_exit
                _
              %s2291 = sdiv.u32.pop %s2212, 24
              %s2292 = srem.u32.pop %s2212, 24
              %s2293 = smul.u32 %s2291, 24
              %s2294 = smul.u32 8, %s2293
              %s2295 = scalar_lea.vmem %s2183, %s2294 [#allocation5]
              %s2296 = smul.u32 8, %s2293
              %s2297 = scalar_lea.vmem %s2216, %s2296
              // While loop
              $region88: #{tpu_custom_call.1} parent=79 // loop_pre_header
                _
              $region89: #{tpu_custom_call.1} parent=79 // loop_header
                %s2299 = sphi 0, %s2301
                %p2300 = scmp.ge.s32.totalorder %s2299, %s2292
                %s2304 = sphi 0, %s2311
                %s2305 = sphi %s2295, %s2314
                %s2306 = sphi %s2297, %s2315
              $region90: #{tpu_custom_call.1} parent=79 // loop_header_branch
                %2303 = sbr.rel (%p2300) target = $region94
              $region91: #{tpu_custom_call.1} parent=79 // loop_body
                %v2307 = vld [vmem:[%s2305] sm:$0xff]
                %2308 = vst [vmem:[%s2306] sm:$0xff] %v2307
                %s2309 = sadd.s32 1, %s2304
                %p2310 = scmp.ge.s32.totalorder %s2309, %s2292
                %s2311 = scalar_select %p2310, 0, %s2309
                %s2312 = smul.u32 %s2311, 8
                %s2313 = smul.u32 %s2311, 8
                %s2314 = scalar_lea.vmem %s2295, %s2312 [#allocation5]
                %s2315 = scalar_lea.vmem %s2297, %s2313
              $region92: #{tpu_custom_call.1} parent=79 // loop_footer
                %s2301 = sadd.s32 %s2299, 1
              $region93: #{tpu_custom_call.1} parent=79 // loop_footer_branch
                %2298 = sbr.rel target = $region89
              $region94: #{tpu_custom_call.1} parent=79 // loop_exit
                _
            $region80: #{tpu_custom_call.1} parent=71 // pred_fallthru
              _
          $region72: #{tpu_custom_call.1} parent=67 // pred_fallthru
            _
          %2411 = vnop
        $region68: #{tpu_custom_call.1} parent=59 // pred_fallthru
          _
      $region60: #{tpu_custom_call.1} parent=5 // pred_fallthru
        _
      %p2412 = scmp.le.s32.totalorder 2, %s22
      // Predicated region
      $region117: #{tpu_custom_call.1} parent=5 // pred_check
        %p2413 = pneg %p2412
      $region118: #{tpu_custom_call.1} parent=5 // pred_check_branch
        %2415 = sbr.rel (%p2413) target = $region120
      $region119: #{tpu_custom_call.1} parent=5 // pred_region
        %s2416 = ssub.s32 %s22, 2
        // Predicated region
        $region121: #{tpu_custom_call.1} parent=119 // pred_check
          %p2417 = pneg %p271
        $region122: #{tpu_custom_call.1} parent=119 // pred_check_branch
          %2419 = sbr.rel (%p2417) target = $region124
        $region123: #{tpu_custom_call.1} parent=119 // pred_region
          %s2420 = sand.u32 %s256, 1
          %s2421 = scalar_lea.sflag [#allocation4], %s2420
          %s2422 = sand.u32 %s256, 1
          %s2423 = smul.addr %s2422, 16
          %s2424 = scalar_lea.vmem [#allocation3], %s2423
          %2425 = dma.done %s2421, 256
        $region124: #{tpu_custom_call.1} parent=119 // pred_fallthru
          _
        // Predicated region
        $region125: #{tpu_custom_call.1} parent=119 // pred_check
          %p2426 = pneg %p297
        $region126: #{tpu_custom_call.1} parent=119 // pred_check_branch
          %2428 = sbr.rel (%p2426) target = $region128
        $region127: #{tpu_custom_call.1} parent=119 // pred_region
          %s2429 = sand.u32 %s282, 1
          %s2430 = sand.u32 %s282, 1
          %s2431 = smul.addr %s2430, 192
          %s2432 = scalar_lea.vmem [#allocation5], %s2431
        $region128: #{tpu_custom_call.1} parent=119 // pred_fallthru
          _
      $region120: #{tpu_custom_call.1} parent=5 // pred_fallthru
        _
    $region6: #{tpu_custom_call.1} parent=1 // loop_footer
      %s26 = sadd.s32 1, %s22
    $region7: #{tpu_custom_call.1} parent=1 // loop_footer_branch
      %21 = sbr.rel target = $region3
    $region8: #{tpu_custom_call.1} parent=1 // loop_exit
      _
    %2433 = vsyncpa [#allocation4], 1
    %s2434 = scalar_lea.sflag [#allocation4], 1
    %2435 = vsyncpa %s2434, 1

// kernel: tpu_custom_call.1
$region0: #{tpu_custom_call.1}
  #allocation0 [shape = 'u32[]', space=smem, size = 0x4, offset = 0x4, fixed_abs, tag = 'smem constant byte address 0x4 - core index']
  #allocation1 [shape = 'u32[144,128]{1,0:T(1,128)}', space=vmem, size = 0x12000, scoped, tag = 'internal scratch']
  #allocation2 [shape = 'f32[1]{0:T(128)S(6)}', space=smem, size = 0x200, scoped, tag = 'scoped memory for tpu_custom_call.1']
  %s0 = inlined_call_operand.vmem [shape: f32[240,32], index: 0, kind: input, shape index: {}]
  %s1 = inlined_call_operand.vmem [shape: f32[20,32], index: 1, kind: input, shape index: {}]
  %s2 = inlined_call_operand.vmem [shape: f32[32,128], index: 2, kind: input, shape index: {}]
  %s3 = inlined_call_operand.vmem [shape: f32[1,128], index: 3, kind: input, shape index: {}]
  %s4 = inlined_call_operand.vmem [shape: f32[32,128], index: 4, kind: input, shape index: {}]
  %s5 = inlined_call_operand.vmem [shape: f32[1,128], index: 5, kind: input, shape index: {}]
  %s6 = inlined_call_operand.vmem [shape: f32[1,128], index: 6, kind: input, shape index: {}]
  %s7 = inlined_call_operand.vmem [shape: f32[192,16], index: 7, kind: input, shape index: {}]
  %s8 = inlined_call_operand.vmem [shape: f32[16,192], index: 8, kind: input, shape index: {}]
  %s9 = inlined_call_operand.<no memory space> [shape: f32[1], index: 9, kind: input, shape index: {}]
  %s10 = inlined_call_operand.hbm [shape: f32[20,32], index: 10, kind: output, shape index: {0}]
  %s11 = inlined_call_operand.vmem [shape: f32[240,1], index: 11, kind: output, shape index: {1}]
  %12 = xla_tuple %s10, %s11
  %s13 = sld [smem:[#allocation0]]
  $region129: #{tpu_custom_call.1} parent=0
    _
  %s15 = ssub.s32 1, %s13
  %s16 = scalar_select 0, %s15, %s13
  %17 = sst [smem:[#allocation2]] %s9
  $region1: #{tpu_custom_call.1} parent=0
    #allocation3 [shape = 'u8[16384]{0}', space=vmem, size = 0x4000, scoped, tag = 'output window, operand 0']
    #allocation4 [shape = 's32[2]{0}', space=sflag, size = 0x8, scoped, tag = 'scoped memory for tpu_custom_call.1']
    #allocation5 [shape = 'u8[196608]{0}', space=vmem, size = 0x30000, scoped, tag = 'output window, operand 1']
    %18 = vsyncpa [#allocation4], 0
    %s19 = scalar_lea.sflag [#allocation4], 1
    %20 = vsyncpa %s19, 0
    loop: start=0, step=1, limit=4
    $region2: #{tpu_custom_call.1} parent=1 // loop_pre_header
      _
    $region3: #{tpu_custom_call.1} parent=1 // loop_header
      %s22 = sphi 0, %s26
      %p23 = scmp.ge.s32.totalorder %s22, 4
      %s32 = sphi 0, %s34
      %s35 = sphi 0, %s32
      %s36 = sphi 0, %s35
      %s52 = sphi 0, %s36
      %s58 = sphi 0, %s60
      %s61 = sphi 0, %s58
      %s62 = sphi 0, %s61
      %s78 = sphi 0, %s62
      %s82 = sphi 0, %s82
      %s84 = sphi 0, %s82
      %s85 = sphi 0, %s84
      %s99 = sphi 0, %s85
      %s103 = sphi 0, %s103
      %s105 = sphi 0, %s103
      %s106 = sphi 0, %s105
      %s120 = sphi 0, %s106
      %s124 = sphi 0, %s124
      %s126 = sphi 0, %s124
      %s127 = sphi 0, %s126
      %s141 = sphi 0, %s127
      %s145 = sphi 0, %s145
      %s147 = sphi 0, %s145
      %s148 = sphi 0, %s147
      %s162 = sphi 0, %s148
      %s166 = sphi 0, %s166
      %s168 = sphi 0, %s166
      %s169 = sphi 0, %s168
      %s183 = sphi 0, %s169
      %s187 = sphi 0, %s187
      %s189 = sphi 0, %s187
      %s190 = sphi 0, %s189
      %s204 = sphi 0, %s190
      %s208 = sphi 0, %s208
      %s210 = sphi 0, %s208
      %s211 = sphi 0, %s210
      %s225 = sphi 0, %s211
      %s229 = sphi 0, %s229
      %s231 = sphi 0, %s229
      %s232 = sphi 0, %s231
      %s246 = sphi 0, %s232
      %s252 = sphi 0, %s254
      %s255 = sphi 0, %s252
      %s256 = sphi 0, %s255
      %s272 = sphi 0, %s256
      %s278 = sphi 0, %s280
      %s281 = sphi 0, %s278
      %s282 = sphi 0, %s281
      %s298 = sphi 0, %s282
    $region4: #{tpu_custom_call.1} parent=1 // loop_header_branch
      %25 = sbr.rel (%p23) target = $region8
    $region5: #{tpu_custom_call.1} parent=1 // loop_body
      %s27 = ssub.s32 %s22, 1
      %s28 = ssub.s32 %s22, 2
      %s29 = sadd.s32 %s22, 1
      %s30 = ssub.s32 %s22, %s29
      %p31 = scmp.eq.s32.totalorder %s30, 0
      %s33 = sadd.s32 %s32, 1
      %s34 = scalar_select %p31, %s32, %s33
      %p37 = pneg %p31
      %p38 = scmp.eq.s32.totalorder %s22, 1
      %p39 = por %p37, %p38
      %p40 = scmp.ne.s32.totalorder %s32, %s35
      %p41 = scmp.eq.s32.totalorder %s22, 0
      %p42 = por %p40, %p41
      %p43 = scmp.ne.s32.totalorder %s32, %s35
      %p44 = scmp.eq.s32.totalorder %s27, 1
      %p45 = por %p43, %p44
      %p46 = scmp.ne.s32.totalorder %s35, %s36
      %p47 = scmp.eq.s32.totalorder %s27, 0
      %p48 = por %p46, %p47
      %p49 = scmp.ne.s32.totalorder %s35, %s36
      %p50 = scmp.eq.s32.totalorder %s28, 1
      %p51 = por %p49, %p50
      %p53 = scmp.ne.s32.totalorder %s36, %s52
      %p54 = scmp.eq.s32.totalorder %s28, 0
      %p55 = por %p53, %p54
      %s56 = ssub.s32 %s22, %s29
      %p57 = scmp.eq.s32.totalorder %s56, 0
      %s59 = sadd.s32 %s58, 1
      %s60 = scalar_select %p57, %s58, %s59
      %p63 = pneg %p57
      %p64 = scmp.eq.s32.totalorder %s22, 1
      %p65 = por %p63, %p64
      %p66 = scmp.ne.s32.totalorder %s58, %s61
      %p67 = scmp.eq.s32.totalorder %s22, 0
      %p68 = por %p66, %p67
      %p69 = scmp.ne.s32.totalorder %s58, %s61
      %p70 = scmp.eq.s32.totalorder %s27, 1
      %p71 = por %p69, %p70
      %p72 = scmp.ne.s32.totalorder %s61, %s62
      %p73 = scmp.eq.s32.totalorder %s27, 0
      %p74 = por %p72, %p73
      %p75 = scmp.ne.s32.totalorder %s61, %s62
      %p76 = scmp.eq.s32.totalorder %s28, 1
      %p77 = por %p75, %p76
      %p79 = scmp.ne.s32.totalorder %s62, %s78
      %p80 = scmp.eq.s32.totalorder %s28, 0
      %p81 = por %p79, %p80
      %s83 = sadd.s32 %s82, 1
      %p86 = scmp.eq.s32.totalorder %s22, 1
      %p87 = scmp.ne.s32.totalorder %s82, %s84
      %p88 = scmp.eq.s32.totalorder %s22, 0
      %p89 = por %p87, %p88
      %p90 = scmp.ne.s32.totalorder %s82, %s84
      %p91 = scmp.eq.s32.totalorder %s27, 1
      %p92 = por %p90, %p91
      %p93 = scmp.ne.s32.totalorder %s84, %s85
      %p94 = scmp.eq.s32.totalorder %s27, 0
      %p95 = por %p93, %p94
      %p96 = scmp.ne.s32.totalorder %s84, %s85
      %p97 = scmp.eq.s32.totalorder %s28, 1
      %p98 = por %p96, %p97
      %p100 = scmp.ne.s32.totalorder %s85, %s99
      %p101 = scmp.eq.s32.totalorder %s28, 0
      %p102 = por %p100, %p101
      %s104 = sadd.s32 %s103, 1
      %p107 = scmp.eq.s32.totalorder %s22, 1
      %p108 = scmp.ne.s32.totalorder %s103, %s105
      %p109 = scmp.eq.s32.totalorder %s22, 0
      %p110 = por %p108, %p109
      %p111 = scmp.ne.s32.totalorder %s103, %s105
      %p112 = scmp.eq.s32.totalorder %s27, 1
      %p113 = por %p111, %p112
      %p114 = scmp.ne.s32.totalorder %s105, %s106
      %p115 = scmp.eq.s32.totalorder %s27, 0
      %p116 = por %p114, %p115
      %p117 = scmp.ne.s32.totalorder %s105, %s106
      %p118 = scmp.eq.s32.totalorder %s28, 1
      %p119 = por %p117, %p118
      %p121 = scmp.ne.s32.totalorder %s106, %s120
      %p122 = scmp.eq.s32.totalorder %s28, 0
      %p123 = por %p121, %p122
      %s125 = sadd.s32 %s124, 1
      %p128 = scmp.eq.s32.totalorder %s22, 1
      %p129 = scmp.ne.s32.totalorder %s124, %s126
      %p130 = scmp.eq.s32.totalorder %s22, 0
      %p131 = por %p129, %p130
      %p132 = scmp.ne.s32.totalorder %s124, %s126
      %p133 = scmp.eq.s32.totalorder %s27, 1
      %p134 = por %p132, %p133
      %p135 = scmp.ne.s32.totalorder %s126, %s127
      %p136 = scmp.eq.s32.totalorder %s27, 0
      %p137 = por %p135, %p136
      %p138 = scmp.ne.s32.totalorder %s126, %s127
      %p139 = scmp.eq.s32.totalorder %s28, 1
      %p140 = por %p138, %p139
      %p142 = scmp.ne.s32.totalorder %s127, %s141
      %p143 = scmp.eq.s32.totalorder %s28, 0
      %p144 = por %p142, %p143
      %s146 = sadd.s32 %s145, 1
      %p149 = scmp.eq.s32.totalorder %s22, 1
      %p150 = scmp.ne.s32.totalorder %s145, %s147
      %p151 = scmp.eq.s32.totalorder %s22, 0
      %p152 = por %p150, %p151
      %p153 = scmp.ne.s32.totalorder %s145, %s147
      %p154 = scmp.eq.s32.totalorder %s27, 1
      %p155 = por %p153, %p154
      %p156 = scmp.ne.s32.totalorder %s147, %s148
      %p157 = scmp.eq.s32.totalorder %s27, 0
      %p158 = por %p156, %p157
      %p159 = scmp.ne.s32.totalorder %s147, %s148
      %p160 = scmp.eq.s32.totalorder %s28, 1
      %p161 = por %p159, %p160
      %p163 = scmp.ne.s32.totalorder %s148, %s162
      %p164 = scmp.eq.s32.totalorder %s28, 0
      %p165 = por %p163, %p164
      %s167 = sadd.s32 %s166, 1
      %p170 = scmp.eq.s32.totalorder %s22, 1
      %p171 = scmp.ne.s32.totalorder %s166, %s168
      %p172 = scmp.eq.s32.totalorder %s22, 0
      %p173 = por %p171, %p172
      %p174 = scmp.ne.s32.totalorder %s166, %s168
      %p175 = scmp.eq.s32.totalorder %s27, 1
      %p176 = por %p174, %p175
      %p177 = scmp.ne.s32.totalorder %s168, %s169
      %p178 = scmp.eq.s32.totalorder %s27, 0
      %p179 = por %p177, %p178
      %p180 = scmp.ne.s32.totalorder %s168, %s169
      %p181 = scmp.eq.s32.totalorder %s28, 1
      %p182 = por %p180, %p181
      %p184 = scmp.ne.s32.totalorder %s169, %s183
      %p185 = scmp.eq.s32.totalorder %s28, 0
      %p186 = por %p184, %p185
      %s188 = sadd.s32 %s187, 1
      %p191 = scmp.eq.s32.totalorder %s22, 1
      %p192 = scmp.ne.s32.totalorder %s187, %s189
      %p193 = scmp.eq.s32.totalorder %s22, 0
      %p194 = por %p192, %p193
      %p195 = scmp.ne.s32.totalorder %s187, %s189
      %p196 = scmp.eq.s32.totalorder %s27, 1
      %p197 = por %p195, %p196
      %p198 = scmp.ne.s32.totalorder %s189, %s190
      %p199 = scmp.eq.s32.totalorder %s27, 0
      %p200 = por %p198, %p199
      %p201 = scmp.ne.s32.totalorder %s189, %s190
      %p202 = scmp.eq.s32.totalorder %s28, 1
      %p203 = por %p201, %p202
      %p205 = scmp.ne.s32.totalorder %s190, %s204
      %p206 = scmp.eq.s32.totalorder %s28, 0
      %p207 = por %p205, %p206
      %s209 = sadd.s32 %s208, 1
      %p212 = scmp.eq.s32.totalorder %s22, 1
      %p213 = scmp.ne.s32.totalorder %s208, %s210
      %p214 = scmp.eq.s32.totalorder %s22, 0
      %p215 = por %p213, %p214
      %p216 = scmp.ne.s32.totalorder %s208, %s210
      %p217 = scmp.eq.s32.totalorder %s27, 1
      %p218 = por %p216, %p217
      %p219 = scmp.ne.s32.totalorder %s210, %s211
      %p220 = scmp.eq.s32.totalorder %s27, 0
      %p221 = por %p219, %p220
      %p222 = scmp.ne.s32.totalorder %s210, %s211
      %p223 = scmp.eq.s32.totalorder %s28, 1
      %p224 = por %p222, %p223
      %p226 = scmp.ne.s32.totalorder %s211, %s225
      %p227 = scmp.eq.s32.totalorder %s28, 0
      %p228 = por %p226, %p227
      %s230 = sadd.s32 %s229, 1
      %p233 = scmp.eq.s32.totalorder %s22, 1
      %p234 = scmp.ne.s32.totalorder %s229, %s231
      %p235 = scmp.eq.s32.totalorder %s22, 0
      %p236 = por %p234, %p235
      %p237 = scmp.ne.s32.totalorder %s229, %s231
      %p238 = scmp.eq.s32.totalorder %s27, 1
      %p239 = por %p237, %p238
      %p240 = scmp.ne.s32.totalorder %s231, %s232
      %p241 = scmp.eq.s32.totalorder %s27, 0
      %p242 = por %p240, %p241
      %p243 = scmp.ne.s32.totalorder %s231, %s232
      %p244 = scmp.eq.s32.totalorder %s28, 1
      %p245 = por %p243, %p244
      %p247 = scmp.ne.s32.totalorder %s232, %s246
      %p248 = scmp.eq.s32.totalorder %s28, 0
      %p249 = por %p247, %p248
      %s250 = ssub.s32 %s22, %s29
      %p251 = scmp.eq.s32.totalorder %s250, 0
      %s253 = sadd.s32 %s252, 1
      %s254 = scalar_select %p251, %s252, %s253
      %p257 = pneg %p251
      %p258 = scmp.eq.s32.totalorder %s22, 1
      %p259 = por %p257, %p258
      %p260 = scmp.ne.s32.totalorder %s252, %s255
      %p261 = scmp.eq.s32.totalorder %s22, 0
      %p262 = por %p260, %p261
      %p263 = scmp.ne.s32.totalorder %s252, %s255
      %p264 = scmp.eq.s32.totalorder %s27, 1
      %p265 = por %p263, %p264
      %p266 = scmp.ne.s32.totalorder %s255, %s256
      %p267 = scmp.eq.s32.totalorder %s27, 0
      %p268 = por %p266, %p267
      %p269 = scmp.ne.s32.totalorder %s255, %s256
      %p270 = scmp.eq.s32.totalorder %s28, 1
      %p271 = por %p269, %p270
      %p273 = scmp.ne.s32.totalorder %s256, %s272
      %p274 = scmp.eq.s32.totalorder %s28, 0
      %p275 = por %p273, %p274
      %s276 = ssub.s32 %s22, %s29
      %p277 = scmp.eq.s32.totalorder %s276, 0
      %s279 = sadd.s32 %s278, 1
      %s280 = scalar_select %p277, %s278, %s279
      %p283 = pneg %p277
      %p284 = scmp.eq.s32.totalorder %s22, 1
      %p285 = por %p283, %p284
      %p286 = scmp.ne.s32.totalorder %s278, %s281
      %p287 = scmp.eq.s32.totalorder %s22, 0
      %p288 = por %p286, %p287
      %p289 = scmp.ne.s32.totalorder %s278, %s281
      %p290 = scmp.eq.s32.totalorder %s27, 1
      %p291 = por %p289, %p290
      %p292 = scmp.ne.s32.totalorder %s281, %s282
      %p293 = scmp.eq.s32.totalorder %s27, 0
      %p294 = por %p292, %p293
      %p295 = scmp.ne.s32.totalorder %s281, %s282
      %p296 = scmp.eq.s32.totalorder %s28, 1
      %p297 = por %p295, %p296
      %p299 = scmp.ne.s32.totalorder %s282, %s298
      %p300 = scmp.eq.s32.totalorder %s28, 0
      %p301 = por %p299, %p300
      %p302 = scmp.le.s32.totalorder 1, %s22
      %p303 = scmp.lt.s32.totalorder %s22, 3
      %p304 = pnand %p302, %p303
      %p305 = pneg %p304
      // Predicated region
      $region9: #{tpu_custom_call.1} parent=5 // pred_check
        _
      $region10: #{tpu_custom_call.1} parent=5 // pred_check_branch
        %307 = sbr.rel (%p304) target = $region12
      $region11: #{tpu_custom_call.1} parent=5 // pred_region
        %s308 = ssub.s32 %s22, 1
        // Predicated region
        $region13: #{tpu_custom_call.1} parent=11 // pred_check
          %p309 = pneg %p95
        $region14: #{tpu_custom_call.1} parent=11 // pred_check_branch
          %311 = sbr.rel (%p309) target = $region16
        $region15: #{tpu_custom_call.1} parent=11 // pred_region
          _
        $region16: #{tpu_custom_call.1} parent=11 // pred_fallthru
          _
        // Predicated region
        $region17: #{tpu_custom_call.1} parent=11 // pred_check
          %p312 = pneg %p116
        $region18: #{tpu_custom_call.1} parent=11 // pred_check_branch
          %314 = sbr.rel (%p312) target = $region20
        $region19: #{tpu_custom_call.1} parent=11 // pred_region
          _
        $region20: #{tpu_custom_call.1} parent=11 // pred_fallthru
          _
        // Predicated region
        $region21: #{tpu_custom_call.1} parent=11 // pred_check
          %p315 = pneg %p137
        $region22: #{tpu_custom_call.1} parent=11 // pred_check_branch
          %317 = sbr.rel (%p315) target = $region24
        $region23: #{tpu_custom_call.1} parent=11 // pred_region
          _
        $region24: #{tpu_custom_call.1} parent=11 // pred_fallthru
          _
        // Predicated region
        $region25: #{tpu_custom_call.1} parent=11 // pred_check
          %p318 = pneg %p158
        $region26: #{tpu_custom_call.1} parent=11 // pred_check_branch
          %320 = sbr.rel (%p318) target = $region28
        $region27: #{tpu_custom_call.1} parent=11 // pred_region
          _
        $region28: #{tpu_custom_call.1} parent=11 // pred_fallthru
          _
        // Predicated region
        $region29: #{tpu_custom_call.1} parent=11 // pred_check
          %p321 = pneg %p179
        $region30: #{tpu_custom_call.1} parent=11 // pred_check_branch
          %323 = sbr.rel (%p321) target = $region32
        $region31: #{tpu_custom_call.1} parent=11 // pred_region
          _
        $region32: #{tpu_custom_call.1} parent=11 // pred_fallthru
          _
        // Predicated region
        $region33: #{tpu_custom_call.1} parent=11 // pred_check
          %p324 = pneg %p200
        $region34: #{tpu_custom_call.1} parent=11 // pred_check_branch
          %326 = sbr.rel (%p324) target = $region36
        $region35: #{tpu_custom_call.1} parent=11 // pred_region
          _
        $region36: #{tpu_custom_call.1} parent=11 // pred_fallthru
          _
        // Predicated region
        $region37: #{tpu_custom_call.1} parent=11 // pred_check
          %p327 = pneg %p221
        $region38: #{tpu_custom_call.1} parent=11 // pred_check_branch
          %329 = sbr.rel (%p327) target = $region40
        $region39: #{tpu_custom_call.1} parent=11 // pred_region
          _
        $region40: #{tpu_custom_call.1} parent=11 // pred_fallthru
          _
        // Predicated region
        $region41: #{tpu_custom_call.1} parent=11 // pred_check
          %p330 = pneg %p242
        $region42: #{tpu_custom_call.1} parent=11 // pred_check_branch
          %332 = sbr.rel (%p330) target = $region44
        $region43: #{tpu_custom_call.1} parent=11 // pred_region
          _
        $region44: #{tpu_custom_call.1} parent=11 // pred_fallthru
          _
      $region12: #{tpu_custom_call.1} parent=5 // pred_fallthru
        _
      %p333 = scmp.lt.s32.totalorder %s22, 2
      // Predicated region
      $region45: #{tpu_custom_call.1} parent=5 // pred_check
        %p334 = pneg %p333
      $region46: #{tpu_custom_call.1} parent=5 // pred_check_branch
        %336 = sbr.rel (%p334) target = $region48
      $region47: #{tpu_custom_call.1} parent=5 // pred_region
        // Predicated region
        $region49: #{tpu_custom_call.1} parent=47 // pred_check
          %p337 = pneg %p42
        $region50: #{tpu_custom_call.1} parent=47 // pred_check_branch
          %339 = sbr.rel (%p337) target = $region52
        $region51: #{tpu_custom_call.1} parent=47 // pred_region
          %s340 = smul.u32 24, %s22
          %s341 = ssub.s32 30, %s340
          %p342 = scmp.lt.s32.totalorder %s341, 24
          %s343 = scalar_select %p342, %s341, 24
          %s344 = smul.u32 128, %s343
          %p345 = scmp.lt.s32.totalorder %s340, 29
          %s346 = scalar_select %p345, %s340, 29
          %s347 = smul.addr %s346, 8
          %s348 = scalar_lea.vmem %s0, %s347
          %s349 = smul.u32 24, %s22
          %s350 = ssub.s32 30, %s349
          %p351 = scmp.lt.s32.totalorder %s350, 24
          %s352 = scalar_select %p351, %s350, 24
          %s353 = smul.u32 128, %s352
        $region52: #{tpu_custom_call.1} parent=47 // pred_fallthru
          _
        // Predicated region
        $region53: #{tpu_custom_call.1} parent=47 // pred_check
          %p354 = pneg %p68
        $region54: #{tpu_custom_call.1} parent=47 // pred_check_branch
          %356 = sbr.rel (%p354) target = $region56
        $region55: #{tpu_custom_call.1} parent=47 // pred_region
          %s357 = smul.u32 2, %s22
          %s358 = ssub.s32 3, %s357
          %p359 = scmp.lt.s32.totalorder %s358, 2
          %s360 = scalar_select %p359, %s358, 2
          %s361 = smul.u32 128, %s360
          %p362 = scmp.lt.s32.totalorder %s357, 2
          %s363 = scalar_select %p362, %s357, 2
          %s364 = smul.addr %s363, 8
          %s365 = scalar_lea.vmem %s1, %s364
          %s366 = smul.u32 2, %s22
          %s367 = ssub.s32 3, %s366
          %p368 = scmp.lt.s32.totalorder %s367, 2
          %s369 = scalar_select %p368, %s367, 2
          %s370 = smul.u32 128, %s369
        $region56: #{tpu_custom_call.1} parent=47 // pred_fallthru
          _
      $region48: #{tpu_custom_call.1} parent=5 // pred_fallthru
        _
      %p371 = scmp.le.s32.totalorder 1, %s22
      %p372 = scmp.lt.s32.totalorder %s22, 3
      %p373 = pnand %p371, %p372
      %p374 = pneg %p373
      // Predicated region
      $region57: #{tpu_custom_call.1} parent=5 // pred_check
        _
      $region58: #{tpu_custom_call.1} parent=5 // pred_check_branch
        %376 = sbr.rel (%p373) target = $region60
      $region59: #{tpu_custom_call.1} parent=5 // pred_region
        %s377 = ssub.s32 %s22, 1
        %s378 = smul.u32 24, %s27
        %s379 = ssub.s32 30, %s378
        %p380 = scmp.lt.s32.totalorder %s379, 24
        %s381 = scalar_select %p380, %s379, 24
        %s382 = smul.u32 128, %s381
        %p383 = scmp.lt.s32.totalorder %s378, 29
        %s384 = scalar_select %p383, %s378, 29
        %s385 = smul.addr %s384, 8
        %s386 = scalar_lea.vmem %s0, %s385
        %p387 = pneg %p48
        %p388 = pneg %p45
        %s389 = smul.u32 2, %s27
        %s390 = ssub.s32 3, %s389
        %p391 = scmp.lt.s32.totalorder %s390, 2
        %s392 = scalar_select %p391, %s390, 2
        %s393 = smul.u32 128, %s392
        %p394 = scmp.lt.s32.totalorder %s389, 2
        %s395 = scalar_select %p394, %s389, 2
        %s396 = smul.addr %s395, 8
        %s397 = scalar_lea.vmem %s1, %s396
        %p398 = pneg %p74
        %p399 = pneg %p71
        %p400 = pneg %p95
        %p401 = pneg %p92
        %p402 = pneg %p116
        %p403 = pneg %p113
        %p404 = pneg %p137
        %p405 = pneg %p134
        %p406 = pneg %p158
        %p407 = pneg %p155
        %p408 = pneg %p179
        %p409 = pneg %p176
        %p410 = pneg %p200
        %p411 = pneg %p197
        %p412 = pneg %p221
        %p413 = pneg %p218
        %p414 = pneg %p242
        %p415 = pneg %p239
        %p416 = pneg %p268
        %p417 = pneg %p265
        %s418 = sand.u32 %s255, 1
        %s419 = scalar_lea.sflag [#allocation4], %s418
        %s420 = sand.u32 %s255, 1
        %s421 = smul.addr %s420, 16
        %s422 = scalar_lea.vmem [#allocation3], %s421
        %p423 = pneg %p294
        %p424 = pneg %p291
        %s425 = sand.u32 %s281, 1
        %s426 = sand.u32 %s281, 1
        %s427 = smul.addr %s426, 192
        %s428 = scalar_lea.vmem [#allocation5], %s427
        %s429 = smul.u32 24, %s27
        %s430 = ssub.s32 30, %s429
        %p431 = scmp.lt.s32.totalorder %s430, 24
        %s432 = scalar_select %p431, %s430, 24
        %s433 = smul.u32 128, %s432
        %p434 = scmp.lt.s32.totalorder %s429, 29
        %s435 = scalar_select %p434, %s429, 29
        %s436 = smul.addr %s435, 8
        %s437 = scalar_lea.vmem %s0, %s436
        %s438 = smul.u32 24, %s27
        %s439 = ssub.s32 30, %s438
        %p440 = scmp.lt.s32.totalorder %s439, 24
        %s441 = scalar_select %p440, %s439, 24
        %s442 = smul.u32 128, %s441
        %s443 = smul.u32 2, %s27
        %s444 = ssub.s32 3, %s443
        %p445 = scmp.lt.s32.totalorder %s444, 2
        %s446 = scalar_select %p445, %s444, 2
        %s447 = smul.u32 128, %s446
        %p448 = scmp.lt.s32.totalorder %s443, 2
        %s449 = scalar_select %p448, %s443, 2
        %s450 = smul.addr %s449, 8
        %s451 = scalar_lea.vmem %s1, %s450
        %s452 = smul.u32 2, %s27
        %s453 = ssub.s32 3, %s452
        %p454 = scmp.lt.s32.totalorder %s453, 2
        %s455 = scalar_select %p454, %s453, 2
        %s456 = smul.u32 128, %s455
        %s457 = smul.u32 2, %s27
        %s458 = ssub.s32 3, %s457
        %p459 = scmp.lt.s32.totalorder %s458, 2
        %s460 = scalar_select %p459, %s458, 2
        %s461 = smul.u32 128, %s460
        %s462 = smul.u32 24, %s27
        %s463 = ssub.s32 30, %s462
        %p464 = scmp.lt.s32.totalorder %s463, 24
        %s465 = scalar_select %p464, %s463, 24
        %s466 = smul.u32 128, %s465
        %s467 = smul.u32 %s27, 192
        %v468 = vlaneseq
        %v469 = vshrl.u32 %v468, 7
        %v470 = vadd.s32 %v469, 8
        %v471 = vadd.s32 %v469, 16
        %v472 = vadd.s32 %v469, 24
        %v473 = vadd.s32 %v469, 32
        %v474 = vadd.s32 %v469, 40
        %v475 = vadd.s32 %v469, 48
        %v476 = vadd.s32 %v469, 56
        %v477 = vadd.s32 %v469, 64
        %v478 = vadd.s32 %v469, 72
        %v479 = vadd.s32 %v469, 80
        %v480 = vadd.s32 %v469, 88
        %v481 = vadd.s32 %v469, 96
        %v482 = vadd.s32 %v469, 104
        %v483 = vadd.s32 %v469, 112
        %v484 = vadd.s32 %v469, 120
        %v485 = vadd.s32 %v469, 128
        %v486 = vadd.s32 %v469, 136
        %v487 = vadd.s32 %v469, 144
        %v488 = vadd.s32 %v469, 152
        %v489 = vadd.s32 %v469, 160
        %v490 = vadd.s32 %v469, 168
        %v491 = vadd.s32 %v469, 176
        %v492 = vadd.s32 %v469, 184
        %v493 = vstv %s467
        %v494 = vadd.s32 %v493, %v469
        %v495 = vadd.s32 %v493, %v470
        %v496 = vadd.s32 %v493, %v471
        %v497 = vadd.s32 %v493, %v472
        %v498 = vadd.s32 %v493, %v473
        %v499 = vadd.s32 %v493, %v474
        %v500 = vadd.s32 %v493, %v475
        %v501 = vadd.s32 %v493, %v476
        %v502 = vadd.s32 %v493, %v477
        %v503 = vadd.s32 %v493, %v478
        %v504 = vadd.s32 %v493, %v479
        %v505 = vadd.s32 %v493, %v480
        %v506 = vadd.s32 %v493, %v481
        %v507 = vadd.s32 %v493, %v482
        %v508 = vadd.s32 %v493, %v483
        %v509 = vadd.s32 %v493, %v484
        %v510 = vadd.s32 %v493, %v485
        %v511 = vadd.s32 %v493, %v486
        %v512 = vadd.s32 %v493, %v487
        %v513 = vadd.s32 %v493, %v488
        %v514 = vadd.s32 %v493, %v489
        %v515 = vadd.s32 %v493, %v490
        %v516 = vadd.s32 %v493, %v491
        %v517 = vadd.s32 %v493, %v492
        %vm518 = vcmp.lt.s32.totalorder %v494, 240
        %vm519 = vcmp.lt.s32.totalorder %v495, 240
        %vm520 = vcmp.lt.s32.totalorder %v496, 240
        %vm521 = vcmp.lt.s32.totalorder %v497, 240
        %vm522 = vcmp.lt.s32.totalorder %v498, 240
        %vm523 = vcmp.lt.s32.totalorder %v499, 240
        %vm524 = vcmp.lt.s32.totalorder %v500, 240
        %vm525 = vcmp.lt.s32.totalorder %v501, 240
        %vm526 = vcmp.lt.s32.totalorder %v502, 240
        %vm527 = vcmp.lt.s32.totalorder %v503, 240
        %vm528 = vcmp.lt.s32.totalorder %v504, 240
        %vm529 = vcmp.lt.s32.totalorder %v505, 240
        %vm530 = vcmp.lt.s32.totalorder %v506, 240
        %vm531 = vcmp.lt.s32.totalorder %v507, 240
        %vm532 = vcmp.lt.s32.totalorder %v508, 240
        %vm533 = vcmp.lt.s32.totalorder %v509, 240
        %vm534 = vcmp.lt.s32.totalorder %v510, 240
        %vm535 = vcmp.lt.s32.totalorder %v511, 240
        %vm536 = vcmp.lt.s32.totalorder %v512, 240
        %vm537 = vcmp.lt.s32.totalorder %v513, 240
        %vm538 = vcmp.lt.s32.totalorder %v514, 240
        %vm539 = vcmp.lt.s32.totalorder %v515, 240
        %vm540 = vcmp.lt.s32.totalorder %v516, 240
        %vm541 = vcmp.lt.s32.totalorder %v517, 240
        %s542 = smul.u32 %s27, 16
        %v543 = vstv %s542
        %v544 = vadd.s32 %v543, %v469
        %v545 = vadd.s32 %v543, %v470
        %vm546 = vcmp.lt.s32.totalorder %v544, 20
        %vm547 = vcmp.lt.s32.totalorder %v545, 20
        %v548 = vld [vmem:[%s451] sm:$0xff]
        %v549 = vld [vmem:[%s451 + $0x8] sm:$0xff]
        %v550 = vld [vmem:[%s4] sm:$0xff]
        %v551 = vld [vmem:[%s4 + $0x8] sm:$0xff]
        %v552 = vld [vmem:[%s4 + $0x10] sm:$0xff]
        %v553 = vld [vmem:[%s4 + $0x18] sm:$0xff]
        %v554 = vld [vmem:[%s5] sm:$0x1]
        %v556 = vlaneseq
        %v557 = vshrl.u32 %v556, 7
        %v558 = vsub.s32 0, %v557
        %v559 = vrot.slane %v554, %v558
        %vm561 = vcmask 261120
        %v563 = vsel %vm561, %v548, 0
        %v566 = vsel %vm561, %v549, 0
        %568 = vmatprep.subr.mxu0 0.0
        %569 = vmatpush1.msra.mxu0 %v550
        %570 = vmatprep.subr.mxu0 0.0
        %571 = vmatpush1.msra.mxu0 %v551
        %572 = vmatprep.subr.mxu0 0.0
        %573 = vmatpush1.msra.mxu0 %v552
        %574 = vmatprep.subr.mxu0 0.0
        %575 = vmatpush1.msra.mxu0 %v553
        %576 = vmatprep.subr.mxu0 0.0
        %577 = vmatpush1.msra.mxu0 0.0
        %578 = vmatprep.subr.mxu0 0.0
        %579 = vmatpush1.msra.mxu0 0.0
        %580 = vmatprep.subr.mxu0 0.0
        %581 = vmatpush1.msra.mxu0 0.0
        %582 = vmatprep.subr.mxu0 0.0
        %583 = vmatpush1.msra.mxu0 0.0
        %584 = vmatprep.subr.mxu0 0.0
        %585 = vmatpush1.msra.mxu0 0.0
        %586 = vmatprep.subr.mxu0 0.0
        %587 = vmatpush1.msra.mxu0 0.0
        %588 = vmatprep.subr.mxu0 0.0
        %589 = vmatpush1.msra.mxu0 0.0
        %590 = vmatprep.subr.mxu0 0.0
        %591 = vmatpush1.msra.mxu0 0.0
        %592 = vmatprep.subr.mxu0 0.0
        %593 = vmatpush1.msra.mxu0 0.0
        %594 = vmatprep.subr.mxu0 0.0
        %595 = vmatpush1.msra.mxu0 0.0
        %596 = vmatprep.subr.mxu0 0.0
        %597 = vmatpush1.msra.mxu0 0.0
        %598 = vmatprep.subr.mxu0 0.0
        %599 = vmatpush1.msra.mxu0 0.0
        %600 = vmatprep.subr.mxu0 0.0
        %601 = vmatpush1.msra.mxu0 0.0
        %602 = vmatprep.subr.mxu0 0.0
        %603 = vmatpush1.msra.mxu0 0.0
        %604 = vmatprep.subr.mxu0 0.0
        %605 = vmatpush1.msra.mxu0 0.0
        %606 = vmatprep.subr.mxu0 0.0
        %607 = vmatpush1.msra.mxu0 0.0
        %608 = vmatprep.subr.mxu0 0.0
        %609 = vmatpush1.msra.mxu0 0.0
        %610 = vmatprep.subr.mxu0 0.0
        %611 = vmatpush1.msra.mxu0 0.0
        %612 = vmatprep.subr.mxu0 0.0
        %613 = vmatpush1.msra.mxu0 0.0
        %614 = vmatprep.subr.mxu0 0.0
        %615 = vmatpush1.msra.mxu0 0.0
        %616 = vmatprep.subr.mxu0 0.0
        %617 = vmatpush1.msra.mxu0 0.0
        %618 = vmatprep.subr.mxu0 0.0
        %619 = vmatpush1.msra.mxu0 0.0
        %620 = vmatprep.subr.mxu0 0.0
        %621 = vmatpush1.msra.mxu0 0.0
        %622 = vmatprep.subr.mxu0 0.0
        %623 = vmatpush1.msra.mxu0 0.0
        %624 = vmatprep.subr.mxu0 0.0
        %625 = vmatpush1.msra.mxu0 0.0
        %626 = vmatprep.subr.mxu0 0.0
        %627 = vmatpush1.msra.mxu0 0.0
        %628 = vmatprep.subr.mxu0 0.0
        %629 = vmatpush1.msra.mxu0 0.0
        %630 = vmatprep.subr.mxu0 0.0
        %631 = vmatpush1.msra.mxu0 0.0
        %632 = vmatprep.mubr.f32.mxu0 0.0
        %633 = vmatmul.mubr.f32.gmra.mrb[0].mxu0 %v563
        %v634 = vpop.f32.mrb[0].mxu0
        %v635 = vadd.f32 %v559, %v634
        %v636 = vpop.f32.mrb[0].mxu0
        %637 = vmatprep.mubr.f32.mxu0 0.0
        %638 = vmatmul.mubr.f32.gmra.mrb[0].mxu0 %v566
        %v639 = vpop.f32.mrb[0].mxu0
        %v640 = vadd.f32 %v559, %v639
        %v641 = vpop.f32.mrb[0].mxu0
        %642 = vdwg.mxu0
        %v643 = vtanh.pop %v635
        %v644 = vtanh.pop %v640
        %v645 = vld [vmem:[%s6] sm:$0x1]
        %v647 = vlaneseq
        %v648 = vshrl.u32 %v647, 7
        %v649 = vsub.s32 0, %v648
        %v650 = vrot.slane %v645, %v649
        %v652 = vmul.f32 %v643, %v650
        %v653 = vmul.f32 %v644, %v650
        %v654 = vsel %vm546, 1, 0
        %v655 = vsel %vm547, 1, 0
        %vm656 = vcmp.eq.s32.totalorder %v654, 1
        %vm657 = vcmp.eq.s32.totalorder %v655, 1
        %v658 = vsel %vm656, %v652, 0.0
        %v659 = vsel %vm657, %v653, 0.0
        %v660 = vld [vmem:[%s437] sm:$0xff]
        %v661 = vld [vmem:[%s437 + $0x8] sm:$0xff]
        %v662 = vld [vmem:[%s437 + $0x10] sm:$0xff]
        %v663 = vld [vmem:[%s437 + $0x18] sm:$0xff]
        %v664 = vld [vmem:[%s437 + $0x20] sm:$0xff]
        %v665 = vld [vmem:[%s437 + $0x28] sm:$0xff]
        %v666 = vld [vmem:[%s437 + $0x30] sm:$0xff]
        %v667 = vld [vmem:[%s437 + $0x38] sm:$0xff]
        %v668 = vld [vmem:[%s437 + $0x40] sm:$0xff]
        %v669 = vld [vmem:[%s437 + $0x48] sm:$0xff]
        %v670 = vld [vmem:[%s437 + $0x50] sm:$0xff]
        %v671 = vld [vmem:[%s437 + $0x58] sm:$0xff]
        %v672 = vld [vmem:[%s437 + $0x60] sm:$0xff]
        %v673 = vld [vmem:[%s437 + $0x68] sm:$0xff]
        %v674 = vld [vmem:[%s437 + $0x70] sm:$0xff]
        %v675 = vld [vmem:[%s437 + $0x78] sm:$0xff]
        %v676 = vld [vmem:[%s437 + $0x80] sm:$0xff]
        %v677 = vld [vmem:[%s437 + $0x88] sm:$0xff]
        %v678 = vld [vmem:[%s437 + $0x90] sm:$0xff]
        %v679 = vld [vmem:[%s437 + $0x98] sm:$0xff]
        %v680 = vld [vmem:[%s437 + $0xa0] sm:$0xff]
        %v681 = vld [vmem:[%s437 + $0xa8] sm:$0xff]
        %v682 = vld [vmem:[%s437 + $0xb0] sm:$0xff]
        %v683 = vld [vmem:[%s437 + $0xb8] sm:$0xff]
        %v684 = vld [vmem:[%s2] sm:$0xff]
        %v685 = vld [vmem:[%s2 + $0x8] sm:$0xff]
        %v686 = vld [vmem:[%s2 + $0x10] sm:$0xff]
        %v687 = vld [vmem:[%s2 + $0x18] sm:$0xff]
        %v688 = vld [vmem:[%s3] sm:$0x1]
        %v690 = vlaneseq
        %v691 = vshrl.u32 %v690, 7
        %v692 = vsub.s32 0, %v691
        %v693 = vrot.slane %v688, %v692
        %v696 = vsel %vm561, %v660, 0
        %v699 = vsel %vm561, %v661, 0
        %v702 = vsel %vm561, %v662, 0
        %v705 = vsel %vm561, %v663, 0
        %v708 = vsel %vm561, %v664, 0
        %v711 = vsel %vm561, %v665, 0
        %v714 = vsel %vm561, %v666, 0
        %v717 = vsel %vm561, %v667, 0
        %v720 = vsel %vm561, %v668, 0
        %v723 = vsel %vm561, %v669, 0
        %v726 = vsel %vm561, %v670, 0
        %v729 = vsel %vm561, %v671, 0
        %v732 = vsel %vm561, %v672, 0
        %v735 = vsel %vm561, %v673, 0
        %v738 = vsel %vm561, %v674, 0
        %v741 = vsel %vm561, %v675, 0
        %v744 = vsel %vm561, %v676, 0
        %v747 = vsel %vm561, %v677, 0
        %v750 = vsel %vm561, %v678, 0
        %v753 = vsel %vm561, %v679, 0
        %v756 = vsel %vm561, %v680, 0
        %v759 = vsel %vm561, %v681, 0
        %v762 = vsel %vm561, %v682, 0
        %v765 = vsel %vm561, %v683, 0
        %767 = vmatprep.subr.mxu0 0.0
        %768 = vmatpush1.msra.mxu0 %v684
        %769 = vmatprep.subr.mxu0 0.0
        %770 = vmatpush1.msra.mxu0 %v685
        %771 = vmatprep.subr.mxu0 0.0
        %772 = vmatpush1.msra.mxu0 %v686
        %773 = vmatprep.subr.mxu0 0.0
        %774 = vmatpush1.msra.mxu0 %v687
        %775 = vmatprep.subr.mxu0 0.0
        %776 = vmatpush1.msra.mxu0 0.0
        %777 = vmatprep.subr.mxu0 0.0
        %778 = vmatpush1.msra.mxu0 0.0
        %779 = vmatprep.subr.mxu0 0.0
        %780 = vmatpush1.msra.mxu0 0.0
        %781 = vmatprep.subr.mxu0 0.0
        %782 = vmatpush1.msra.mxu0 0.0
        %783 = vmatprep.subr.mxu0 0.0
        %784 = vmatpush1.msra.mxu0 0.0
        %785 = vmatprep.subr.mxu0 0.0
        %786 = vmatpush1.msra.mxu0 0.0
        %787 = vmatprep.subr.mxu0 0.0
        %788 = vmatpush1.msra.mxu0 0.0
        %789 = vmatprep.subr.mxu0 0.0
        %790 = vmatpush1.msra.mxu0 0.0
        %791 = vmatprep.subr.mxu0 0.0
        %792 = vmatpush1.msra.mxu0 0.0
        %793 = vmatprep.subr.mxu0 0.0
        %794 = vmatpush1.msra.mxu0 0.0
        %795 = vmatprep.subr.mxu0 0.0
        %796 = vmatpush1.msra.mxu0 0.0
        %797 = vmatprep.subr.mxu0 0.0
        %798 = vmatpush1.msra.mxu0 0.0
        %799 = vmatprep.subr.mxu0 0.0
        %800 = vmatpush1.msra.mxu0 0.0
        %801 = vmatprep.subr.mxu0 0.0
        %802 = vmatpush1.msra.mxu0 0.0
        %803 = vmatprep.subr.mxu0 0.0
        %804 = vmatpush1.msra.mxu0 0.0
        %805 = vmatprep.subr.mxu0 0.0
        %806 = vmatpush1.msra.mxu0 0.0
        %807 = vmatprep.subr.mxu0 0.0
        %808 = vmatpush1.msra.mxu0 0.0
        %809 = vmatprep.subr.mxu0 0.0
        %810 = vmatpush1.msra.mxu0 0.0
        %811 = vmatprep.subr.mxu0 0.0
        %812 = vmatpush1.msra.mxu0 0.0
        %813 = vmatprep.subr.mxu0 0.0
        %814 = vmatpush1.msra.mxu0 0.0
        %815 = vmatprep.subr.mxu0 0.0
        %816 = vmatpush1.msra.mxu0 0.0
        %817 = vmatprep.subr.mxu0 0.0
        %818 = vmatpush1.msra.mxu0 0.0
        %819 = vmatprep.subr.mxu0 0.0
        %820 = vmatpush1.msra.mxu0 0.0
        %821 = vmatprep.subr.mxu0 0.0
        %822 = vmatpush1.msra.mxu0 0.0
        %823 = vmatprep.subr.mxu0 0.0
        %824 = vmatpush1.msra.mxu0 0.0
        %825 = vmatprep.subr.mxu0 0.0
        %826 = vmatpush1.msra.mxu0 0.0
        %827 = vmatprep.subr.mxu0 0.0
        %828 = vmatpush1.msra.mxu0 0.0
        %829 = vmatprep.subr.mxu0 0.0
        %830 = vmatpush1.msra.mxu0 0.0
        %831 = vmatprep.mubr.f32.mxu0 0.0
        %832 = vmatmul.mubr.f32.gmra.mrb[0].mxu0 %v696
        %v833 = vpop.f32.mrb[0].mxu0
        %v834 = vadd.f32 %v693, %v833
        %v835 = vpop.f32.mrb[0].mxu0
        %836 = vmatprep.mubr.f32.mxu0 0.0
        %837 = vmatmul.mubr.f32.gmra.mrb[0].mxu0 %v699
        %v838 = vpop.f32.mrb[0].mxu0
        %v839 = vadd.f32 %v693, %v838
        %v840 = vpop.f32.mrb[0].mxu0
        %841 = vmatprep.mubr.f32.mxu0 0.0
        %842 = vmatmul.mubr.f32.gmra.mrb[0].mxu0 %v702
        %v843 = vpop.f32.mrb[0].mxu0
        %v844 = vadd.f32 %v693, %v843
        %v845 = vpop.f32.mrb[0].mxu0
        %846 = vmatprep.mubr.f32.mxu0 0.0
        %847 = vmatmul.mubr.f32.gmra.mrb[0].mxu0 %v705
        %v848 = vpop.f32.mrb[0].mxu0
        %v849 = vadd.f32 %v693, %v848
        %v850 = vpop.f32.mrb[0].mxu0
        %851 = vmatprep.mubr.f32.mxu0 0.0
        %852 = vmatmul.mubr.f32.gmra.mrb[0].mxu0 %v708
        %v853 = vpop.f32.mrb[0].mxu0
        %v854 = vadd.f32 %v693, %v853
        %v855 = vpop.f32.mrb[0].mxu0
        %856 = vmatprep.mubr.f32.mxu0 0.0
        %857 = vmatmul.mubr.f32.gmra.mrb[0].mxu0 %v711
        %v858 = vpop.f32.mrb[0].mxu0
        %v859 = vadd.f32 %v693, %v858
        %v860 = vpop.f32.mrb[0].mxu0
        %861 = vmatprep.mubr.f32.mxu0 0.0
        %862 = vmatmul.mubr.f32.gmra.mrb[0].mxu0 %v714
        %v863 = vpop.f32.mrb[0].mxu0
        %v864 = vadd.f32 %v693, %v863
        %v865 = vpop.f32.mrb[0].mxu0
        %866 = vmatprep.mubr.f32.mxu0 0.0
        %867 = vmatmul.mubr.f32.gmra.mrb[0].mxu0 %v717
        %v868 = vpop.f32.mrb[0].mxu0
        %v869 = vadd.f32 %v693, %v868
        %v870 = vpop.f32.mrb[0].mxu0
        %871 = vmatprep.mubr.f32.mxu0 0.0
        %872 = vmatmul.mubr.f32.gmra.mrb[0].mxu0 %v720
        %v873 = vpop.f32.mrb[0].mxu0
        %v874 = vadd.f32 %v693, %v873
        %v875 = vpop.f32.mrb[0].mxu0
        %876 = vmatprep.mubr.f32.mxu0 0.0
        %877 = vmatmul.mubr.f32.gmra.mrb[0].mxu0 %v723
        %v878 = vpop.f32.mrb[0].mxu0
        %v879 = vadd.f32 %v693, %v878
        %v880 = vpop.f32.mrb[0].mxu0
        %881 = vmatprep.mubr.f32.mxu0 0.0
        %882 = vmatmul.mubr.f32.gmra.mrb[0].mxu0 %v726
        %v883 = vpop.f32.mrb[0].mxu0
        %v884 = vadd.f32 %v693, %v883
        %v885 = vpop.f32.mrb[0].mxu0
        %886 = vmatprep.mubr.f32.mxu0 0.0
        %887 = vmatmul.mubr.f32.gmra.mrb[0].mxu0 %v729
        %v888 = vpop.f32.mrb[0].mxu0
        %v889 = vadd.f32 %v693, %v888
        %v890 = vpop.f32.mrb[0].mxu0
        %891 = vmatprep.mubr.f32.mxu0 0.0
        %892 = vmatmul.mubr.f32.gmra.mrb[0].mxu0 %v732
        %v893 = vpop.f32.mrb[0].mxu0
        %v894 = vadd.f32 %v693, %v893
        %v895 = vpop.f32.mrb[0].mxu0
        %896 = vmatprep.mubr.f32.mxu0 0.0
        %897 = vmatmul.mubr.f32.gmra.mrb[0].mxu0 %v735
        %v898 = vpop.f32.mrb[0].mxu0
        %v899 = vadd.f32 %v693, %v898
        %v900 = vpop.f32.mrb[0].mxu0
        %901 = vmatprep.mubr.f32.mxu0 0.0
        %902 = vmatmul.mubr.f32.gmra.mrb[0].mxu0 %v738
        %v903 = vpop.f32.mrb[0].mxu0
        %v904 = vadd.f32 %v693, %v903
        %v905 = vpop.f32.mrb[0].mxu0
        %906 = vmatprep.mubr.f32.mxu0 0.0
        %907 = vmatmul.mubr.f32.gmra.mrb[0].mxu0 %v741
        %v908 = vpop.f32.mrb[0].mxu0
        %v909 = vadd.f32 %v693, %v908
        %v910 = vpop.f32.mrb[0].mxu0
        %911 = vmatprep.mubr.f32.mxu0 0.0
        %912 = vmatmul.mubr.f32.gmra.mrb[0].mxu0 %v744
        %v913 = vpop.f32.mrb[0].mxu0
        %v914 = vadd.f32 %v693, %v913
        %v915 = vpop.f32.mrb[0].mxu0
        %916 = vmatprep.mubr.f32.mxu0 0.0
        %917 = vmatmul.mubr.f32.gmra.mrb[0].mxu0 %v747
        %v918 = vpop.f32.mrb[0].mxu0
        %v919 = vadd.f32 %v693, %v918
        %v920 = vpop.f32.mrb[0].mxu0
        %921 = vmatprep.mubr.f32.mxu0 0.0
        %922 = vmatmul.mubr.f32.gmra.mrb[0].mxu0 %v750
        %v923 = vpop.f32.mrb[0].mxu0
        %v924 = vadd.f32 %v693, %v923
        %v925 = vpop.f32.mrb[0].mxu0
        %926 = vmatprep.mubr.f32.mxu0 0.0
        %927 = vmatmul.mubr.f32.gmra.mrb[0].mxu0 %v753
        %v928 = vpop.f32.mrb[0].mxu0
        %v929 = vadd.f32 %v693, %v928
        %v930 = vpop.f32.mrb[0].mxu0
        %931 = vmatprep.mubr.f32.mxu0 0.0
        %932 = vmatmul.mubr.f32.gmra.mrb[0].mxu0 %v756
        %v933 = vpop.f32.mrb[0].mxu0
        %v934 = vadd.f32 %v693, %v933
        %v935 = vpop.f32.mrb[0].mxu0
        %936 = vmatprep.mubr.f32.mxu0 0.0
        %937 = vmatmul.mubr.f32.gmra.mrb[0].mxu0 %v759
        %v938 = vpop.f32.mrb[0].mxu0
        %v939 = vadd.f32 %v693, %v938
        %v940 = vpop.f32.mrb[0].mxu0
        %941 = vmatprep.mubr.f32.mxu0 0.0
        %942 = vmatmul.mubr.f32.gmra.mrb[0].mxu0 %v762
        %v943 = vpop.f32.mrb[0].mxu0
        %v944 = vadd.f32 %v693, %v943
        %v945 = vpop.f32.mrb[0].mxu0
        %946 = vmatprep.mubr.f32.mxu0 0.0
        %947 = vmatmul.mubr.f32.gmra.mrb[0].mxu0 %v765
        %v948 = vpop.f32.mrb[0].mxu0
        %v949 = vadd.f32 %v693, %v948
        %v950 = vpop.f32.mrb[0].mxu0
        %951 = vdwg.mxu0
        %v952 = vtanh.pop %v834
        %v953 = vtanh.pop %v839
        %v954 = vtanh.pop %v844
        %v955 = vtanh.pop %v849
        %v956 = vtanh.pop %v854
        %v957 = vtanh.pop %v859
        %v958 = vtanh.pop %v864
        %v959 = vtanh.pop %v869
        %v960 = vtanh.pop %v874
        %v961 = vtanh.pop %v879
        %v962 = vtanh.pop %v884
        %v963 = vtanh.pop %v889
        %v964 = vtanh.pop %v894
        %v965 = vtanh.pop %v899
        %v966 = vtanh.pop %v904
        %v967 = vtanh.pop %v909
        %v968 = vtanh.pop %v914
        %v969 = vtanh.pop %v919
        %v970 = vtanh.pop %v924
        %v971 = vtanh.pop %v929
        %v972 = vtanh.pop %v934
        %v973 = vtanh.pop %v939
        %v974 = vtanh.pop %v944
        %v975 = vtanh.pop %v949
        %v976 = vld [vmem:[%s7] sm:$0xff]
        %v977 = vld [vmem:[%s7 + $0x8] sm:$0xff]
        %v978 = vld [vmem:[%s7 + $0x10] sm:$0xff]
        %v979 = vld [vmem:[%s7 + $0x18] sm:$0xff]
        %v980 = vld [vmem:[%s7 + $0x20] sm:$0xff]
        %v981 = vld [vmem:[%s7 + $0x28] sm:$0xff]
        %v982 = vld [vmem:[%s7 + $0x30] sm:$0xff]
        %v983 = vld [vmem:[%s7 + $0x38] sm:$0xff]
        %v984 = vld [vmem:[%s7 + $0x40] sm:$0xff]
        %v985 = vld [vmem:[%s7 + $0x48] sm:$0xff]
        %v986 = vld [vmem:[%s7 + $0x50] sm:$0xff]
        %v987 = vld [vmem:[%s7 + $0x58] sm:$0xff]
        %v988 = vld [vmem:[%s7 + $0x60] sm:$0xff]
        %v989 = vld [vmem:[%s7 + $0x68] sm:$0xff]
        %v990 = vld [vmem:[%s7 + $0x70] sm:$0xff]
        %v991 = vld [vmem:[%s7 + $0x78] sm:$0xff]
        %v992 = vld [vmem:[%s7 + $0x80] sm:$0xff]
        %v993 = vld [vmem:[%s7 + $0x88] sm:$0xff]
        %v994 = vld [vmem:[%s7 + $0x90] sm:$0xff]
        %v995 = vld [vmem:[%s7 + $0x98] sm:$0xff]
        %v996 = vld [vmem:[%s7 + $0xa0] sm:$0xff]
        %v997 = vld [vmem:[%s7 + $0xa8] sm:$0xff]
        %v998 = vld [vmem:[%s7 + $0xb0] sm:$0xff]
        %v999 = vld [vmem:[%s7 + $0xb8] sm:$0xff]
        %vm1000 = vcmask 130048
        %v1002 = vsel %vm1000, %v976, 0
        %v1005 = vsel %vm1000, %v977, 0
        %v1008 = vsel %vm1000, %v978, 0
        %v1011 = vsel %vm1000, %v979, 0
        %v1014 = vsel %vm1000, %v980, 0
        %v1017 = vsel %vm1000, %v981, 0
        %v1020 = vsel %vm1000, %v982, 0
        %v1023 = vsel %vm1000, %v983, 0
        %v1026 = vsel %vm1000, %v984, 0
        %v1029 = vsel %vm1000, %v985, 0
        %v1032 = vsel %vm1000, %v986, 0
        %v1035 = vsel %vm1000, %v987, 0
        %v1038 = vsel %vm1000, %v988, 0
        %v1041 = vsel %vm1000, %v989, 0
        %v1044 = vsel %vm1000, %v990, 0
        %v1047 = vsel %vm1000, %v991, 0
        %v1050 = vsel %vm1000, %v992, 0
        %v1053 = vsel %vm1000, %v993, 0
        %v1056 = vsel %vm1000, %v994, 0
        %v1059 = vsel %vm1000, %v995, 0
        %v1062 = vsel %vm1000, %v996, 0
        %v1065 = vsel %vm1000, %v997, 0
        %v1068 = vsel %vm1000, %v998, 0
        %v1071 = vsel %vm1000, %v999, 0
        %1073 = vmatprep.subr.mxu0 0.0
        %1074 = vmatpush1.msra.mxu0 %v658
        %1075 = vmatprep.subr.mxu0 0.0
        %1076 = vmatpush1.msra.mxu0 %v659
        %1077 = vmatprep.subr.mxu0 0.0
        %1078 = vmatpush1.msra.mxu0 0.0
        %1079 = vmatprep.subr.mxu0 0.0
        %1080 = vmatpush1.msra.mxu0 0.0
        %1081 = vmatprep.subr.mxu0 0.0
        %1082 = vmatpush1.msra.mxu0 0.0
        %1083 = vmatprep.subr.mxu0 0.0
        %1084 = vmatpush1.msra.mxu0 0.0
        %1085 = vmatprep.subr.mxu0 0.0
        %1086 = vmatpush1.msra.mxu0 0.0
        %1087 = vmatprep.subr.mxu0 0.0
        %1088 = vmatpush1.msra.mxu0 0.0
        %1089 = vmatprep.subr.mxu0 0.0
        %1090 = vmatpush1.msra.mxu0 0.0
        %1091 = vmatprep.subr.mxu0 0.0
        %1092 = vmatpush1.msra.mxu0 0.0
        %1093 = vmatprep.subr.mxu0 0.0
        %1094 = vmatpush1.msra.mxu0 0.0
        %1095 = vmatprep.subr.mxu0 0.0
        %1096 = vmatpush1.msra.mxu0 0.0
        %1097 = vmatprep.subr.mxu0 0.0
        %1098 = vmatpush1.msra.mxu0 0.0
        %1099 = vmatprep.subr.mxu0 0.0
        %1100 = vmatpush1.msra.mxu0 0.0
        %1101 = vmatprep.subr.mxu0 0.0
        %1102 = vmatpush1.msra.mxu0 0.0
        %1103 = vmatprep.subr.mxu0 0.0
        %1104 = vmatpush1.msra.mxu0 0.0
        %1105 = vmatprep.subr.mxu0 0.0
        %1106 = vmatpush1.msra.mxu0 0.0
        %1107 = vmatprep.subr.mxu0 0.0
        %1108 = vmatpush1.msra.mxu0 0.0
        %1109 = vmatprep.subr.mxu0 0.0
        %1110 = vmatpush1.msra.mxu0 0.0
        %1111 = vmatprep.subr.mxu0 0.0
        %1112 = vmatpush1.msra.mxu0 0.0
        %1113 = vmatprep.subr.mxu0 0.0
        %1114 = vmatpush1.msra.mxu0 0.0
        %1115 = vmatprep.subr.mxu0 0.0
        %1116 = vmatpush1.msra.mxu0 0.0
        %1117 = vmatprep.subr.mxu0 0.0
        %1118 = vmatpush1.msra.mxu0 0.0
        %1119 = vmatprep.subr.mxu0 0.0
        %1120 = vmatpush1.msra.mxu0 0.0
        %1121 = vmatprep.subr.mxu0 0.0
        %1122 = vmatpush1.msra.mxu0 0.0
        %1123 = vmatprep.subr.mxu0 0.0
        %1124 = vmatpush1.msra.mxu0 0.0
        %1125 = vmatprep.subr.mxu0 0.0
        %1126 = vmatpush1.msra.mxu0 0.0
        %1127 = vmatprep.subr.mxu0 0.0
        %1128 = vmatpush1.msra.mxu0 0.0
        %1129 = vmatprep.subr.mxu0 0.0
        %1130 = vmatpush1.msra.mxu0 0.0
        %1131 = vmatprep.subr.mxu0 0.0
        %1132 = vmatpush1.msra.mxu0 0.0
        %1133 = vmatprep.subr.mxu0 0.0
        %1134 = vmatpush1.msra.mxu0 0.0
        %1135 = vmatprep.subr.mxu0 0.0
        %1136 = vmatpush1.msra.mxu0 0.0
        %1137 = vmatprep.mubr.f32.mxu0 0.0
        %1138 = vmatmul.mubr.f32.gmra.mrb[0].mxu0 %v1002
        %v1139 = vpop.f32.mrb[0].mxu0
        %v1140 = vadd.f32 0.0, %v1139
        %v1141 = vpop.f32.mrb[0].mxu0
        %1142 = vmatprep.mubr.f32.mxu0 0.0
        %1143 = vmatmul.mubr.f32.gmra.mrb[0].mxu0 %v1005
        %v1144 = vpop.f32.mrb[0].mxu0
        %v1145 = vadd.f32 0.0, %v1144
        %v1146 = vpop.f32.mrb[0].mxu0
        %1147 = vmatprep.mubr.f32.mxu0 0.0
        %1148 = vmatmul.mubr.f32.gmra.mrb[0].mxu0 %v1008
        %v1149 = vpop.f32.mrb[0].mxu0
        %v1150 = vadd.f32 0.0, %v1149
        %v1151 = vpop.f32.mrb[0].mxu0
        %1152 = vmatprep.mubr.f32.mxu0 0.0
        %1153 = vmatmul.mubr.f32.gmra.mrb[0].mxu0 %v1011
        %v1154 = vpop.f32.mrb[0].mxu0
        %v1155 = vadd.f32 0.0, %v1154
        %v1156 = vpop.f32.mrb[0].mxu0
        %1157 = vmatprep.mubr.f32.mxu0 0.0
        %1158 = vmatmul.mubr.f32.gmra.mrb[0].mxu0 %v1014
        %v1159 = vpop.f32.mrb[0].mxu0
        %v1160 = vadd.f32 0.0, %v1159
        %v1161 = vpop.f32.mrb[0].mxu0
        %1162 = vmatprep.mubr.f32.mxu0 0.0
        %1163 = vmatmul.mubr.f32.gmra.mrb[0].mxu0 %v1017
        %v1164 = vpop.f32.mrb[0].mxu0
        %v1165 = vadd.f32 0.0, %v1164
        %v1166 = vpop.f32.mrb[0].mxu0
        %1167 = vmatprep.mubr.f32.mxu0 0.0
        %1168 = vmatmul.mubr.f32.gmra.mrb[0].mxu0 %v1020
        %v1169 = vpop.f32.mrb[0].mxu0
        %v1170 = vadd.f32 0.0, %v1169
        %v1171 = vpop.f32.mrb[0].mxu0
        %1172 = vmatprep.mubr.f32.mxu0 0.0
        %1173 = vmatmul.mubr.f32.gmra.mrb[0].mxu0 %v1023
        %v1174 = vpop.f32.mrb[0].mxu0
        %v1175 = vadd.f32 0.0, %v1174
        %v1176 = vpop.f32.mrb[0].mxu0
        %1177 = vmatprep.mubr.f32.mxu0 0.0
        %1178 = vmatmul.mubr.f32.gmra.mrb[0].mxu0 %v1026
        %v1179 = vpop.f32.mrb[0].mxu0
        %v1180 = vadd.f32 0.0, %v1179
        %v1181 = vpop.f32.mrb[0].mxu0
        %1182 = vmatprep.mubr.f32.mxu0 0.0
        %1183 = vmatmul.mubr.f32.gmra.mrb[0].mxu0 %v1029
        %v1184 = vpop.f32.mrb[0].mxu0
        %v1185 = vadd.f32 0.0, %v1184
        %v1186 = vpop.f32.mrb[0].mxu0
        %1187 = vmatprep.mubr.f32.mxu0 0.0
        %1188 = vmatmul.mubr.f32.gmra.mrb[0].mxu0 %v1032
        %v1189 = vpop.f32.mrb[0].mxu0
        %v1190 = vadd.f32 0.0, %v1189
        %v1191 = vpop.f32.mrb[0].mxu0
        %1192 = vmatprep.mubr.f32.mxu0 0.0
        %1193 = vmatmul.mubr.f32.gmra.mrb[0].mxu0 %v1035
        %v1194 = vpop.f32.mrb[0].mxu0
        %v1195 = vadd.f32 0.0, %v1194
        %v1196 = vpop.f32.mrb[0].mxu0
        %1197 = vmatprep.mubr.f32.mxu0 0.0
        %1198 = vmatmul.mubr.f32.gmra.mrb[0].mxu0 %v1038
        %v1199 = vpop.f32.mrb[0].mxu0
        %v1200 = vadd.f32 0.0, %v1199
        %v1201 = vpop.f32.mrb[0].mxu0
        %1202 = vmatprep.mubr.f32.mxu0 0.0
        %1203 = vmatmul.mubr.f32.gmra.mrb[0].mxu0 %v1041
        %v1204 = vpop.f32.mrb[0].mxu0
        %v1205 = vadd.f32 0.0, %v1204
        %v1206 = vpop.f32.mrb[0].mxu0
        %1207 = vmatprep.mubr.f32.mxu0 0.0
        %1208 = vmatmul.mubr.f32.gmra.mrb[0].mxu0 %v1044
        %v1209 = vpop.f32.mrb[0].mxu0
        %v1210 = vadd.f32 0.0, %v1209
        %v1211 = vpop.f32.mrb[0].mxu0
        %1212 = vmatprep.mubr.f32.mxu0 0.0
        %1213 = vmatmul.mubr.f32.gmra.mrb[0].mxu0 %v1047
        %v1214 = vpop.f32.mrb[0].mxu0
        %v1215 = vadd.f32 0.0, %v1214
        %v1216 = vpop.f32.mrb[0].mxu0
        %1217 = vmatprep.mubr.f32.mxu0 0.0
        %1218 = vmatmul.mubr.f32.gmra.mrb[0].mxu0 %v1050
        %v1219 = vpop.f32.mrb[0].mxu0
        %v1220 = vadd.f32 0.0, %v1219
        %v1221 = vpop.f32.mrb[0].mxu0
        %1222 = vmatprep.mubr.f32.mxu0 0.0
        %1223 = vmatmul.mubr.f32.gmra.mrb[0].mxu0 %v1053
        %v1224 = vpop.f32.mrb[0].mxu0
        %v1225 = vadd.f32 0.0, %v1224
        %v1226 = vpop.f32.mrb[0].mxu0
        %1227 = vmatprep.mubr.f32.mxu0 0.0
        %1228 = vmatmul.mubr.f32.gmra.mrb[0].mxu0 %v1056
        %v1229 = vpop.f32.mrb[0].mxu0
        %v1230 = vadd.f32 0.0, %v1229
        %v1231 = vpop.f32.mrb[0].mxu0
        %1232 = vmatprep.mubr.f32.mxu0 0.0
        %1233 = vmatmul.mubr.f32.gmra.mrb[0].mxu0 %v1059
        %v1234 = vpop.f32.mrb[0].mxu0
        %v1235 = vadd.f32 0.0, %v1234
        %v1236 = vpop.f32.mrb[0].mxu0
        %1237 = vmatprep.mubr.f32.mxu0 0.0
        %1238 = vmatmul.mubr.f32.gmra.mrb[0].mxu0 %v1062
        %v1239 = vpop.f32.mrb[0].mxu0
        %v1240 = vadd.f32 0.0, %v1239
        %v1241 = vpop.f32.mrb[0].mxu0
        %1242 = vmatprep.mubr.f32.mxu0 0.0
        %1243 = vmatmul.mubr.f32.gmra.mrb[0].mxu0 %v1065
        %v1244 = vpop.f32.mrb[0].mxu0
        %v1245 = vadd.f32 0.0, %v1244
        %v1246 = vpop.f32.mrb[0].mxu0
        %1247 = vmatprep.mubr.f32.mxu0 0.0
        %1248 = vmatmul.mubr.f32.gmra.mrb[0].mxu0 %v1068
        %v1249 = vpop.f32.mrb[0].mxu0
        %v1250 = vadd.f32 0.0, %v1249
        %v1251 = vpop.f32.mrb[0].mxu0
        %1252 = vmatprep.mubr.f32.mxu0 0.0
        %1253 = vmatmul.mubr.f32.gmra.mrb[0].mxu0 %v1071
        %v1254 = vpop.f32.mrb[0].mxu0
        %v1255 = vadd.f32 0.0, %v1254
        %v1256 = vpop.f32.mrb[0].mxu0
        %1257 = vdwg.mxu0
        %v1258 = vmul.f32 %v952, %v1140
        %v1259 = vmul.f32 %v953, %v1145
        %v1260 = vmul.f32 %v954, %v1150
        %v1261 = vmul.f32 %v955, %v1155
        %v1262 = vmul.f32 %v956, %v1160
        %v1263 = vmul.f32 %v957, %v1165
        %v1264 = vmul.f32 %v958, %v1170
        %v1265 = vmul.f32 %v959, %v1175
        %v1266 = vmul.f32 %v960, %v1180
        %v1267 = vmul.f32 %v961, %v1185
        %v1268 = vmul.f32 %v962, %v1190
        %v1269 = vmul.f32 %v963, %v1195
        %v1270 = vmul.f32 %v964, %v1200
        %v1271 = vmul.f32 %v965, %v1205
        %v1272 = vmul.f32 %v966, %v1210
        %v1273 = vmul.f32 %v967, %v1215
        %v1274 = vmul.f32 %v968, %v1220
        %v1275 = vmul.f32 %v969, %v1225
        %v1276 = vmul.f32 %v970, %v1230
        %v1277 = vmul.f32 %v971, %v1235
        %v1278 = vmul.f32 %v972, %v1240
        %v1279 = vmul.f32 %v973, %v1245
        %v1280 = vmul.f32 %v974, %v1250
        %v1281 = vmul.f32 %v975, %v1255
        %1282 = vadd.xlane.f32.xlu0 %v1258
        %v1283 = vpop.xlane.xlu0 %1282
        %1284 = vadd.xlane.f32.xlu0 %v1259
        %v1285 = vpop.xlane.xlu0 %1284
        %1286 = vadd.xlane.f32.xlu0 %v1260
        %v1287 = vpop.xlane.xlu0 %1286
        %1288 = vadd.xlane.f32.xlu0 %v1261
        %v1289 = vpop.xlane.xlu0 %1288
        %1290 = vadd.xlane.f32.xlu0 %v1262
        %v1291 = vpop.xlane.xlu0 %1290
        %1292 = vadd.xlane.f32.xlu0 %v1263
        %v1293 = vpop.xlane.xlu0 %1292
        %1294 = vadd.xlane.f32.xlu0 %v1264
        %v1295 = vpop.xlane.xlu0 %1294
        %1296 = vadd.xlane.f32.xlu0 %v1265
        %v1297 = vpop.xlane.xlu0 %1296
        %1298 = vadd.xlane.f32.xlu0 %v1266
        %v1299 = vpop.xlane.xlu0 %1298
        %1300 = vadd.xlane.f32.xlu0 %v1267
        %v1301 = vpop.xlane.xlu0 %1300
        %1302 = vadd.xlane.f32.xlu0 %v1268
        %v1303 = vpop.xlane.xlu0 %1302
        %1304 = vadd.xlane.f32.xlu0 %v1269
        %v1305 = vpop.xlane.xlu0 %1304
        %1306 = vadd.xlane.f32.xlu0 %v1270
        %v1307 = vpop.xlane.xlu0 %1306
        %1308 = vadd.xlane.f32.xlu0 %v1271
        %v1309 = vpop.xlane.xlu0 %1308
        %1310 = vadd.xlane.f32.xlu0 %v1272
        %v1311 = vpop.xlane.xlu0 %1310
        %1312 = vadd.xlane.f32.xlu0 %v1273
        %v1313 = vpop.xlane.xlu0 %1312
        %1314 = vadd.xlane.f32.xlu0 %v1274
        %v1315 = vpop.xlane.xlu0 %1314
        %1316 = vadd.xlane.f32.xlu0 %v1275
        %v1317 = vpop.xlane.xlu0 %1316
        %1318 = vadd.xlane.f32.xlu0 %v1276
        %v1319 = vpop.xlane.xlu0 %1318
        %1320 = vadd.xlane.f32.xlu0 %v1277
        %v1321 = vpop.xlane.xlu0 %1320
        %1322 = vadd.xlane.f32.xlu0 %v1278
        %v1323 = vpop.xlane.xlu0 %1322
        %1324 = vadd.xlane.f32.xlu0 %v1279
        %v1325 = vpop.xlane.xlu0 %1324
        %1326 = vadd.xlane.f32.xlu0 %v1280
        %v1327 = vpop.xlane.xlu0 %1326
        %1328 = vadd.xlane.f32.xlu0 %v1281
        %v1329 = vpop.xlane.xlu0 %1328
        %v1330 = vadd.f32 %v1283, 0.0
        %v1331 = vadd.f32 %v1285, 0.0
        %v1332 = vadd.f32 %v1287, 0.0
        %v1333 = vadd.f32 %v1289, 0.0
        %v1334 = vadd.f32 %v1291, 0.0
        %v1335 = vadd.f32 %v1293, 0.0
        %v1336 = vadd.f32 %v1295, 0.0
        %v1337 = vadd.f32 %v1297, 0.0
        %v1338 = vadd.f32 %v1299, 0.0
        %v1339 = vadd.f32 %v1301, 0.0
        %v1340 = vadd.f32 %v1303, 0.0
        %v1341 = vadd.f32 %v1305, 0.0
        %v1342 = vadd.f32 %v1307, 0.0
        %v1343 = vadd.f32 %v1309, 0.0
        %v1344 = vadd.f32 %v1311, 0.0
        %v1345 = vadd.f32 %v1313, 0.0
        %v1346 = vadd.f32 %v1315, 0.0
        %v1347 = vadd.f32 %v1317, 0.0
        %v1348 = vadd.f32 %v1319, 0.0
        %v1349 = vadd.f32 %v1321, 0.0
        %v1350 = vadd.f32 %v1323, 0.0
        %v1351 = vadd.f32 %v1325, 0.0
        %v1352 = vadd.f32 %v1327, 0.0
        %v1353 = vadd.f32 %v1329, 0.0
        %s1354 = sld [smem:[#allocation2]]
        %v1355 = vstv %s1354
        %v1356 = vadd.f32 %v1330, %v1355
        %v1357 = vadd.f32 %v1331, %v1355
        %v1358 = vadd.f32 %v1332, %v1355
        %v1359 = vadd.f32 %v1333, %v1355
        %v1360 = vadd.f32 %v1334, %v1355
        %v1361 = vadd.f32 %v1335, %v1355
        %v1362 = vadd.f32 %v1336, %v1355
        %v1363 = vadd.f32 %v1337, %v1355
        %v1364 = vadd.f32 %v1338, %v1355
        %v1365 = vadd.f32 %v1339, %v1355
        %v1366 = vadd.f32 %v1340, %v1355
        %v1367 = vadd.f32 %v1341, %v1355
        %v1368 = vadd.f32 %v1342, %v1355
        %v1369 = vadd.f32 %v1343, %v1355
        %v1370 = vadd.f32 %v1344, %v1355
        %v1371 = vadd.f32 %v1345, %v1355
        %v1372 = vadd.f32 %v1346, %v1355
        %v1373 = vadd.f32 %v1347, %v1355
        %v1374 = vadd.f32 %v1348, %v1355
        %v1375 = vadd.f32 %v1349, %v1355
        %v1376 = vadd.f32 %v1350, %v1355
        %v1377 = vadd.f32 %v1351, %v1355
        %v1378 = vadd.f32 %v1352, %v1355
        %v1379 = vadd.f32 %v1353, %v1355
        %v1380 = vtanh.pop %v1356
        %v1381 = vtanh.pop %v1357
        %v1382 = vtanh.pop %v1358
        %v1383 = vtanh.pop %v1359
        %v1384 = vtanh.pop %v1360
        %v1385 = vtanh.pop %v1361
        %v1386 = vtanh.pop %v1362
        %v1387 = vtanh.pop %v1363
        %v1388 = vtanh.pop %v1364
        %v1389 = vtanh.pop %v1365
        %v1390 = vtanh.pop %v1366
        %v1391 = vtanh.pop %v1367
        %v1392 = vtanh.pop %v1368
        %v1393 = vtanh.pop %v1369
        %v1394 = vtanh.pop %v1370
        %v1395 = vtanh.pop %v1371
        %v1396 = vtanh.pop %v1372
        %v1397 = vtanh.pop %v1373
        %v1398 = vtanh.pop %v1374
        %v1399 = vtanh.pop %v1375
        %v1400 = vtanh.pop %v1376
        %v1401 = vtanh.pop %v1377
        %v1402 = vtanh.pop %v1378
        %v1403 = vtanh.pop %v1379
        %v1404 = vmul.f32 %v1380, 1.442695
        %v1405 = vpow.pop %v1404
        %v1406 = vmul.f32 %v1381, 1.442695
        %v1407 = vpow.pop %v1406
        %v1408 = vmul.f32 %v1382, 1.442695
        %v1409 = vpow.pop %v1408
        %v1410 = vmul.f32 %v1383, 1.442695
        %v1411 = vpow.pop %v1410
        %v1412 = vmul.f32 %v1384, 1.442695
        %v1413 = vpow.pop %v1412
        %v1414 = vmul.f32 %v1385, 1.442695
        %v1415 = vpow.pop %v1414
        %v1416 = vmul.f32 %v1386, 1.442695
        %v1417 = vpow.pop %v1416
        %v1418 = vmul.f32 %v1387, 1.442695
        %v1419 = vpow.pop %v1418
        %v1420 = vmul.f32 %v1388, 1.442695
        %v1421 = vpow.pop %v1420
        %v1422 = vmul.f32 %v1389, 1.442695
        %v1423 = vpow.pop %v1422
        %v1424 = vmul.f32 %v1390, 1.442695
        %v1425 = vpow.pop %v1424
        %v1426 = vmul.f32 %v1391, 1.442695
        %v1427 = vpow.pop %v1426
        %v1428 = vmul.f32 %v1392, 1.442695
        %v1429 = vpow.pop %v1428
        %v1430 = vmul.f32 %v1393, 1.442695
        %v1431 = vpow.pop %v1430
        %v1432 = vmul.f32 %v1394, 1.442695
        %v1433 = vpow.pop %v1432
        %v1434 = vmul.f32 %v1395, 1.442695
        %v1435 = vpow.pop %v1434
        %v1436 = vmul.f32 %v1396, 1.442695
        %v1437 = vpow.pop %v1436
        %v1438 = vmul.f32 %v1397, 1.442695
        %v1439 = vpow.pop %v1438
        %v1440 = vmul.f32 %v1398, 1.442695
        %v1441 = vpow.pop %v1440
        %v1442 = vmul.f32 %v1399, 1.442695
        %v1443 = vpow.pop %v1442
        %v1444 = vmul.f32 %v1400, 1.442695
        %v1445 = vpow.pop %v1444
        %v1446 = vmul.f32 %v1401, 1.442695
        %v1447 = vpow.pop %v1446
        %v1448 = vmul.f32 %v1402, 1.442695
        %v1449 = vpow.pop %v1448
        %v1450 = vmul.f32 %v1403, 1.442695
        %v1451 = vpow.pop %v1450
        %v1452 = vsel %vm518, %v1405, 0.0
        %v1453 = vsel %vm519, %v1407, 0.0
        %v1454 = vsel %vm520, %v1409, 0.0
        %v1455 = vsel %vm521, %v1411, 0.0
        %v1456 = vsel %vm522, %v1413, 0.0
        %v1457 = vsel %vm523, %v1415, 0.0
        %v1458 = vsel %vm524, %v1417, 0.0
        %v1459 = vsel %vm525, %v1419, 0.0
        %v1460 = vsel %vm526, %v1421, 0.0
        %v1461 = vsel %vm527, %v1423, 0.0
        %v1462 = vsel %vm528, %v1425, 0.0
        %v1463 = vsel %vm529, %v1427, 0.0
        %v1464 = vsel %vm530, %v1429, 0.0
        %v1465 = vsel %vm531, %v1431, 0.0
        %v1466 = vsel %vm532, %v1433, 0.0
        %v1467 = vsel %vm533, %v1435, 0.0
        %v1468 = vsel %vm534, %v1437, 0.0
        %v1469 = vsel %vm535, %v1439, 0.0
        %v1470 = vsel %vm536, %v1441, 0.0
        %v1471 = vsel %vm537, %v1443, 0.0
        %v1472 = vsel %vm538, %v1445, 0.0
        %v1473 = vsel %vm539, %v1447, 0.0
        %v1474 = vsel %vm540, %v1449, 0.0
        %v1475 = vsel %vm541, %v1451, 0.0
        %v1476 = vld [vmem:[%s8] sm:$0xff]
        %v1477 = vld [vmem:[%s8 + $0x8] sm:$0xff]
        %v1478 = vld [vmem:[%s8 + $0x10] sm:$0xff]
        %v1479 = vld [vmem:[%s8 + $0x18] sm:$0xff]
        %vm1480 = vcmask 523264
        %v1482 = vsel %vm1480, %v1477, 0
        %v1485 = vsel %vm1480, %v1479, 0
        %1487 = vmatprep.subr.mxu0 0.0
        %1488 = vmatpush1.msra.mxu0 %v1452
        %1489 = vmatprep.subr.mxu0 0.0
        %1490 = vmatpush1.msra.mxu0 %v1453
        %1491 = vmatprep.subr.mxu0 0.0
        %1492 = vmatpush1.msra.mxu0 %v1454
        %1493 = vmatprep.subr.mxu0 0.0
        %1494 = vmatpush1.msra.mxu0 %v1455
        %1495 = vmatprep.subr.mxu0 0.0
        %1496 = vmatpush1.msra.mxu0 %v1456
        %1497 = vmatprep.subr.mxu0 0.0
        %1498 = vmatpush1.msra.mxu0 %v1457
        %1499 = vmatprep.subr.mxu0 0.0
        %1500 = vmatpush1.msra.mxu0 %v1458
        %1501 = vmatprep.subr.mxu0 0.0
        %1502 = vmatpush1.msra.mxu0 %v1459
        %1503 = vmatprep.subr.mxu0 0.0
        %1504 = vmatpush1.msra.mxu0 %v1460
        %1505 = vmatprep.subr.mxu0 0.0
        %1506 = vmatpush1.msra.mxu0 %v1461
        %1507 = vmatprep.subr.mxu0 0.0
        %1508 = vmatpush1.msra.mxu0 %v1462
        %1509 = vmatprep.subr.mxu0 0.0
        %1510 = vmatpush1.msra.mxu0 %v1463
        %1511 = vmatprep.subr.mxu0 0.0
        %1512 = vmatpush1.msra.mxu0 %v1464
        %1513 = vmatprep.subr.mxu0 0.0
        %1514 = vmatpush1.msra.mxu0 %v1465
        %1515 = vmatprep.subr.mxu0 0.0
        %1516 = vmatpush1.msra.mxu0 %v1466
        %1517 = vmatprep.subr.mxu0 0.0
        %1518 = vmatpush1.msra.mxu0 %v1467
        %1519 = vmatprep.subr.mxu0 0.0
        %1520 = vmatpush1.msra.mxu0 %v1468
        %1521 = vmatprep.subr.mxu0 0.0
        %1522 = vmatpush1.msra.mxu0 %v1469
        %1523 = vmatprep.subr.mxu0 0.0
        %1524 = vmatpush1.msra.mxu0 %v1470
        %1525 = vmatprep.subr.mxu0 0.0
        %1526 = vmatpush1.msra.mxu0 %v1471
        %1527 = vmatprep.subr.mxu0 0.0
        %1528 = vmatpush1.msra.mxu0 %v1472
        %1529 = vmatprep.subr.mxu0 0.0
        %1530 = vmatpush1.msra.mxu0 %v1473
        %1531 = vmatprep.subr.mxu0 0.0
        %1532 = vmatpush1.msra.mxu0 %v1474
        %1533 = vmatprep.subr.mxu0 0.0
        %1534 = vmatpush1.msra.mxu0 %v1475
        %1535 = vmatprep.subr.mxu0 0.0
        %1536 = vmatpush1.msra.mxu0 0.0
        %1537 = vmatprep.subr.mxu0 0.0
        %1538 = vmatpush1.msra.mxu0 0.0
        %1539 = vmatprep.subr.mxu0 0.0
        %1540 = vmatpush1.msra.mxu0 0.0
        %1541 = vmatprep.subr.mxu0 0.0
        %1542 = vmatpush1.msra.mxu0 0.0
        %1543 = vmatprep.subr.mxu0 0.0
        %1544 = vmatpush1.msra.mxu0 0.0
        %1545 = vmatprep.subr.mxu0 0.0
        %1546 = vmatpush1.msra.mxu0 0.0
        %1547 = vmatprep.subr.mxu0 0.0
        %1548 = vmatpush1.msra.mxu0 0.0
        %1549 = vmatprep.subr.mxu0 0.0
        %1550 = vmatpush1.msra.mxu0 0.0
        %1551 = vmatprep.mubr.f32.mxu0 %v1482
        %1552 = vmatmul.mubr.f32.gmra.mrb[0].mxu0 %v1476
        %v1553 = vpop.f32.mrb[0].mxu0
        %v1554 = vadd.f32 0.0, %v1553
        %v1555 = vpop.f32.mrb[0].mxu0
        %1556 = vmatprep.mubr.f32.mxu0 %v1485
        %1557 = vmatmul.mubr.f32.gmra.mrb[0].mxu0 %v1478
        %v1558 = vpop.f32.mrb[0].mxu0
        %v1559 = vadd.f32 0.0, %v1558
        %v1560 = vpop.f32.mrb[0].mxu0
        %1561 = vdwg.mxu0
        %1562 = vmatprep.subr.mxu0 0.0
        %1563 = vmatpush1.msra.mxu0 %v1554
        %1564 = vmatprep.subr.mxu0 0.0
        %1565 = vmatpush1.msra.mxu0 %v1559
        %1566 = vmatprep.subr.mxu0 0.0
        %1567 = vmatpush1.msra.mxu0 0.0
        %1568 = vmatprep.subr.mxu0 0.0
        %1569 = vmatpush1.msra.mxu0 0.0
        %1570 = vmatprep.subr.mxu0 0.0
        %1571 = vmatpush1.msra.mxu0 0.0
        %1572 = vmatprep.subr.mxu0 0.0
        %1573 = vmatpush1.msra.mxu0 0.0
        %1574 = vmatprep.subr.mxu0 0.0
        %1575 = vmatpush1.msra.mxu0 0.0
        %1576 = vmatprep.subr.mxu0 0.0
        %1577 = vmatpush1.msra.mxu0 0.0
        %1578 = vmatprep.subr.mxu0 0.0
        %1579 = vmatpush1.msra.mxu0 0.0
        %1580 = vmatprep.subr.mxu0 0.0
        %1581 = vmatpush1.msra.mxu0 0.0
        %1582 = vmatprep.subr.mxu0 0.0
        %1583 = vmatpush1.msra.mxu0 0.0
        %1584 = vmatprep.subr.mxu0 0.0
        %1585 = vmatpush1.msra.mxu0 0.0
        %1586 = vmatprep.subr.mxu0 0.0
        %1587 = vmatpush1.msra.mxu0 0.0
        %1588 = vmatprep.subr.mxu0 0.0
        %1589 = vmatpush1.msra.mxu0 0.0
        %1590 = vmatprep.subr.mxu0 0.0
        %1591 = vmatpush1.msra.mxu0 0.0
        %1592 = vmatprep.subr.mxu0 0.0
        %1593 = vmatpush1.msra.mxu0 0.0
        %1594 = vmatprep.subr.mxu0 0.0
        %1595 = vmatpush1.msra.mxu0 0.0
        %1596 = vmatprep.subr.mxu0 0.0
        %1597 = vmatpush1.msra.mxu0 0.0
        %1598 = vmatprep.subr.mxu0 0.0
        %1599 = vmatpush1.msra.mxu0 0.0
        %1600 = vmatprep.subr.mxu0 0.0
        %1601 = vmatpush1.msra.mxu0 0.0
        %1602 = vmatprep.subr.mxu0 0.0
        %1603 = vmatpush1.msra.mxu0 0.0
        %1604 = vmatprep.subr.mxu0 0.0
        %1605 = vmatpush1.msra.mxu0 0.0
        %1606 = vmatprep.subr.mxu0 0.0
        %1607 = vmatpush1.msra.mxu0 0.0
        %1608 = vmatprep.subr.mxu0 0.0
        %1609 = vmatpush1.msra.mxu0 0.0
        %1610 = vmatprep.subr.mxu0 0.0
        %1611 = vmatpush1.msra.mxu0 0.0
        %1612 = vmatprep.subr.mxu0 0.0
        %1613 = vmatpush1.msra.mxu0 0.0
        %1614 = vmatprep.subr.mxu0 0.0
        %1615 = vmatpush1.msra.mxu0 0.0
        %1616 = vmatprep.subr.mxu0 0.0
        %1617 = vmatpush1.msra.mxu0 0.0
        %1618 = vmatprep.subr.mxu0 0.0
        %1619 = vmatpush1.msra.mxu0 0.0
        %1620 = vmatprep.subr.mxu0 0.0
        %1621 = vmatpush1.msra.mxu0 0.0
        %1622 = vmatprep.subr.mxu0 0.0
        %1623 = vmatpush1.msra.mxu0 0.0
        %1624 = vmatprep.subr.mxu0 0.0
        %1625 = vmatpush1.msra.mxu0 0.0
        %1626 = vmatprep.mubr.f32.mxu0 0.0
        %1627 = vmatmul.mubr.f32.gmra.mrb[0].mxu0 %v1002
        %v1628 = vpop.f32.mrb[0].mxu0
        %v1629 = vadd.f32 0.0, %v1628
        %v1630 = vpop.f32.mrb[0].mxu0
        %1631 = vmatprep.mubr.f32.mxu0 0.0
        %1632 = vmatmul.mubr.f32.gmra.mrb[0].mxu0 %v1005
        %v1633 = vpop.f32.mrb[0].mxu0
        %v1634 = vadd.f32 0.0, %v1633
        %v1635 = vpop.f32.mrb[0].mxu0
        %1636 = vmatprep.mubr.f32.mxu0 0.0
        %1637 = vmatmul.mubr.f32.gmra.mrb[0].mxu0 %v1008
        %v1638 = vpop.f32.mrb[0].mxu0
        %v1639 = vadd.f32 0.0, %v1638
        %v1640 = vpop.f32.mrb[0].mxu0
        %1641 = vmatprep.mubr.f32.mxu0 0.0
        %1642 = vmatmul.mubr.f32.gmra.mrb[0].mxu0 %v1011
        %v1643 = vpop.f32.mrb[0].mxu0
        %v1644 = vadd.f32 0.0, %v1643
        %v1645 = vpop.f32.mrb[0].mxu0
        %1646 = vmatprep.mubr.f32.mxu0 0.0
        %1647 = vmatmul.mubr.f32.gmra.mrb[0].mxu0 %v1014
        %v1648 = vpop.f32.mrb[0].mxu0
        %v1649 = vadd.f32 0.0, %v1648
        %v1650 = vpop.f32.mrb[0].mxu0
        %1651 = vmatprep.mubr.f32.mxu0 0.0
        %1652 = vmatmul.mubr.f32.gmra.mrb[0].mxu0 %v1017
        %v1653 = vpop.f32.mrb[0].mxu0
        %v1654 = vadd.f32 0.0, %v1653
        %v1655 = vpop.f32.mrb[0].mxu0
        %1656 = vmatprep.mubr.f32.mxu0 0.0
        %1657 = vmatmul.mubr.f32.gmra.mrb[0].mxu0 %v1020
        %v1658 = vpop.f32.mrb[0].mxu0
        %v1659 = vadd.f32 0.0, %v1658
        %v1660 = vpop.f32.mrb[0].mxu0
        %1661 = vmatprep.mubr.f32.mxu0 0.0
        %1662 = vmatmul.mubr.f32.gmra.mrb[0].mxu0 %v1023
        %v1663 = vpop.f32.mrb[0].mxu0
        %v1664 = vadd.f32 0.0, %v1663
        %v1665 = vpop.f32.mrb[0].mxu0
        %1666 = vmatprep.mubr.f32.mxu0 0.0
        %1667 = vmatmul.mubr.f32.gmra.mrb[0].mxu0 %v1026
        %v1668 = vpop.f32.mrb[0].mxu0
        %v1669 = vadd.f32 0.0, %v1668
        %v1670 = vpop.f32.mrb[0].mxu0
        %1671 = vmatprep.mubr.f32.mxu0 0.0
        %1672 = vmatmul.mubr.f32.gmra.mrb[0].mxu0 %v1029
        %v1673 = vpop.f32.mrb[0].mxu0
        %v1674 = vadd.f32 0.0, %v1673
        %v1675 = vpop.f32.mrb[0].mxu0
        %1676 = vmatprep.mubr.f32.mxu0 0.0
        %1677 = vmatmul.mubr.f32.gmra.mrb[0].mxu0 %v1032
        %v1678 = vpop.f32.mrb[0].mxu0
        %v1679 = vadd.f32 0.0, %v1678
        %v1680 = vpop.f32.mrb[0].mxu0
        %1681 = vmatprep.mubr.f32.mxu0 0.0
        %1682 = vmatmul.mubr.f32.gmra.mrb[0].mxu0 %v1035
        %v1683 = vpop.f32.mrb[0].mxu0
        %v1684 = vadd.f32 0.0, %v1683
        %v1685 = vpop.f32.mrb[0].mxu0
        %1686 = vmatprep.mubr.f32.mxu0 0.0
        %1687 = vmatmul.mubr.f32.gmra.mrb[0].mxu0 %v1038
        %v1688 = vpop.f32.mrb[0].mxu0
        %v1689 = vadd.f32 0.0, %v1688
        %v1690 = vpop.f32.mrb[0].mxu0
        %1691 = vmatprep.mubr.f32.mxu0 0.0
        %1692 = vmatmul.mubr.f32.gmra.mrb[0].mxu0 %v1041
        %v1693 = vpop.f32.mrb[0].mxu0
        %v1694 = vadd.f32 0.0, %v1693
        %v1695 = vpop.f32.mrb[0].mxu0
        %1696 = vmatprep.mubr.f32.mxu0 0.0
        %1697 = vmatmul.mubr.f32.gmra.mrb[0].mxu0 %v1044
        %v1698 = vpop.f32.mrb[0].mxu0
        %v1699 = vadd.f32 0.0, %v1698
        %v1700 = vpop.f32.mrb[0].mxu0
        %1701 = vmatprep.mubr.f32.mxu0 0.0
        %1702 = vmatmul.mubr.f32.gmra.mrb[0].mxu0 %v1047
        %v1703 = vpop.f32.mrb[0].mxu0
        %v1704 = vadd.f32 0.0, %v1703
        %v1705 = vpop.f32.mrb[0].mxu0
        %1706 = vmatprep.mubr.f32.mxu0 0.0
        %1707 = vmatmul.mubr.f32.gmra.mrb[0].mxu0 %v1050
        %v1708 = vpop.f32.mrb[0].mxu0
        %v1709 = vadd.f32 0.0, %v1708
        %v1710 = vpop.f32.mrb[0].mxu0
        %1711 = vmatprep.mubr.f32.mxu0 0.0
        %1712 = vmatmul.mubr.f32.gmra.mrb[0].mxu0 %v1053
        %v1713 = vpop.f32.mrb[0].mxu0
        %v1714 = vadd.f32 0.0, %v1713
        %v1715 = vpop.f32.mrb[0].mxu0
        %1716 = vmatprep.mubr.f32.mxu0 0.0
        %1717 = vmatmul.mubr.f32.gmra.mrb[0].mxu0 %v1056
        %v1718 = vpop.f32.mrb[0].mxu0
        %v1719 = vadd.f32 0.0, %v1718
        %v1720 = vpop.f32.mrb[0].mxu0
        %1721 = vmatprep.mubr.f32.mxu0 0.0
        %1722 = vmatmul.mubr.f32.gmra.mrb[0].mxu0 %v1059
        %v1723 = vpop.f32.mrb[0].mxu0
        %v1724 = vadd.f32 0.0, %v1723
        %v1725 = vpop.f32.mrb[0].mxu0
        %1726 = vmatprep.mubr.f32.mxu0 0.0
        %1727 = vmatmul.mubr.f32.gmra.mrb[0].mxu0 %v1062
        %v1728 = vpop.f32.mrb[0].mxu0
        %v1729 = vadd.f32 0.0, %v1728
        %v1730 = vpop.f32.mrb[0].mxu0
        %1731 = vmatprep.mubr.f32.mxu0 0.0
        %1732 = vmatmul.mubr.f32.gmra.mrb[0].mxu0 %v1065
        %v1733 = vpop.f32.mrb[0].mxu0
        %v1734 = vadd.f32 0.0, %v1733
        %v1735 = vpop.f32.mrb[0].mxu0
        %1736 = vmatprep.mubr.f32.mxu0 0.0
        %1737 = vmatmul.mubr.f32.gmra.mrb[0].mxu0 %v1068
        %v1738 = vpop.f32.mrb[0].mxu0
        %v1739 = vadd.f32 0.0, %v1738
        %v1740 = vpop.f32.mrb[0].mxu0
        %1741 = vmatprep.mubr.f32.mxu0 0.0
        %1742 = vmatmul.mubr.f32.gmra.mrb[0].mxu0 %v1071
        %v1743 = vpop.f32.mrb[0].mxu0
        %v1744 = vadd.f32 0.0, %v1743
        %v1745 = vpop.f32.mrb[0].mxu0
        %1746 = vdwg.mxu0
        %v1747 = vrcp.pop %v1629
        %v1748 = vrcp.pop %v1634
        %v1749 = vrcp.pop %v1639
        %v1750 = vrcp.pop %v1644
        %v1751 = vrcp.pop %v1649
        %v1752 = vrcp.pop %v1654
        %v1753 = vrcp.pop %v1659
        %v1754 = vrcp.pop %v1664
        %v1755 = vrcp.pop %v1669
        %v1756 = vrcp.pop %v1674
        %v1757 = vrcp.pop %v1679
        %v1758 = vrcp.pop %v1684
        %v1759 = vrcp.pop %v1689
        %v1760 = vrcp.pop %v1694
        %v1761 = vrcp.pop %v1699
        %v1762 = vrcp.pop %v1704
        %v1763 = vrcp.pop %v1709
        %v1764 = vrcp.pop %v1714
        %v1765 = vrcp.pop %v1719
        %v1766 = vrcp.pop %v1724
        %v1767 = vrcp.pop %v1729
        %v1768 = vrcp.pop %v1734
        %v1769 = vrcp.pop %v1739
        %v1770 = vrcp.pop %v1744
        %v1771 = vmul.f32 %v1452, %v1747
        %v1772 = vmul.f32 %v1453, %v1748
        %v1773 = vmul.f32 %v1454, %v1749
        %v1774 = vmul.f32 %v1455, %v1750
        %v1775 = vmul.f32 %v1456, %v1751
        %v1776 = vmul.f32 %v1457, %v1752
        %v1777 = vmul.f32 %v1458, %v1753
        %v1778 = vmul.f32 %v1459, %v1754
        %v1779 = vmul.f32 %v1460, %v1755
        %v1780 = vmul.f32 %v1461, %v1756
        %v1781 = vmul.f32 %v1462, %v1757
        %v1782 = vmul.f32 %v1463, %v1758
        %v1783 = vmul.f32 %v1464, %v1759
        %v1784 = vmul.f32 %v1465, %v1760
        %v1785 = vmul.f32 %v1466, %v1761
        %v1786 = vmul.f32 %v1467, %v1762
        %v1787 = vmul.f32 %v1468, %v1763
        %v1788 = vmul.f32 %v1469, %v1764
        %v1789 = vmul.f32 %v1470, %v1765
        %v1790 = vmul.f32 %v1471, %v1766
        %v1791 = vmul.f32 %v1472, %v1767
        %v1792 = vmul.f32 %v1473, %v1768
        %v1793 = vmul.f32 %v1474, %v1769
        %v1794 = vmul.f32 %v1475, %v1770
        %vm1795 = vcmask 7168
        %1796 = vst.msk [vmem:[%s428] sm:$0xff] %vm1795, %v1771
        %1797 = vst.msk [vmem:[%s428 + $0x8] sm:$0xff] %vm1795, %v1772
        %1798 = vst.msk [vmem:[%s428 + $0x10] sm:$0xff] %vm1795, %v1773
        %1799 = vst.msk [vmem:[%s428 + $0x18] sm:$0xff] %vm1795, %v1774
        %1800 = vst.msk [vmem:[%s428 + $0x20] sm:$0xff] %vm1795, %v1775
        %1801 = vst.msk [vmem:[%s428 + $0x28] sm:$0xff] %vm1795, %v1776
        %1802 = vst.msk [vmem:[%s428 + $0x30] sm:$0xff] %vm1795, %v1777
        %1803 = vst.msk [vmem:[%s428 + $0x38] sm:$0xff] %vm1795, %v1778
        %1804 = vst.msk [vmem:[%s428 + $0x40] sm:$0xff] %vm1795, %v1779
        %1805 = vst.msk [vmem:[%s428 + $0x48] sm:$0xff] %vm1795, %v1780
        %1806 = vst.msk [vmem:[%s428 + $0x50] sm:$0xff] %vm1795, %v1781
        %1807 = vst.msk [vmem:[%s428 + $0x58] sm:$0xff] %vm1795, %v1782
        %1808 = vst.msk [vmem:[%s428 + $0x60] sm:$0xff] %vm1795, %v1783
        %1809 = vst.msk [vmem:[%s428 + $0x68] sm:$0xff] %vm1795, %v1784
        %1810 = vst.msk [vmem:[%s428 + $0x70] sm:$0xff] %vm1795, %v1785
        %1811 = vst.msk [vmem:[%s428 + $0x78] sm:$0xff] %vm1795, %v1786
        %1812 = vst.msk [vmem:[%s428 + $0x80] sm:$0xff] %vm1795, %v1787
        %1813 = vst.msk [vmem:[%s428 + $0x88] sm:$0xff] %vm1795, %v1788
        %1814 = vst.msk [vmem:[%s428 + $0x90] sm:$0xff] %vm1795, %v1789
        %1815 = vst.msk [vmem:[%s428 + $0x98] sm:$0xff] %vm1795, %v1790
        %1816 = vst.msk [vmem:[%s428 + $0xa0] sm:$0xff] %vm1795, %v1791
        %1817 = vst.msk [vmem:[%s428 + $0xa8] sm:$0xff] %vm1795, %v1792
        %1818 = vst.msk [vmem:[%s428 + $0xb0] sm:$0xff] %vm1795, %v1793
        %1819 = vst.msk [vmem:[%s428 + $0xb8] sm:$0xff] %vm1795, %v1794
        %v1820 = vld [vmem:[%s437] sm:$0xff]
        %v1821 = vld [vmem:[%s437 + $0x8] sm:$0xff]
        %v1822 = vld [vmem:[%s437 + $0x10] sm:$0xff]
        %v1823 = vld [vmem:[%s437 + $0x18] sm:$0xff]
        %v1824 = vld [vmem:[%s437 + $0x20] sm:$0xff]
        %v1825 = vld [vmem:[%s437 + $0x28] sm:$0xff]
        %v1826 = vld [vmem:[%s437 + $0x30] sm:$0xff]
        %v1827 = vld [vmem:[%s437 + $0x38] sm:$0xff]
        %v1828 = vld [vmem:[%s437 + $0x40] sm:$0xff]
        %v1829 = vld [vmem:[%s437 + $0x48] sm:$0xff]
        %v1830 = vld [vmem:[%s437 + $0x50] sm:$0xff]
        %v1831 = vld [vmem:[%s437 + $0x58] sm:$0xff]
        %v1832 = vld [vmem:[%s437 + $0x60] sm:$0xff]
        %v1833 = vld [vmem:[%s437 + $0x68] sm:$0xff]
        %v1834 = vld [vmem:[%s437 + $0x70] sm:$0xff]
        %v1835 = vld [vmem:[%s437 + $0x78] sm:$0xff]
        %v1836 = vld [vmem:[%s437 + $0x80] sm:$0xff]
        %v1837 = vld [vmem:[%s437 + $0x88] sm:$0xff]
        %v1838 = vld [vmem:[%s437 + $0x90] sm:$0xff]
        %v1839 = vld [vmem:[%s437 + $0x98] sm:$0xff]
        %v1840 = vld [vmem:[%s437 + $0xa0] sm:$0xff]
        %v1841 = vld [vmem:[%s437 + $0xa8] sm:$0xff]
        %v1842 = vld [vmem:[%s437 + $0xb0] sm:$0xff]
        %v1843 = vld [vmem:[%s437 + $0xb8] sm:$0xff]
        %1845 = vset.pattern.permute.xlu0 0
        %1846 = vperm.xlu0 %1845, %v1771
        %v1847 = vpop.permute.xlu0 %1846
        %1850 = vset.pattern.permute.xlu0 0
        %1851 = vperm.xlu0 %1850, %v1772
        %v1852 = vpop.permute.xlu0 %1851
        %1855 = vset.pattern.permute.xlu0 0
        %1856 = vperm.xlu0 %1855, %v1773
        %v1857 = vpop.permute.xlu0 %1856
        %1860 = vset.pattern.permute.xlu0 0
        %1861 = vperm.xlu0 %1860, %v1774
        %v1862 = vpop.permute.xlu0 %1861
        %1865 = vset.pattern.permute.xlu0 0
        %1866 = vperm.xlu0 %1865, %v1775
        %v1867 = vpop.permute.xlu0 %1866
        %1870 = vset.pattern.permute.xlu0 0
        %1871 = vperm.xlu0 %1870, %v1776
        %v1872 = vpop.permute.xlu0 %1871
        %1875 = vset.pattern.permute.xlu0 0
        %1876 = vperm.xlu0 %1875, %v1777
        %v1877 = vpop.permute.xlu0 %1876
        %1880 = vset.pattern.permute.xlu0 0
        %1881 = vperm.xlu0 %1880, %v1778
        %v1882 = vpop.permute.xlu0 %1881
        %1885 = vset.pattern.permute.xlu0 0
        %1886 = vperm.xlu0 %1885, %v1779
        %v1887 = vpop.permute.xlu0 %1886
        %1890 = vset.pattern.permute.xlu0 0
        %1891 = vperm.xlu0 %1890, %v1780
        %v1892 = vpop.permute.xlu0 %1891
        %1895 = vset.pattern.permute.xlu0 0
        %1896 = vperm.xlu0 %1895, %v1781
        %v1897 = vpop.permute.xlu0 %1896
        %1900 = vset.pattern.permute.xlu0 0
        %1901 = vperm.xlu0 %1900, %v1782
        %v1902 = vpop.permute.xlu0 %1901
        %1905 = vset.pattern.permute.xlu0 0
        %1906 = vperm.xlu0 %1905, %v1783
        %v1907 = vpop.permute.xlu0 %1906
        %1910 = vset.pattern.permute.xlu0 0
        %1911 = vperm.xlu0 %1910, %v1784
        %v1912 = vpop.permute.xlu0 %1911
        %1915 = vset.pattern.permute.xlu0 0
        %1916 = vperm.xlu0 %1915, %v1785
        %v1917 = vpop.permute.xlu0 %1916
        %1920 = vset.pattern.permute.xlu0 0
        %1921 = vperm.xlu0 %1920, %v1786
        %v1922 = vpop.permute.xlu0 %1921
        %1925 = vset.pattern.permute.xlu0 0
        %1926 = vperm.xlu0 %1925, %v1787
        %v1927 = vpop.permute.xlu0 %1926
        %1930 = vset.pattern.permute.xlu0 0
        %1931 = vperm.xlu0 %1930, %v1788
        %v1932 = vpop.permute.xlu0 %1931
        %1935 = vset.pattern.permute.xlu0 0
        %1936 = vperm.xlu0 %1935, %v1789
        %v1937 = vpop.permute.xlu0 %1936
        %1940 = vset.pattern.permute.xlu0 0
        %1941 = vperm.xlu0 %1940, %v1790
        %v1942 = vpop.permute.xlu0 %1941
        %1945 = vset.pattern.permute.xlu0 0
        %1946 = vperm.xlu0 %1945, %v1791
        %v1947 = vpop.permute.xlu0 %1946
        %1950 = vset.pattern.permute.xlu0 0
        %1951 = vperm.xlu0 %1950, %v1792
        %v1952 = vpop.permute.xlu0 %1951
        %1955 = vset.pattern.permute.xlu0 0
        %1956 = vperm.xlu0 %1955, %v1793
        %v1957 = vpop.permute.xlu0 %1956
        %1960 = vset.pattern.permute.xlu0 0
        %1961 = vperm.xlu0 %1960, %v1794
        %v1962 = vpop.permute.xlu0 %1961
        %v1964 = vmul.f32 %v1847, %v1820
        %v1965 = vmul.f32 %v1852, %v1821
        %v1966 = vmul.f32 %v1857, %v1822
        %v1967 = vmul.f32 %v1862, %v1823
        %v1968 = vmul.f32 %v1867, %v1824
        %v1969 = vmul.f32 %v1872, %v1825
        %v1970 = vmul.f32 %v1877, %v1826
        %v1971 = vmul.f32 %v1882, %v1827
        %v1972 = vmul.f32 %v1887, %v1828
        %v1973 = vmul.f32 %v1892, %v1829
        %v1974 = vmul.f32 %v1897, %v1830
        %v1975 = vmul.f32 %v1902, %v1831
        %v1976 = vmul.f32 %v1907, %v1832
        %v1977 = vmul.f32 %v1912, %v1833
        %v1978 = vmul.f32 %v1917, %v1834
        %v1979 = vmul.f32 %v1922, %v1835
        %v1980 = vmul.f32 %v1927, %v1836
        %v1981 = vmul.f32 %v1932, %v1837
        %v1982 = vmul.f32 %v1937, %v1838
        %v1983 = vmul.f32 %v1942, %v1839
        %v1984 = vmul.f32 %v1947, %v1840
        %v1985 = vmul.f32 %v1952, %v1841
        %v1986 = vmul.f32 %v1957, %v1842
        %v1987 = vmul.f32 %v1962, %v1843
        %v1988 = vsel %vm518, 1, 0
        %v1989 = vsel %vm519, 1, 0
        %v1990 = vsel %vm520, 1, 0
        %v1991 = vsel %vm521, 1, 0
        %v1992 = vsel %vm522, 1, 0
        %v1993 = vsel %vm523, 1, 0
        %v1994 = vsel %vm524, 1, 0
        %v1995 = vsel %vm525, 1, 0
        %v1996 = vsel %vm526, 1, 0
        %v1997 = vsel %vm527, 1, 0
        %v1998 = vsel %vm528, 1, 0
        %v1999 = vsel %vm529, 1, 0
        %v2000 = vsel %vm530, 1, 0
        %v2001 = vsel %vm531, 1, 0
        %v2002 = vsel %vm532, 1, 0
        %v2003 = vsel %vm533, 1, 0
        %v2004 = vsel %vm534, 1, 0
        %v2005 = vsel %vm535, 1, 0
        %v2006 = vsel %vm536, 1, 0
        %v2007 = vsel %vm537, 1, 0
        %v2008 = vsel %vm538, 1, 0
        %v2009 = vsel %vm539, 1, 0
        %v2010 = vsel %vm540, 1, 0
        %v2011 = vsel %vm541, 1, 0
        %vm2012 = vcmp.eq.s32.totalorder %v1988, 1
        %vm2013 = vcmp.eq.s32.totalorder %v1989, 1
        %vm2014 = vcmp.eq.s32.totalorder %v1990, 1
        %vm2015 = vcmp.eq.s32.totalorder %v1991, 1
        %vm2016 = vcmp.eq.s32.totalorder %v1992, 1
        %vm2017 = vcmp.eq.s32.totalorder %v1993, 1
        %vm2018 = vcmp.eq.s32.totalorder %v1994, 1
        %vm2019 = vcmp.eq.s32.totalorder %v1995, 1
        %vm2020 = vcmp.eq.s32.totalorder %v1996, 1
        %vm2021 = vcmp.eq.s32.totalorder %v1997, 1
        %vm2022 = vcmp.eq.s32.totalorder %v1998, 1
        %vm2023 = vcmp.eq.s32.totalorder %v1999, 1
        %vm2024 = vcmp.eq.s32.totalorder %v2000, 1
        %vm2025 = vcmp.eq.s32.totalorder %v2001, 1
        %vm2026 = vcmp.eq.s32.totalorder %v2002, 1
        %vm2027 = vcmp.eq.s32.totalorder %v2003, 1
        %vm2028 = vcmp.eq.s32.totalorder %v2004, 1
        %vm2029 = vcmp.eq.s32.totalorder %v2005, 1
        %vm2030 = vcmp.eq.s32.totalorder %v2006, 1
        %vm2031 = vcmp.eq.s32.totalorder %v2007, 1
        %vm2032 = vcmp.eq.s32.totalorder %v2008, 1
        %vm2033 = vcmp.eq.s32.totalorder %v2009, 1
        %vm2034 = vcmp.eq.s32.totalorder %v2010, 1
        %vm2035 = vcmp.eq.s32.totalorder %v2011, 1
        %v2036 = vsel %vm2012, %v1964, 0.0
        %v2037 = vsel %vm2013, %v1965, 0.0
        %v2038 = vsel %vm2014, %v1966, 0.0
        %v2039 = vsel %vm2015, %v1967, 0.0
        %v2040 = vsel %vm2016, %v1968, 0.0
        %v2041 = vsel %vm2017, %v1969, 0.0
        %v2042 = vsel %vm2018, %v1970, 0.0
        %v2043 = vsel %vm2019, %v1971, 0.0
        %v2044 = vsel %vm2020, %v1972, 0.0
        %v2045 = vsel %vm2021, %v1973, 0.0
        %v2046 = vsel %vm2022, %v1974, 0.0
        %v2047 = vsel %vm2023, %v1975, 0.0
        %v2048 = vsel %vm2024, %v1976, 0.0
        %v2049 = vsel %vm2025, %v1977, 0.0
        %v2050 = vsel %vm2026, %v1978, 0.0
        %v2051 = vsel %vm2027, %v1979, 0.0
        %v2052 = vsel %vm2028, %v1980, 0.0
        %v2053 = vsel %vm2029, %v1981, 0.0
        %v2054 = vsel %vm2030, %v1982, 0.0
        %v2055 = vsel %vm2031, %v1983, 0.0
        %v2056 = vsel %vm2032, %v1984, 0.0
        %v2057 = vsel %vm2033, %v1985, 0.0
        %v2058 = vsel %vm2034, %v1986, 0.0
        %v2059 = vsel %vm2035, %v1987, 0.0
        %v2060 = vld [vmem:[%s8] sm:$0xff]
        %v2061 = vld [vmem:[%s8 + $0x8] sm:$0xff]
        %v2062 = vld [vmem:[%s8 + $0x10] sm:$0xff]
        %v2063 = vld [vmem:[%s8 + $0x18] sm:$0xff]
        %v2065 = vsel %vm1480, %v2061, 0
        %v2068 = vsel %vm1480, %v2063, 0
        %2070 = vmatprep.subr.mxu0 0.0
        %2071 = vmatpush1.msra.mxu0 %v2036
        %2072 = vmatprep.subr.mxu0 0.0
        %2073 = vmatpush1.msra.mxu0 %v2037
        %2074 = vmatprep.subr.mxu0 0.0
        %2075 = vmatpush1.msra.mxu0 %v2038
        %2076 = vmatprep.subr.mxu0 0.0
        %2077 = vmatpush1.msra.mxu0 %v2039
        %2078 = vmatprep.subr.mxu0 0.0
        %2079 = vmatpush1.msra.mxu0 %v2040
        %2080 = vmatprep.subr.mxu0 0.0
        %2081 = vmatpush1.msra.mxu0 %v2041
        %2082 = vmatprep.subr.mxu0 0.0
        %2083 = vmatpush1.msra.mxu0 %v2042
        %2084 = vmatprep.subr.mxu0 0.0
        %2085 = vmatpush1.msra.mxu0 %v2043
        %2086 = vmatprep.subr.mxu0 0.0
        %2087 = vmatpush1.msra.mxu0 %v2044
        %2088 = vmatprep.subr.mxu0 0.0
        %2089 = vmatpush1.msra.mxu0 %v2045
        %2090 = vmatprep.subr.mxu0 0.0
        %2091 = vmatpush1.msra.mxu0 %v2046
        %2092 = vmatprep.subr.mxu0 0.0
        %2093 = vmatpush1.msra.mxu0 %v2047
        %2094 = vmatprep.subr.mxu0 0.0
        %2095 = vmatpush1.msra.mxu0 %v2048
        %2096 = vmatprep.subr.mxu0 0.0
        %2097 = vmatpush1.msra.mxu0 %v2049
        %2098 = vmatprep.subr.mxu0 0.0
        %2099 = vmatpush1.msra.mxu0 %v2050
        %2100 = vmatprep.subr.mxu0 0.0
        %2101 = vmatpush1.msra.mxu0 %v2051
        %2102 = vmatprep.subr.mxu0 0.0
        %2103 = vmatpush1.msra.mxu0 %v2052
        %2104 = vmatprep.subr.mxu0 0.0
        %2105 = vmatpush1.msra.mxu0 %v2053
        %2106 = vmatprep.subr.mxu0 0.0
        %2107 = vmatpush1.msra.mxu0 %v2054
        %2108 = vmatprep.subr.mxu0 0.0
        %2109 = vmatpush1.msra.mxu0 %v2055
        %2110 = vmatprep.subr.mxu0 0.0
        %2111 = vmatpush1.msra.mxu0 %v2056
        %2112 = vmatprep.subr.mxu0 0.0
        %2113 = vmatpush1.msra.mxu0 %v2057
        %2114 = vmatprep.subr.mxu0 0.0
        %2115 = vmatpush1.msra.mxu0 %v2058
        %2116 = vmatprep.subr.mxu0 0.0
        %2117 = vmatpush1.msra.mxu0 %v2059
        %2118 = vmatprep.subr.mxu0 0.0
        %2119 = vmatpush1.msra.mxu0 0.0
        %2120 = vmatprep.subr.mxu0 0.0
        %2121 = vmatpush1.msra.mxu0 0.0
        %2122 = vmatprep.subr.mxu0 0.0
        %2123 = vmatpush1.msra.mxu0 0.0
        %2124 = vmatprep.subr.mxu0 0.0
        %2125 = vmatpush1.msra.mxu0 0.0
        %2126 = vmatprep.subr.mxu0 0.0
        %2127 = vmatpush1.msra.mxu0 0.0
        %2128 = vmatprep.subr.mxu0 0.0
        %2129 = vmatpush1.msra.mxu0 0.0
        %2130 = vmatprep.subr.mxu0 0.0
        %2131 = vmatpush1.msra.mxu0 0.0
        %2132 = vmatprep.subr.mxu0 0.0
        %2133 = vmatpush1.msra.mxu0 0.0
        %2134 = vmatprep.mubr.f32.mxu0 %v2065
        %2135 = vmatmul.mubr.f32.gmra.mrb[0].mxu0 %v2060
        %v2136 = vpop.f32.mrb[0].mxu0
        %v2137 = vadd.f32 0.0, %v2136
        %v2138 = vpop.f32.mrb[0].mxu0
        %2139 = vmatprep.mubr.f32.mxu0 %v2068
        %2140 = vmatmul.mubr.f32.gmra.mrb[0].mxu0 %v2062
        %v2141 = vpop.f32.mrb[0].mxu0
        %v2142 = vadd.f32 0.0, %v2141
        %v2143 = vpop.f32.mrb[0].mxu0
        %2144 = vdwg.mxu0
        %v2145 = vmul.f32 %v2137, %v2137
        %v2146 = vmul.f32 %v2142, %v2142
        %v2147 = vsel %vm561, %v2145, 0.0
        %2148 = vadd.xlane.f32.xlu0 %v2147
        %v2149 = vpop.xlane.xlu0 %2148
        %v2150 = vsel %vm561, %v2146, 0.0
        %2151 = vadd.xlane.f32.xlu0 %v2150
        %v2152 = vpop.xlane.xlu0 %2151
        %v2153 = vrsqrt.pop %v2149
        %v2154 = vmul.f32 %v2149, %v2153
        %vm2155 = vcmp.eq.f32.partialorder %v2149, inf
        %v2156 = vsel %vm2155, %v2149, %v2154
        %vm2157 = vcmp.eq.f32.partialorder %v2149, 0.0
        %v2158 = vand.u32 %v2149, 2147483648
        %v2159 = vsel %vm2157, %v2158, %v2156
        %v2160 = vrsqrt.pop %v2152
        %v2161 = vmul.f32 %v2152, %v2160
        %vm2162 = vcmp.eq.f32.partialorder %v2152, inf
        %v2163 = vsel %vm2162, %v2152, %v2161
        %vm2164 = vcmp.eq.f32.partialorder %v2152, 0.0
        %v2165 = vand.u32 %v2152, 2147483648
        %v2166 = vsel %vm2164, %v2165, %v2163
        %v2167 = vadd.f32 %v2159, 1e-08
        %v2168 = vadd.f32 %v2166, 1e-08
        %v2169 = vrcp.pop %v2167
        %v2170 = vrcp.pop %v2168
        %v2171 = vmul.f32 %v2137, %v2169
        %v2172 = vmul.f32 %v2142, %v2170
        %2173 = vst.msk [vmem:[%s422] sm:$0xff] %vm561, %v2171
        %2174 = vst.msk [vmem:[%s422 + $0x8] sm:$0xff] %vm561, %v2172
        %s2175 = sand.u32 %s255, 1
        %s2176 = scalar_lea.sflag [#allocation4], %s2175
        %s2177 = sand.u32 %s255, 1
        %s2178 = smul.addr %s2177, 16
        %s2179 = scalar_lea.vmem [#allocation3], %s2178
        %s2180 = sand.u32 %s281, 1
        %s2181 = sand.u32 %s281, 1
        %s2182 = smul.addr %s2181, 192
        %s2183 = scalar_lea.vmem [#allocation5], %s2182
        // Predicated region
        $region61: #{tpu_custom_call.1} parent=59 // pred_check
          %p2184 = pneg %p265
        $region62: #{tpu_custom_call.1} parent=59 // pred_check_branch
          %2186 = sbr.rel (%p2184) target = $region64
        $region63: #{tpu_custom_call.1} parent=59 // pred_region
          %s2187 = smul.u32 2, %s27
          %s2188 = ssub.s32 3, %s2187
          %p2189 = scmp.lt.s32.totalorder %s2188, 2
          %s2190 = scalar_select %p2189, %s2188, 2
          %s2191 = smul.u32 128, %s2190
          %s2193 = ssub.s32 256, %s2191
          %2194 = vsyncadd %s2176, %s2193
          %p2195 = scmp.ne.s32.totalorder 0, %s2191
          %s2196 = smul.addr %s2187, 128
          %s2197 = scalar_lea.hbm %s10, %s2196
          %s2198 = smul.u32 8, %s2190
          %s2199 = sshll.u32 %s2179, 4
          %s2200 = int_to_ptr.vmem [resolvable:$true] %s2199
          %s2201 = sshll.u32 %s2198, 4
          %2205 = dma.vmem_to_hbm [thread:$0]  (%p2195), %s2200, %s2201, %s2197, %s2176, 128, 128, 8
        $region64: #{tpu_custom_call.1} parent=59 // pred_fallthru
          _
        // Predicated region
        $region65: #{tpu_custom_call.1} parent=59 // pred_check
          %p2206 = pneg %p291
        $region66: #{tpu_custom_call.1} parent=59 // pred_check_branch
          %2208 = sbr.rel (%p2206) target = $region68
        $region67: #{tpu_custom_call.1} parent=59 // pred_region
          %s2209 = smul.u32 24, %s27
          %s2210 = ssub.s32 30, %s2209
          %p2211 = scmp.lt.s32.totalorder %s2210, 24
          %s2212 = scalar_select %p2211, %s2210, 24
          %s2213 = smul.u32 128, %s2212
          %p2214 = scmp.ne.s32.totalorder 0, %s2213
          %s2215 = smul.addr %s2209, 8
          %s2216 = scalar_lea.vmem %s11, %s2215
          // Predicated region
          $region69: #{tpu_custom_call.1} parent=67 // pred_check
            %p2217 = pneg %p2214
          $region70: #{tpu_custom_call.1} parent=67 // pred_check_branch
            %2219 = sbr.rel (%p2217) target = $region72
          $region71: #{tpu_custom_call.1} parent=67 // pred_region
            // Predicated region
            $region73: #{tpu_custom_call.1} parent=71 // pred_check
              _
            $region74: #{tpu_custom_call.1} parent=71 // pred_check_branch
              %2221 = sbr.rel (0) target = $region76
            $region75: #{tpu_custom_call.1} parent=71 // pred_region
              // Predicated region
              $region95: #{tpu_custom_call.1} parent=75 // pred_check
                _
              $region96: #{tpu_custom_call.1} parent=75 // pred_check_branch
                %2317 = sbr.rel (0) target = $region98
              $region97: #{tpu_custom_call.1} parent=75 // pred_region
                %s2318 = sdiv.u32.pop %s2212, 24
                %s2319 = srem.u32.pop %s2212, 24
                // While loop
                $region99: #{tpu_custom_call.1} parent=97 // loop_pre_header
                  _
                $region100: #{tpu_custom_call.1} parent=97 // loop_header
                  %s2321 = sphi 0, %s2323
                  %p2322 = scmp.ge.s32.totalorder %s2321, %s2318
                  %s2326 = sphi 0, %s2379
                  %s2327 = sphi %s2183, %s2382
                  %s2328 = sphi %s2216, %s2383
                $region101: #{tpu_custom_call.1} parent=97 // loop_header_branch
                  %2325 = sbr.rel (%p2322) target = $region105
                $region102: #{tpu_custom_call.1} parent=97 // loop_body
                  %v2329 = vld [vmem:[%s2327] sm:$0xff]
                  %2330 = vst [vmem:[%s2328] sm:$0xff] %v2329
                  %v2331 = vld [vmem:[%s2327 + $0x8] sm:$0xff]
                  %2332 = vst [vmem:[%s2328 + $0x8] sm:$0xff] %v2331
                  %v2333 = vld [vmem:[%s2327 + $0x10] sm:$0xff]
                  %2334 = vst [vmem:[%s2328 + $0x10] sm:$0xff] %v2333
                  %v2335 = vld [vmem:[%s2327 + $0x18] sm:$0xff]
                  %2336 = vst [vmem:[%s2328 + $0x18] sm:$0xff] %v2335
                  %v2337 = vld [vmem:[%s2327 + $0x20] sm:$0xff]
                  %2338 = vst [vmem:[%s2328 + $0x20] sm:$0xff] %v2337
                  %v2339 = vld [vmem:[%s2327 + $0x28] sm:$0xff]
                  %2340 = vst [vmem:[%s2328 + $0x28] sm:$0xff] %v2339
                  %v2341 = vld [vmem:[%s2327 + $0x30] sm:$0xff]
                  %2342 = vst [vmem:[%s2328 + $0x30] sm:$0xff] %v2341
                  %v2343 = vld [vmem:[%s2327 + $0x38] sm:$0xff]
                  %2344 = vst [vmem:[%s2328 + $0x38] sm:$0xff] %v2343
                  %v2345 = vld [vmem:[%s2327 + $0x40] sm:$0xff]
                  %2346 = vst [vmem:[%s2328 + $0x40] sm:$0xff] %v2345
                  %v2347 = vld [vmem:[%s2327 + $0x48] sm:$0xff]
                  %2348 = vst [vmem:[%s2328 + $0x48] sm:$0xff] %v2347
                  %v2349 = vld [vmem:[%s2327 + $0x50] sm:$0xff]
                  %2350 = vst [vmem:[%s2328 + $0x50] sm:$0xff] %v2349
                  %v2351 = vld [vmem:[%s2327 + $0x58] sm:$0xff]
                  %2352 = vst [vmem:[%s2328 + $0x58] sm:$0xff] %v2351
                  %v2353 = vld [vmem:[%s2327 + $0x60] sm:$0xff]
                  %2354 = vst [vmem:[%s2328 + $0x60] sm:$0xff] %v2353
                  %v2355 = vld [vmem:[%s2327 + $0x68] sm:$0xff]
                  %2356 = vst [vmem:[%s2328 + $0x68] sm:$0xff] %v2355
                  %v2357 = vld [vmem:[%s2327 + $0x70] sm:$0xff]
                  %2358 = vst [vmem:[%s2328 + $0x70] sm:$0xff] %v2357
                  %v2359 = vld [vmem:[%s2327 + $0x78] sm:$0xff]
                  %2360 = vst [vmem:[%s2328 + $0x78] sm:$0xff] %v2359
                  %v2361 = vld [vmem:[%s2327 + $0x80] sm:$0xff]
                  %2362 = vst [vmem:[%s2328 + $0x80] sm:$0xff] %v2361
                  %v2363 = vld [vmem:[%s2327 + $0x88] sm:$0xff]
                  %2364 = vst [vmem:[%s2328 + $0x88] sm:$0xff] %v2363
                  %v2365 = vld [vmem:[%s2327 + $0x90] sm:$0xff]
                  %2366 = vst [vmem:[%s2328 + $0x90] sm:$0xff] %v2365
                  %v2367 = vld [vmem:[%s2327 + $0x98] sm:$0xff]
                  %2368 = vst [vmem:[%s2328 + $0x98] sm:$0xff] %v2367
                  %v2369 = vld [vmem:[%s2327 + $0xa0] sm:$0xff]
                  %2370 = vst [vmem:[%s2328 + $0xa0] sm:$0xff] %v2369
                  %v2371 = vld [vmem:[%s2327 + $0xa8] sm:$0xff]
                  %2372 = vst [vmem:[%s2328 + $0xa8] sm:$0xff] %v2371
                  %v2373 = vld [vmem:[%s2327 + $0xb0] sm:$0xff]
                  %2374 = vst [vmem:[%s2328 + $0xb0] sm:$0xff] %v2373
                  %v2375 = vld [vmem:[%s2327 + $0xb8] sm:$0xff]
                  %2376 = vst [vmem:[%s2328 + $0xb8] sm:$0xff] %v2375
                  %s2377 = sadd.s32 1, %s2326
                  %p2378 = scmp.ge.s32.totalorder %s2377, %s2318
                  %s2379 = scalar_select %p2378, 0, %s2377
                  %s2380 = smul.u32 %s2379, 192
                  %s2381 = smul.u32 %s2379, 192
                  %s2382 = scalar_lea.vmem %s2183, %s2380 [#allocation5]
                  %s2383 = scalar_lea.vmem %s2216, %s2381
                $region103: #{tpu_custom_call.1} parent=97 // loop_footer
                  %s2323 = sadd.s32 %s2321, 1
                $region104: #{tpu_custom_call.1} parent=97 // loop_footer_branch
                  %2320 = sbr.rel target = $region100
                $region105: #{tpu_custom_call.1} parent=97 // loop_exit
                  _
                %s2384 = sdiv.u32.pop %s2212, 24
                %s2385 = srem.u32.pop %s2212, 24
                %s2386 = smul.u32 %s2384, 24
                %s2387 = smul.u32 8, %s2386
                %s2388 = scalar_lea.vmem %s2183, %s2387 [#allocation5]
                %s2389 = smul.u32 8, %s2386
                %s2390 = scalar_lea.vmem %s2216, %s2389
                // While loop
                $region106: #{tpu_custom_call.1} parent=97 // loop_pre_header
                  _
                $region107: #{tpu_custom_call.1} parent=97 // loop_header
                  %s2392 = sphi 0, %s2394
                  %p2393 = scmp.ge.s32.totalorder %s2392, %s2385
                  %s2397 = sphi 0, %s2404
                  %s2398 = sphi %s2388, %s2407
                  %s2399 = sphi %s2390, %s2408
                $region108: #{tpu_custom_call.1} parent=97 // loop_header_branch
                  %2396 = sbr.rel (%p2393) target = $region112
                $region109: #{tpu_custom_call.1} parent=97 // loop_body
                  %v2400 = vld [vmem:[%s2398] sm:$0xff]
                  %2401 = vst [vmem:[%s2399] sm:$0xff] %v2400
                  %s2402 = sadd.s32 1, %s2397
                  %p2403 = scmp.ge.s32.totalorder %s2402, %s2385
                  %s2404 = scalar_select %p2403, 0, %s2402
                  %s2405 = smul.u32 %s2404, 8
                  %s2406 = smul.u32 %s2404, 8
                  %s2407 = scalar_lea.vmem %s2388, %s2405 [#allocation5]
                  %s2408 = scalar_lea.vmem %s2390, %s2406
                $region110: #{tpu_custom_call.1} parent=97 // loop_footer
                  %s2394 = sadd.s32 %s2392, 1
                $region111: #{tpu_custom_call.1} parent=97 // loop_footer_branch
                  %2391 = sbr.rel target = $region107
                $region112: #{tpu_custom_call.1} parent=97 // loop_exit
                  _
              $region98: #{tpu_custom_call.1} parent=75 // pred_fallthru
                _
              // Predicated region
              $region113: #{tpu_custom_call.1} parent=75 // pred_check
                _
              $region114: #{tpu_custom_call.1} parent=75 // pred_check_branch
                %2410 = sbr.rel target = $region116
              $region115: #{tpu_custom_call.1} parent=75 // pred_region
                _
              $region116: #{tpu_custom_call.1} parent=75 // pred_fallthru
                _
            $region76: #{tpu_custom_call.1} parent=71 // pred_fallthru
              _
            // Predicated region
            $region77: #{tpu_custom_call.1} parent=71 // pred_check
              _
            $region78: #{tpu_custom_call.1} parent=71 // pred_check_branch
              %2223 = sbr.rel target = $region80
            $region79: #{tpu_custom_call.1} parent=71 // pred_region
              %s2225 = sdiv.u32.pop %s2212, 24
              %s2226 = srem.u32.pop %s2212, 24
              // While loop
              $region81: #{tpu_custom_call.1} parent=79 // loop_pre_header
                _
              $region82: #{tpu_custom_call.1} parent=79 // loop_header
                %s2228 = sphi 0, %s2230
                %p2229 = scmp.ge.s32.totalorder %s2228, %s2225
                %s2233 = sphi 0, %s2286
                %s2234 = sphi %s2183, %s2289
                %s2235 = sphi %s2216, %s2290
              $region83: #{tpu_custom_call.1} parent=79 // loop_header_branch
                %2232 = sbr.rel (%p2229) target = $region87
              $region84: #{tpu_custom_call.1} parent=79 // loop_body
                %v2236 = vld [vmem:[%s2234] sm:$0xff]
                %2237 = vst [vmem:[%s2235] sm:$0xff] %v2236
                %v2238 = vld [vmem:[%s2234 + $0x8] sm:$0xff]
                %2239 = vst [vmem:[%s2235 + $0x8] sm:$0xff] %v2238
                %v2240 = vld [vmem:[%s2234 + $0x10] sm:$0xff]
                %2241 = vst [vmem:[%s2235 + $0x10] sm:$0xff] %v2240
                %v2242 = vld [vmem:[%s2234 + $0x18] sm:$0xff]
                %2243 = vst [vmem:[%s2235 + $0x18] sm:$0xff] %v2242
                %v2244 = vld [vmem:[%s2234 + $0x20] sm:$0xff]
                %2245 = vst [vmem:[%s2235 + $0x20] sm:$0xff] %v2244
                %v2246 = vld [vmem:[%s2234 + $0x28] sm:$0xff]
                %2247 = vst [vmem:[%s2235 + $0x28] sm:$0xff] %v2246
                %v2248 = vld [vmem:[%s2234 + $0x30] sm:$0xff]
                %2249 = vst [vmem:[%s2235 + $0x30] sm:$0xff] %v2248
                %v2250 = vld [vmem:[%s2234 + $0x38] sm:$0xff]
                %2251 = vst [vmem:[%s2235 + $0x38] sm:$0xff] %v2250
                %v2252 = vld [vmem:[%s2234 + $0x40] sm:$0xff]
                %2253 = vst [vmem:[%s2235 + $0x40] sm:$0xff] %v2252
                %v2254 = vld [vmem:[%s2234 + $0x48] sm:$0xff]
                %2255 = vst [vmem:[%s2235 + $0x48] sm:$0xff] %v2254
                %v2256 = vld [vmem:[%s2234 + $0x50] sm:$0xff]
                %2257 = vst [vmem:[%s2235 + $0x50] sm:$0xff] %v2256
                %v2258 = vld [vmem:[%s2234 + $0x58] sm:$0xff]
                %2259 = vst [vmem:[%s2235 + $0x58] sm:$0xff] %v2258
                %v2260 = vld [vmem:[%s2234 + $0x60] sm:$0xff]
                %2261 = vst [vmem:[%s2235 + $0x60] sm:$0xff] %v2260
                %v2262 = vld [vmem:[%s2234 + $0x68] sm:$0xff]
                %2263 = vst [vmem:[%s2235 + $0x68] sm:$0xff] %v2262
                %v2264 = vld [vmem:[%s2234 + $0x70] sm:$0xff]
                %2265 = vst [vmem:[%s2235 + $0x70] sm:$0xff] %v2264
                %v2266 = vld [vmem:[%s2234 + $0x78] sm:$0xff]
                %2267 = vst [vmem:[%s2235 + $0x78] sm:$0xff] %v2266
                %v2268 = vld [vmem:[%s2234 + $0x80] sm:$0xff]
                %2269 = vst [vmem:[%s2235 + $0x80] sm:$0xff] %v2268
                %v2270 = vld [vmem:[%s2234 + $0x88] sm:$0xff]
                %2271 = vst [vmem:[%s2235 + $0x88] sm:$0xff] %v2270
                %v2272 = vld [vmem:[%s2234 + $0x90] sm:$0xff]
                %2273 = vst [vmem:[%s2235 + $0x90] sm:$0xff] %v2272
                %v2274 = vld [vmem:[%s2234 + $0x98] sm:$0xff]
                %2275 = vst [vmem:[%s2235 + $0x98] sm:$0xff] %v2274
                %v2276 = vld [vmem:[%s2234 + $0xa0] sm:$0xff]
                %2277 = vst [vmem:[%s2235 + $0xa0] sm:$0xff] %v2276
                %v2278 = vld [vmem:[%s2234 + $0xa8] sm:$0xff]
                %2279 = vst [vmem:[%s2235 + $0xa8] sm:$0xff] %v2278
                %v2280 = vld [vmem:[%s2234 + $0xb0] sm:$0xff]
                %2281 = vst [vmem:[%s2235 + $0xb0] sm:$0xff] %v2280
                %v2282 = vld [vmem:[%s2234 + $0xb8] sm:$0xff]
                %2283 = vst [vmem:[%s2235 + $0xb8] sm:$0xff] %v2282
                %s2284 = sadd.s32 1, %s2233
                %p2285 = scmp.ge.s32.totalorder %s2284, %s2225
                %s2286 = scalar_select %p2285, 0, %s2284
                %s2287 = smul.u32 %s2286, 192
                %s2288 = smul.u32 %s2286, 192
                %s2289 = scalar_lea.vmem %s2183, %s2287 [#allocation5]
                %s2290 = scalar_lea.vmem %s2216, %s2288
              $region85: #{tpu_custom_call.1} parent=79 // loop_footer
                %s2230 = sadd.s32 %s2228, 1
              $region86: #{tpu_custom_call.1} parent=79 // loop_footer_branch
                %2227 = sbr.rel target = $region82
              $region87: #{tpu_custom_call.1} parent=79 // loop_exit
                _
              %s2291 = sdiv.u32.pop %s2212, 24
              %s2292 = srem.u32.pop %s2212, 24
              %s2293 = smul.u32 %s2291, 24
              %s2294 = smul.u32 8, %s2293
              %s2295 = scalar_lea.vmem %s2183, %s2294 [#allocation5]
              %s2296 = smul.u32 8, %s2293
              %s2297 = scalar_lea.vmem %s2216, %s2296
              // While loop
              $region88: #{tpu_custom_call.1} parent=79 // loop_pre_header
                _
              $region89: #{tpu_custom_call.1} parent=79 // loop_header
                %s2299 = sphi 0, %s2301
                %p2300 = scmp.ge.s32.totalorder %s2299, %s2292
                %s2304 = sphi 0, %s2311
                %s2305 = sphi %s2295, %s2314
                %s2306 = sphi %s2297, %s2315
              $region90: #{tpu_custom_call.1} parent=79 // loop_header_branch
                %2303 = sbr.rel (%p2300) target = $region94
              $region91: #{tpu_custom_call.1} parent=79 // loop_body
                %v2307 = vld [vmem:[%s2305] sm:$0xff]
                %2308 = vst [vmem:[%s2306] sm:$0xff] %v2307
                %s2309 = sadd.s32 1, %s2304
                %p2310 = scmp.ge.s32.totalorder %s2309, %s2292
                %s2311 = scalar_select %p2310, 0, %s2309
                %s2312 = smul.u32 %s2311, 8
                %s2313 = smul.u32 %s2311, 8
                %s2314 = scalar_lea.vmem %s2295, %s2312 [#allocation5]
                %s2315 = scalar_lea.vmem %s2297, %s2313
              $region92: #{tpu_custom_call.1} parent=79 // loop_footer
                %s2301 = sadd.s32 %s2299, 1
              $region93: #{tpu_custom_call.1} parent=79 // loop_footer_branch
                %2298 = sbr.rel target = $region89
              $region94: #{tpu_custom_call.1} parent=79 // loop_exit
                _
            $region80: #{tpu_custom_call.1} parent=71 // pred_fallthru
              _
          $region72: #{tpu_custom_call.1} parent=67 // pred_fallthru
            _
          %2411 = vnop
        $region68: #{tpu_custom_call.1} parent=59 // pred_fallthru
          _
      $region60: #{tpu_custom_call.1} parent=5 // pred_fallthru
        _
      %p2412 = scmp.le.s32.totalorder 2, %s22
      // Predicated region
      $region117: #{tpu_custom_call.1} parent=5 // pred_check
        %p2413 = pneg %p2412
      $region118: #{tpu_custom_call.1} parent=5 // pred_check_branch
        %2415 = sbr.rel (%p2413) target = $region120
      $region119: #{tpu_custom_call.1} parent=5 // pred_region
        %s2416 = ssub.s32 %s22, 2
        // Predicated region
        $region121: #{tpu_custom_call.1} parent=119 // pred_check
          %p2417 = pneg %p271
        $region122: #{tpu_custom_call.1} parent=119 // pred_check_branch
          %2419 = sbr.rel (%p2417) target = $region124
        $region123: #{tpu_custom_call.1} parent=119 // pred_region
          %s2420 = sand.u32 %s256, 1
          %s2421 = scalar_lea.sflag [#allocation4], %s2420
          %s2422 = sand.u32 %s256, 1
          %s2423 = smul.addr %s2422, 16
          %s2424 = scalar_lea.vmem [#allocation3], %s2423
          %2425 = dma.done %s2421, 256
        $region124: #{tpu_custom_call.1} parent=119 // pred_fallthru
          _
        // Predicated region
        $region125: #{tpu_custom_call.1} parent=119 // pred_check
          %p2426 = pneg %p297
        $region126: #{tpu_custom_call.1} parent=119 // pred_check_branch
          %2428 = sbr.rel (%p2426) target = $region128
        $region127: #{tpu_custom_call.1} parent=119 // pred_region
          %s2429 = sand.u32 %s282, 1
          %s2430 = sand.u32 %s282, 1
          %s2431 = smul.addr %s2430, 192
          %s2432 = scalar_lea.vmem [#allocation5], %s2431
        $region128: #{tpu_custom_call.1} parent=119 // pred_fallthru
          _
      $region120: #{tpu_custom_call.1} parent=5 // pred_fallthru
        _
    $region6: #{tpu_custom_call.1} parent=1 // loop_footer
      %s26 = sadd.s32 1, %s22
    $region7: #{tpu_custom_call.1} parent=1 // loop_footer_branch
      %21 = sbr.rel target = $region3
    $region8: #{tpu_custom_call.1} parent=1 // loop_exit
      _
    %2433 = vsyncpa [#allocation4], 1
    %s2434 = scalar_lea.sflag [#allocation4], 1
    %2435 = vsyncpa %s2434, 1

</llo_original>
